<compile_context>
chip_gen: v7x
topology: tpu7x:2x2x1
jax: 0.10.0
libtpu: 0.0.40
codegen_flags: <defaults>
</compile_context>

<pallas_src>
import jax
import jax.numpy as jnp
from jax.experimental import pallas as pl
from jax.experimental.pallas import tpu as pltpu


# ----------------------------------------------------------------------------
# Small helpers
# ----------------------------------------------------------------------------
def _mxu(x, w_bf16):
    """bf16 MXU operands, f32 accumulation."""
    return jnp.dot(x.astype(jnp.bfloat16), w_bf16,
                   preferred_element_type=jnp.float32)


def _tensorcores_per_chip():
    """Best-effort generation detection (v7x has 2 TensorCores per chip)."""
    try:
        kind = jax.devices()[0].device_kind.lower()
    except Exception:
        return 1
    return 2 if ("v7" in kind or "7x" in kind) else 1


def _pick_row_tile(n_rows, max_tile=1024):
    """Row tile over coarse point groups.

    * large sets   -> 1024-row tiles, tail handled by Pallas OOB masking;
    * v7x          -> split into 2 blocks so both TensorCores get work;
    * v5e/v6e      -> single whole-array block (grid is a serial loop on 1 TC,
                      splitting small sets only adds pipeline-step overhead).
    """
    if n_rows > max_tile:
        return max_tile, pl.cdiv(n_rows, max_tile)
    if _tensorcores_per_chip() >= 2 and n_rows >= 16 and n_rows % 16 == 0:
        return n_rows // 2, 2
    return n_rows, 1


def _full_spec(p):
    # Full-array block with a constant index map: weights/biases stay resident.
    return pl.BlockSpec(p.shape, lambda i: (0, 0))


def _linear_params(key, cin, cout):
    kw, kb = jax.random.split(key)
    scale = 1.0 / jnp.sqrt(jnp.float32(cin))
    w = jax.random.normal(kw, (cin, cout), jnp.float32) * scale
    b = (jax.random.normal(kb, (cout,), jnp.float32) * 0.01).reshape(1, cout)
    return w, b


def _pair_sum_mats(c_ref, c_skip):
    """0/1 matrices so that concat([ref, skip]).view(n, -1, 2).sum(2)
    == ref @ P_ref + skip @ P_skip (keeps the pair reduction on the MXU)."""
    fc = (c_ref + c_skip) // 2
    i_r = jnp.arange(c_ref)
    p_r = jnp.zeros((c_ref, fc), jnp.float32).at[i_r, i_r // 2].set(1.0)
    i_s = jnp.arange(c_skip)
    p_s = jnp.zeros((c_skip, fc), jnp.float32).at[i_s, c_ref // 2 + i_s // 2].set(1.0)
    return p_r, p_s


# ----------------------------------------------------------------------------
# HybridConvNet (single fused Pallas kernel for the whole forward pass)
# ----------------------------------------------------------------------------
class HybridConvNetPallas:
    def __init__(self, rng, *, input_channels, sa_channels, fp_channels,
                 point_key="point",
                 point_attributes=("bxyz", "feat", "bcenter"),
                 output_key="hybridconvnet_out", scale=1):
        self.sa_channels = sa_channels
        self.fp_channels = fp_channels
        self.point_key = point_key
        self.point_attributes = list(point_attributes)
        self.output_key = output_key

        S = len(sa_channels)
        n_fp = len(fp_channels)
        assert S >= 1 and 1 <= n_fp <= S
        self._S = S
        self._n_fp = n_fp
        self._cin = input_channels
        self._group = 2 ** S            # original points per coarse row

        self._kid = 0

        def nk():
            self._kid += 1
            return jax.random.fold_in(rng, self._kid)

        params = []                      # flat list, exact kernel-consumption order
        enc_layer_counts = []
        enc_out_channels = []

        # --------------------------- encoder --------------------------------
        cur = input_channels
        for si, sas in enumerate(sa_channels):
            sas = [int(scale * c) for c in sas]
            enc_layer_counts.append(len(sas))
            for li, sc in enumerate(sas):
                w, b = _linear_params(nk(), cur, sc)
                if si == 0 and li == 0:
                    # Fused stride-2 sampling: embed the first-layer weight at
                    # every even point offset of the (2^S*cin)-wide packed row.
                    # One zero-padded weight per surviving offset -> the kernel
                    # never lane-slices the raw input.
                    for t in range(self._group // 2):
                        w_e = jnp.zeros((self._group * cur, sc), jnp.float32)
                        w_e = w_e.at[2 * t * cur:(2 * t + 1) * cur, :].set(w)
                        params.append(w_e.astype(jnp.bfloat16))
                    params.append(b)
                else:
                    params.append(w.astype(jnp.bfloat16))
                    params.append(b)
                cur = sc
            enc_out_channels.append(cur)

        channel_stack = list(enc_out_channels)

        # --------------------------- decoder --------------------------------
        dec_skip_relu = []
        dec_fc2 = []
        c_ref = channel_stack[-1]
        for fps in fp_channels:
            fps = [int(scale * c) for c in fps]
            fc0, fc1, fc2 = fps[0], fps[1], fps[-1]
            skip_channel = channel_stack.pop()
            # Shape requirements of the two residuals in the reference forward.
            assert fc0 == skip_channel, "skip residual needs fc0 == skip channel"
            assert c_ref % 2 == 0 and fc0 % 2 == 0
            assert fc1 == (c_ref + fc0) // 2, (
                "pair_sum residual needs fc1 == (ref_channels + fc0) / 2")

            relu_flags = []
            w, b = _linear_params(nk(), skip_channel, fc0)
            params += [w.astype(jnp.bfloat16), b]
            relu_flags.append(True)
            for _ in range(len(fps) - 2):
                w, b = _linear_params(nk(), fc0, fc0)
                params += [w.astype(jnp.bfloat16), b]
                relu_flags.append(False)
            dec_skip_relu.append(tuple(relu_flags))

            wm, bm = _linear_params(nk(), c_ref + fc0, fc1)
            params += [wm[:c_ref].astype(jnp.bfloat16),     # split merge weight
                       wm[c_ref:].astype(jnp.bfloat16), bm]

            wu, bu = _linear_params(nk(), fc1, fc2)
            p_r, p_s = _pair_sum_mats(c_ref, fc0)
            # Fold the pair-sum 0/1 matrices into the up weights offline.
            params += [wu.astype(jnp.bfloat16),
                       (p_r @ wu).astype(jnp.bfloat16),
                       (p_s @ wu).astype(jnp.bfloat16), bu]

            dec_fc2.append(fc2)
            c_ref = fc2
        self.num_point_features = c_ref

        self._params = params
        self._enc_layer_counts = enc_layer_counts
        self._enc_out_channels = enc_out_channels
        self._dec_skip_relu = dec_skip_relu
        self._dec_fc2 = dec_fc2

        self._kernel = self._build_kernel()
        self._core = jax.jit(self._core_impl)   # whole forward compiles once

    # ------------------------------------------------------------------ kernel
    def _build_kernel(self):
        S = self._S
        n_fp = self._n_fp
        group = self._group
        n_params = len(self._params)
        enc_layer_counts = self._enc_layer_counts
        dec_skip_relu = self._dec_skip_relu
        n_sub0 = group // 2

        def kernel(x_ref, *rest):
            prm = rest[:n_params]
            down_refs = rest[n_params:n_params + S]
            up_refs = rest[n_params + S:]
            it = iter(prm)

            def store_packed(out_ref, act_list):
                v = act_list[0] if len(act_list) == 1 else \
                    jnp.concatenate(act_list, axis=-1)
                out_ref[...] = v.astype(out_ref.dtype)

            x = x_ref[...]                       # (tile_R, 2^S * cin), f32

            # ------------------------------ encoder -------------------------
            # level_acts[k][t] : features of the t-th level-k point inside each
            # coarse row (list selection == stride-2 sampling, no data movement)
            level_acts = {}

            # stage 0, layer 0: stride-2 sampling via zero-embedded weights
            w_embs = [next(it)[...] for _ in range(n_sub0)]
            b0 = next(it)[...]
            acts = [jnp.maximum(_mxu(x, w_embs[t]) + b0, 0.0)
                    for t in range(n_sub0)]
            for _ in range(enc_layer_counts[0] - 1):
                wv = next(it)[...]
                bv = next(it)[...]
                acts = [jnp.maximum(_mxu(a, wv) + bv, 0.0) for a in acts]
            level_acts[1] = acts
            store_packed(down_refs[0], acts)

            for k in range(1, S):
                acts = acts[::2]                 # keep even-offset points only
                for _ in range(enc_layer_counts[k]):
                    wv = next(it)[...]
                    bv = next(it)[...]
                    acts = [jnp.maximum(_mxu(a, wv) + bv, 0.0) for a in acts]
                level_acts[k + 1] = acts
                store_packed(down_refs[k], acts)

            # ------------------------------ decoder -------------------------
            ref_list = level_acts[S]             # length 1 (coarsest level)
            for i in range(n_fp):
                ident_list = level_acts[S - i]   # length 2^i, matches ref_list
                relu_flags = dec_skip_relu[i]
                skip_w, skip_b = [], []
                for _ in relu_flags:
                    skip_w.append(next(it)[...])
                    skip_b.append(next(it)[...])
                wm_r = next(it)[...]
                wm_s = next(it)[...]
                bm = next(it)[...]
                wu = next(it)[...]
                wu_r = next(it)[...]
                wu_s = next(it)[...]
                bu = next(it)[...]

                ys = []
                for t in range(len(ref_list)):
                    ref_a = ref_list[t]
                    ident = ident_list[t]
                    # skip path + fused residual add + ReLU (f32 epilogue)
                    s = ident
                    for j, rl in enumerate(relu_flags):
                        s = _mxu(s, skip_w[j]) + skip_b[j]
                        if rl:
                            s = jnp.maximum(s, 0.0)
                    s = jnp.maximum(s + ident, 0.0)

                    rb = ref_a.astype(jnp.bfloat16)
                    sb = s.astype(jnp.bfloat16)
                    # merge of [ref | skip] via split weights (no concat)
                    merge = jnp.maximum(
                        jnp.dot(rb, wm_r, preferred_element_type=jnp.float32)
                        + jnp.dot(sb, wm_s, preferred_element_type=jnp.float32)
                        + bm, 0.0)
                    # pair-sum residual folded into the up weights:
                    #   relu((merge + pair) @ Wu + bu)
                    # = relu(merge@Wu + ref@(P_ref Wu) + skip@(P_skip Wu) + bu)
                    y = jnp.maximum(
                        _mxu(merge, wu)
                        + jnp.dot(rb, wu_r, preferred_element_type=jnp.float32)
                        + jnp.dot(sb, wu_s, preferred_element_type=jnp.float32)
                        + bu, 0.0)
                    ys.append(y)

                # every coarse point feeds both children (parent = arange//2)
                ref_list = [y for y in ys for _ in (0, 1)]
                store_packed(up_refs[i], ref_list)

        return kernel

    # -------------------------------------------------------------- jitted core
    def _core_impl(self, feat, aux):
        S = self._S
        n_fp = self._n_fp
        group = self._group
        cin = self._cin
        n = feat.shape[0]

        # pad point count to a multiple of 2^S (defines the coarse grouping);
        # zero rows can never contaminate real rows (all compute is row-local)
        pad = (-n) % group
        if pad:
            feat = jnp.pad(feat, ((0, pad), (0, 0)))
        r_rows = (n + pad) // group
        x = feat.reshape(r_rows, group * cin)          # free contiguous reshape

        tile_r, grid_r = _pick_row_tile(r_rows)

        down_w = [(2 ** (S - 1 - k)) * self._enc_out_channels[k] for k in range(S)]
        up_w = [(2 ** (i + 1)) * self._dec_fc2[i] for i in range(n_fp)]

        # intermediates bf16 (next consumer is bf16-MXU anyway), final f32
        out_shapes = (
            [jax.ShapeDtypeStruct((r_rows, w), jnp.bfloat16) for w in down_w]
            + [jax.ShapeDtypeStruct((r_rows, w), jnp.bfloat16) for w in up_w[:-1]]
            + [jax.ShapeDtypeStruct((r_rows, up_w[-1]), jnp.float32)]
        )
        out_specs = [pl.BlockSpec((tile_r, w), lambda i: (i, 0))
                     for w in down_w + up_w]

        outs = pl.pallas_call(
            self._kernel,
            out_shape=tuple(out_shapes),
            grid_spec=pltpu.PrefetchScalarGridSpec(
                num_scalar_prefetch=0,
                grid=(grid_r,),
                in_specs=[pl.BlockSpec((tile_r, group * cin), lambda i: (i, 0))]
                         + [_full_spec(p) for p in self._params],
                out_specs=out_specs,
            ),
            compiler_params=pltpu.CompilerParams(
                dimension_semantics=("parallel",)),
        )(x, *self._params)

        # unpack the lane-packed stage outputs (free contiguous reshapes)
        down_feats = []
        for k in range(S):
            c = self._enc_out_channels[k]
            n_level = -(-n // (2 ** (k + 1)))
            arr = outs[k].reshape(r_rows * 2 ** (S - 1 - k), c)
            down_feats.append(arr[:n_level])
        up_feats = []
        for i in range(n_fp):
            c = self._dec_fc2[i]
            n_level = -(-n // (2 ** (S - i - 1)))
            arr = outs[S + i].reshape(r_rows * 2 ** (i + 1), c)
            up_feats.append(arr[:n_level])

        # coordinate attributes per level (deterministic stride-2 sampling)
        aux_levels = [aux]
        cur = aux
        for _ in range(S):
            cur = {k: v[::2] for k, v in cur.items()}
            aux_levels.append(cur)

        return tuple(down_feats), tuple(up_feats), tuple(aux_levels)

    # ------------------------------------------------------------------ forward
    def forward(self, batch_dict):
        points = {}
        for attr in self.point_attributes:
            points[attr] = batch_dict[f"{self.point_key}_{attr}"]
        feat = points["feat"]
        aux = {k: v for k, v in points.items() if k != "feat"}

        down_feats, up_feats, aux_levels = self._core(feat, aux)

        S = self._S
        # ------------------------------ down ---------------------------------
        for k in range(S):
            key = f"hybridconvnet_down{S - k}"
            batch_dict[f"{key}_feat"] = down_feats[k]
            for a, v in aux_levels[k + 1].items():
                batch_dict[f"{key}_{a}"] = v

        # ------------------------------- up ----------------------------------
        for i in range(self._n_fp):
            key = f"hybridconvnet_up{i + 1}"
            lvl = S - i - 1
            batch_dict[f"{key}_feat"] = up_feats[i]
            for a, v in aux_levels[lvl].items():
                batch_dict[f"{key}_{a}"] = v

        if self.output_key is not None:
            final_aux = aux_levels[S - self._n_fp]
            out_bxyz = final_aux.get("bcenter", final_aux.get("bxyz"))
            batch_dict[f"{self.output_key}_bxyz"] = out_bxyz
            batch_dict[f"{self.output_key}_feat"] = up_feats[-1]
        return batch_dict


# ----------------------------------------------------------------------------
# Driver
# ----------------------------------------------------------------------------
if __name__ == "__main__":
    key = jax.random.PRNGKey(0)
    k_xyz, k_feat, k_params = jax.random.split(key, 3)

    n_points = 256
    num_point_features = 4

    xyz = jax.random.normal(k_xyz, (n_points, 3), jnp.float32)
    batch_idx = jnp.zeros((n_points, 1), jnp.float32)
    point_bxyz = jnp.concatenate([batch_idx, xyz], axis=-1)        # [256, 4]
    point_feat = jax.random.normal(k_feat, (n_points, num_point_features),
                                   jnp.float32)                    # [256, 4]
    point_bcenter = point_bxyz                                      # [256, 4]

    batch_dict = {
        "point_bxyz": point_bxyz,
        "point_feat": point_feat,
        "point_bcenter": point_bcenter,
    }

    model = HybridConvNetPallas(
        k_params,
        input_channels=num_point_features,
        sa_channels=[[32, 32], [64, 64]],
        fp_channels=[[64, 64, 32], [32, 32, 32]],
    )

    out = model.forward(dict(batch_dict))
    feat = jax.block_until_ready(out["hybridconvnet_out_feat"])
    bxyz = jax.block_until_ready(out["hybridconvnet_out_bxyz"])
    assert feat.shape == (n_points, model.num_point_features), feat.shape
    assert bxyz.shape == (n_points, 4), bxyz.shape
    assert bool(jnp.all(jnp.isfinite(feat)))
    print("KERNEL_OK")
</pallas_src>

<mosaic_0001>
module attributes {stable_mosaic.version = 11 : i64} {
  func.func @kernel(%arg0: i32, %arg1: memref<64x16xf32, #tpu.memory_space<vmem>>, %arg2: memref<16x32xbf16, #tpu.memory_space<vmem>>, %arg3: memref<16x32xbf16, #tpu.memory_space<vmem>>, %arg4: memref<1x32xf32, #tpu.memory_space<vmem>>, %arg5: memref<32x32xbf16, #tpu.memory_space<vmem>>, %arg6: memref<1x32xf32, #tpu.memory_space<vmem>>, %arg7: memref<32x64xbf16, #tpu.memory_space<vmem>>, %arg8: memref<1x64xf32, #tpu.memory_space<vmem>>, %arg9: memref<64x64xbf16, #tpu.memory_space<vmem>>, %arg10: memref<1x64xf32, #tpu.memory_space<vmem>>, %arg11: memref<64x64xbf16, #tpu.memory_space<vmem>>, %arg12: memref<1x64xf32, #tpu.memory_space<vmem>>, %arg13: memref<64x64xbf16, #tpu.memory_space<vmem>>, %arg14: memref<1x64xf32, #tpu.memory_space<vmem>>, %arg15: memref<64x64xbf16, #tpu.memory_space<vmem>>, %arg16: memref<64x64xbf16, #tpu.memory_space<vmem>>, %arg17: memref<1x64xf32, #tpu.memory_space<vmem>>, %arg18: memref<64x32xbf16, #tpu.memory_space<vmem>>, %arg19: memref<64x32xbf16, #tpu.memory_space<vmem>>, %arg20: memref<64x32xbf16, #tpu.memory_space<vmem>>, %arg21: memref<1x32xf32, #tpu.memory_space<vmem>>, %arg22: memref<32x32xbf16, #tpu.memory_space<vmem>>, %arg23: memref<1x32xf32, #tpu.memory_space<vmem>>, %arg24: memref<32x32xbf16, #tpu.memory_space<vmem>>, %arg25: memref<1x32xf32, #tpu.memory_space<vmem>>, %arg26: memref<32x32xbf16, #tpu.memory_space<vmem>>, %arg27: memref<32x32xbf16, #tpu.memory_space<vmem>>, %arg28: memref<1x32xf32, #tpu.memory_space<vmem>>, %arg29: memref<32x32xbf16, #tpu.memory_space<vmem>>, %arg30: memref<32x32xbf16, #tpu.memory_space<vmem>>, %arg31: memref<32x32xbf16, #tpu.memory_space<vmem>>, %arg32: memref<1x32xf32, #tpu.memory_space<vmem>>, %arg33: memref<64x64xbf16, #tpu.memory_space<vmem>>, %arg34: memref<64x64xbf16, #tpu.memory_space<vmem>>, %arg35: memref<64x64xbf16, #tpu.memory_space<vmem>>, %arg36: memref<64x128xf32, #tpu.memory_space<vmem>>) attributes {dimension_semantics = [#tpu.dimension_semantics<parallel>], iteration_bounds = array<i64: 1>, scalar_prefetch = 0 : i64, scratch_operands = 0 : i64, tpu.core_type = #tpu.core_type<tc>, window_params = [{transform_indices = @transform_0, window_bounds = array<i64: 64, 16>}, {pipeline_mode = #tpu.pipeline_mode<synchronous>, transform_indices = @transform_1, window_bounds = array<i64: 16, 32>}, {pipeline_mode = #tpu.pipeline_mode<synchronous>, transform_indices = @transform_2, window_bounds = array<i64: 16, 32>}, {pipeline_mode = #tpu.pipeline_mode<synchronous>, transform_indices = @transform_3, window_bounds = array<i64: 1, 32>}, {pipeline_mode = #tpu.pipeline_mode<synchronous>, transform_indices = @transform_4, window_bounds = array<i64: 32, 32>}, {pipeline_mode = #tpu.pipeline_mode<synchronous>, transform_indices = @transform_5, window_bounds = array<i64: 1, 32>}, {pipeline_mode = #tpu.pipeline_mode<synchronous>, transform_indices = @transform_6, window_bounds = array<i64: 32, 64>}, {pipeline_mode = #tpu.pipeline_mode<synchronous>, transform_indices = @transform_7, window_bounds = array<i64: 1, 64>}, {pipeline_mode = #tpu.pipeline_mode<synchronous>, transform_indices = @transform_8, window_bounds = array<i64: 64, 64>}, {pipeline_mode = #tpu.pipeline_mode<synchronous>, transform_indices = @transform_9, window_bounds = array<i64: 1, 64>}, {pipeline_mode = #tpu.pipeline_mode<synchronous>, transform_indices = @transform_10, window_bounds = array<i64: 64, 64>}, {pipeline_mode = #tpu.pipeline_mode<synchronous>, transform_indices = @transform_11, window_bounds = array<i64: 1, 64>}, {pipeline_mode = #tpu.pipeline_mode<synchronous>, transform_indices = @transform_12, window_bounds = array<i64: 64, 64>}, {pipeline_mode = #tpu.pipeline_mode<synchronous>, transform_indices = @transform_13, window_bounds = array<i64: 1, 64>}, {pipeline_mode = #tpu.pipeline_mode<synchronous>, transform_indices = @transform_14, window_bounds = array<i64: 64, 64>}, {pipeline_mode = #tpu.pipeline_mode<synchronous>, transform_indices = @transform_15, window_bounds = array<i64: 64, 64>}, {pipeline_mode = #tpu.pipeline_mode<synchronous>, transform_indices = @transform_16, window_bounds = array<i64: 1, 64>}, {pipeline_mode = #tpu.pipeline_mode<synchronous>, transform_indices = @transform_17, window_bounds = array<i64: 64, 32>}, {pipeline_mode = #tpu.pipeline_mode<synchronous>, transform_indices = @transform_18, window_bounds = array<i64: 64, 32>}, {pipeline_mode = #tpu.pipeline_mode<synchronous>, transform_indices = @transform_19, window_bounds = array<i64: 64, 32>}, {pipeline_mode = #tpu.pipeline_mode<synchronous>, transform_indices = @transform_20, window_bounds = array<i64: 1, 32>}, {pipeline_mode = #tpu.pipeline_mode<synchronous>, transform_indices = @transform_21, window_bounds = array<i64: 32, 32>}, {pipeline_mode = #tpu.pipeline_mode<synchronous>, transform_indices = @transform_22, window_bounds = array<i64: 1, 32>}, {pipeline_mode = #tpu.pipeline_mode<synchronous>, transform_indices = @transform_23, window_bounds = array<i64: 32, 32>}, {pipeline_mode = #tpu.pipeline_mode<synchronous>, transform_indices = @transform_24, window_bounds = array<i64: 1, 32>}, {pipeline_mode = #tpu.pipeline_mode<synchronous>, transform_indices = @transform_25, window_bounds = array<i64: 32, 32>}, {pipeline_mode = #tpu.pipeline_mode<synchronous>, transform_indices = @transform_26, window_bounds = array<i64: 32, 32>}, {pipeline_mode = #tpu.pipeline_mode<synchronous>, transform_indices = @transform_27, window_bounds = array<i64: 1, 32>}, {pipeline_mode = #tpu.pipeline_mode<synchronous>, transform_indices = @transform_28, window_bounds = array<i64: 32, 32>}, {pipeline_mode = #tpu.pipeline_mode<synchronous>, transform_indices = @transform_29, window_bounds = array<i64: 32, 32>}, {pipeline_mode = #tpu.pipeline_mode<synchronous>, transform_indices = @transform_30, window_bounds = array<i64: 32, 32>}, {pipeline_mode = #tpu.pipeline_mode<synchronous>, transform_indices = @transform_31, window_bounds = array<i64: 1, 32>}, {transform_indices = @transform_32, window_bounds = array<i64: 64, 64>}, {transform_indices = @transform_33, window_bounds = array<i64: 64, 64>}, {transform_indices = @transform_34, window_bounds = array<i64: 64, 64>}, {transform_indices = @transform_35, window_bounds = array<i64: 64, 128>}]} {
    %c0 = arith.constant 0 : index
    %c0_0 = arith.constant 0 : index
    %0 = vector.load %arg1[%c0, %c0_0] : memref<64x16xf32, #tpu.memory_space<vmem>>, vector<64x16xf32>
    %c0_1 = arith.constant 0 : index
    %c0_2 = arith.constant 0 : index
    %1 = vector.load %arg2[%c0_1, %c0_2] : memref<16x32xbf16, #tpu.memory_space<vmem>>, vector<16x32xbf16>
    %c0_3 = arith.constant 0 : index
    %c0_4 = arith.constant 0 : index
    %2 = vector.load %arg3[%c0_3, %c0_4] : memref<16x32xbf16, #tpu.memory_space<vmem>>, vector<16x32xbf16>
    %c0_5 = arith.constant 0 : index
    %c0_6 = arith.constant 0 : index
    %3 = vector.load %arg4[%c0_5, %c0_6] : memref<1x32xf32, #tpu.memory_space<vmem>>, vector<1x32xf32>
    %4 = arith.truncf %0 : vector<64x16xf32> to vector<64x16xbf16>
    %cst = arith.constant dense<0.000000e+00> : vector<64x32xf32>
    %5 = tpu.matmul %4, %1, %cst {dimension_numbers = #tpu.dot_dimension_numbers<[1], [0], [0], [1], [0, 0, 1, 1], [], []>} : vector<64x16xbf16>, vector<16x32xbf16>, vector<64x32xf32> -> vector<64x32xf32>
    %6 = vector.broadcast %3 : vector<1x32xf32> to vector<64x32xf32>
    %7 = arith.addf %5, %6 : vector<64x32xf32>
    %cst_7 = arith.constant 0.000000e+00 : f32
    %8 = vector.broadcast %cst_7 : f32 to vector<64x32xf32>
    %9 = arith.maximumf %7, %8 : vector<64x32xf32>
    %10 = arith.truncf %0 : vector<64x16xf32> to vector<64x16xbf16>
    %cst_8 = arith.constant dense<0.000000e+00> : vector<64x32xf32>
    %11 = tpu.matmul %10, %2, %cst_8 {dimension_numbers = #tpu.dot_dimension_numbers<[1], [0], [0], [1], [0, 0, 1, 1], [], []>} : vector<64x16xbf16>, vector<16x32xbf16>, vector<64x32xf32> -> vector<64x32xf32>
    %12 = vector.broadcast %3 : vector<1x32xf32> to vector<64x32xf32>
    %13 = arith.addf %11, %12 : vector<64x32xf32>
    %cst_9 = arith.constant 0.000000e+00 : f32
    %14 = vector.broadcast %cst_9 : f32 to vector<64x32xf32>
    %15 = arith.maximumf %13, %14 : vector<64x32xf32>
    %c0_10 = arith.constant 0 : index
    %c0_11 = arith.constant 0 : index
    %16 = vector.load %arg5[%c0_10, %c0_11] : memref<32x32xbf16, #tpu.memory_space<vmem>>, vector<32x32xbf16>
    %c0_12 = arith.constant 0 : index
    %c0_13 = arith.constant 0 : index
    %17 = vector.load %arg6[%c0_12, %c0_13] : memref<1x32xf32, #tpu.memory_space<vmem>>, vector<1x32xf32>
    %18 = arith.truncf %9 : vector<64x32xf32> to vector<64x32xbf16>
    %cst_14 = arith.constant dense<0.000000e+00> : vector<64x32xf32>
    %19 = tpu.matmul %18, %16, %cst_14 {dimension_numbers = #tpu.dot_dimension_numbers<[1], [0], [0], [1], [0, 0, 1, 1], [], []>} : vector<64x32xbf16>, vector<32x32xbf16>, vector<64x32xf32> -> vector<64x32xf32>
    %20 = vector.broadcast %17 : vector<1x32xf32> to vector<64x32xf32>
    %21 = arith.addf %19, %20 : vector<64x32xf32>
    %cst_15 = arith.constant 0.000000e+00 : f32
    %22 = vector.broadcast %cst_15 : f32 to vector<64x32xf32>
    %23 = arith.maximumf %21, %22 : vector<64x32xf32>
    %24 = arith.truncf %15 : vector<64x32xf32> to vector<64x32xbf16>
    %cst_16 = arith.constant dense<0.000000e+00> : vector<64x32xf32>
    %25 = tpu.matmul %24, %16, %cst_16 {dimension_numbers = #tpu.dot_dimension_numbers<[1], [0], [0], [1], [0, 0, 1, 1], [], []>} : vector<64x32xbf16>, vector<32x32xbf16>, vector<64x32xf32> -> vector<64x32xf32>
    %26 = vector.broadcast %17 : vector<1x32xf32> to vector<64x32xf32>
    %27 = arith.addf %25, %26 : vector<64x32xf32>
    %cst_17 = arith.constant 0.000000e+00 : f32
    %28 = vector.broadcast %cst_17 : f32 to vector<64x32xf32>
    %29 = arith.maximumf %27, %28 : vector<64x32xf32>
    %30 = tpu.concatenate %23, %29 in 1 : vector<64x32xf32>, vector<64x32xf32> -> vector<64x64xf32>
    %31 = arith.truncf %30 : vector<64x64xf32> to vector<64x64xbf16>
    %c0_18 = arith.constant 0 : index
    %c0_19 = arith.constant 0 : index
    %32 = vector.load %arg33[%c0_18, %c0_19] : memref<64x64xbf16, #tpu.memory_space<vmem>>, vector<64x64xbf16>
    tpu.vector_store %arg33[%c0_18, %c0_19], %31 {strides = array<i32>} : memref<64x64xbf16, #tpu.memory_space<vmem>>, vector<64x64xbf16>,
    %c0_20 = arith.constant 0 : index
    %c0_21 = arith.constant 0 : index
    %33 = vector.load %arg7[%c0_20, %c0_21] : memref<32x64xbf16, #tpu.memory_space<vmem>>, vector<32x64xbf16>
    %c0_22 = arith.constant 0 : index
    %c0_23 = arith.constant 0 : index
    %34 = vector.load %arg8[%c0_22, %c0_23] : memref<1x64xf32, #tpu.memory_space<vmem>>, vector<1x64xf32>
    %35 = arith.truncf %23 : vector<64x32xf32> to vector<64x32xbf16>
    %cst_24 = arith.constant dense<0.000000e+00> : vector<64x64xf32>
    %36 = tpu.matmul %35, %33, %cst_24 {dimension_numbers = #tpu.dot_dimension_numbers<[1], [0], [0], [1], [0, 0, 1, 1], [], []>} : vector<64x32xbf16>, vector<32x64xbf16>, vector<64x64xf32> -> vector<64x64xf32>
    %37 = vector.broadcast %34 : vector<1x64xf32> to vector<64x64xf32>
    %38 = arith.addf %36, %37 : vector<64x64xf32>
    %cst_25 = arith.constant 0.000000e+00 : f32
    %39 = vector.broadcast %cst_25 : f32 to vector<64x64xf32>
    %40 = arith.maximumf %38, %39 : vector<64x64xf32>
    %c0_26 = arith.constant 0 : index
    %c0_27 = arith.constant 0 : index
    %41 = vector.load %arg9[%c0_26, %c0_27] : memref<64x64xbf16, #tpu.memory_space<vmem>>, vector<64x64xbf16>
    %c0_28 = arith.constant 0 : index
    %c0_29 = arith.constant 0 : index
    %42 = vector.load %arg10[%c0_28, %c0_29] : memref<1x64xf32, #tpu.memory_space<vmem>>, vector<1x64xf32>
    %43 = arith.truncf %40 : vector<64x64xf32> to vector<64x64xbf16>
    %cst_30 = arith.constant dense<0.000000e+00> : vector<64x64xf32>
    %44 = tpu.matmul %43, %41, %cst_30 {dimension_numbers = #tpu.dot_dimension_numbers<[1], [0], [0], [1], [0, 0, 1, 1], [], []>} : vector<64x64xbf16>, vector<64x64xbf16>, vector<64x64xf32> -> vector<64x64xf32>
    %45 = vector.broadcast %42 : vector<1x64xf32> to vector<64x64xf32>
    %46 = arith.addf %44, %45 : vector<64x64xf32>
    %cst_31 = arith.constant 0.000000e+00 : f32
    %47 = vector.broadcast %cst_31 : f32 to vector<64x64xf32>
    %48 = arith.maximumf %46, %47 : vector<64x64xf32>
    %49 = arith.truncf %48 : vector<64x64xf32> to vector<64x64xbf16>
    %c0_32 = arith.constant 0 : index
    %c0_33 = arith.constant 0 : index
    %50 = vector.load %arg34[%c0_32, %c0_33] : memref<64x64xbf16, #tpu.memory_space<vmem>>, vector<64x64xbf16>
    tpu.vector_store %arg34[%c0_32, %c0_33], %49 {strides = array<i32>} : memref<64x64xbf16, #tpu.memory_space<vmem>>, vector<64x64xbf16>,
    %c0_34 = arith.constant 0 : index
    %c0_35 = arith.constant 0 : index
    %51 = vector.load %arg11[%c0_34, %c0_35] : memref<64x64xbf16, #tpu.memory_space<vmem>>, vector<64x64xbf16>
    %c0_36 = arith.constant 0 : index
    %c0_37 = arith.constant 0 : index
    %52 = vector.load %arg12[%c0_36, %c0_37] : memref<1x64xf32, #tpu.memory_space<vmem>>, vector<1x64xf32>
    %c0_38 = arith.constant 0 : index
    %c0_39 = arith.constant 0 : index
    %53 = vector.load %arg13[%c0_38, %c0_39] : memref<64x64xbf16, #tpu.memory_space<vmem>>, vector<64x64xbf16>
    %c0_40 = arith.constant 0 : index
    %c0_41 = arith.constant 0 : index
    %54 = vector.load %arg14[%c0_40, %c0_41] : memref<1x64xf32, #tpu.memory_space<vmem>>, vector<1x64xf32>
    %c0_42 = arith.constant 0 : index
    %c0_43 = arith.constant 0 : index
    %55 = vector.load %arg15[%c0_42, %c0_43] : memref<64x64xbf16, #tpu.memory_space<vmem>>, vector<64x64xbf16>
    %c0_44 = arith.constant 0 : index
    %c0_45 = arith.constant 0 : index
    %56 = vector.load %arg16[%c0_44, %c0_45] : memref<64x64xbf16, #tpu.memory_space<vmem>>, vector<64x64xbf16>
    %c0_46 = arith.constant 0 : index
    %c0_47 = arith.constant 0 : index
    %57 = vector.load %arg17[%c0_46, %c0_47] : memref<1x64xf32, #tpu.memory_space<vmem>>, vector<1x64xf32>
    %c0_48 = arith.constant 0 : index
    %c0_49 = arith.constant 0 : index
    %58 = vector.load %arg18[%c0_48, %c0_49] : memref<64x32xbf16, #tpu.memory_space<vmem>>, vector<64x32xbf16>
    %c0_50 = arith.constant 0 : index
    %c0_51 = arith.constant 0 : index
    %59 = vector.load %arg19[%c0_50, %c0_51] : memref<64x32xbf16, #tpu.memory_space<vmem>>, vector<64x32xbf16>
    %c0_52 = arith.constant 0 : index
    %c0_53 = arith.constant 0 : index
    %60 = vector.load %arg20[%c0_52, %c0_53] : memref<64x32xbf16, #tpu.memory_space<vmem>>, vector<64x32xbf16>
    %c0_54 = arith.constant 0 : index
    %c0_55 = arith.constant 0 : index
    %61 = vector.load %arg21[%c0_54, %c0_55] : memref<1x32xf32, #tpu.memory_space<vmem>>, vector<1x32xf32>
    %62 = arith.truncf %48 : vector<64x64xf32> to vector<64x64xbf16>
    %cst_56 = arith.constant dense<0.000000e+00> : vector<64x64xf32>
    %63 = tpu.matmul %62, %51, %cst_56 {dimension_numbers = #tpu.dot_dimension_numbers<[1], [0], [0], [1], [0, 0, 1, 1], [], []>} : vector<64x64xbf16>, vector<64x64xbf16>, vector<64x64xf32> -> vector<64x64xf32>
    %64 = vector.broadcast %52 : vector<1x64xf32> to vector<64x64xf32>
    %65 = arith.addf %63, %64 : vector<64x64xf32>
    %cst_57 = arith.constant 0.000000e+00 : f32
    %66 = vector.broadcast %cst_57 : f32 to vector<64x64xf32>
    %67 = arith.maximumf %65, %66 : vector<64x64xf32>
    %68 = arith.truncf %67 : vector<64x64xf32> to vector<64x64xbf16>
    %cst_58 = arith.constant dense<0.000000e+00> : vector<64x64xf32>
    %69 = tpu.matmul %68, %53, %cst_58 {dimension_numbers = #tpu.dot_dimension_numbers<[1], [0], [0], [1], [0, 0, 1, 1], [], []>} : vector<64x64xbf16>, vector<64x64xbf16>, vector<64x64xf32> -> vector<64x64xf32>
    %70 = vector.broadcast %54 : vector<1x64xf32> to vector<64x64xf32>
    %71 = arith.addf %69, %70 : vector<64x64xf32>
    %72 = arith.addf %71, %48 : vector<64x64xf32>
    %cst_59 = arith.constant 0.000000e+00 : f32
    %73 = vector.broadcast %cst_59 : f32 to vector<64x64xf32>
    %74 = arith.maximumf %72, %73 : vector<64x64xf32>
    %75 = arith.truncf %48 : vector<64x64xf32> to vector<64x64xbf16>
    %76 = arith.truncf %74 : vector<64x64xf32> to vector<64x64xbf16>
    %cst_60 = arith.constant dense<0.000000e+00> : vector<64x64xf32>
    %77 = tpu.matmul %75, %55, %cst_60 {dimension_numbers = #tpu.dot_dimension_numbers<[1], [0], [0], [1], [0, 0, 1, 1], [], []>} : vector<64x64xbf16>, vector<64x64xbf16>, vector<64x64xf32> -> vector<64x64xf32>
    %cst_61 = arith.constant dense<0.000000e+00> : vector<64x64xf32>
    %78 = tpu.matmul %76, %56, %cst_61 {dimension_numbers = #tpu.dot_dimension_numbers<[1], [0], [0], [1], [0, 0, 1, 1], [], []>} : vector<64x64xbf16>, vector<64x64xbf16>, vector<64x64xf32> -> vector<64x64xf32>
    %79 = arith.addf %77, %78 : vector<64x64xf32>
    %80 = vector.broadcast %57 : vector<1x64xf32> to vector<64x64xf32>
    %81 = arith.addf %79, %80 : vector<64x64xf32>
    %cst_62 = arith.constant 0.000000e+00 : f32
    %82 = vector.broadcast %cst_62 : f32 to vector<64x64xf32>
    %83 = arith.maximumf %81, %82 : vector<64x64xf32>
    %84 = arith.truncf %83 : vector<64x64xf32> to vector<64x64xbf16>
    %cst_63 = arith.constant dense<0.000000e+00> : vector<64x32xf32>
    %85 = tpu.matmul %84, %58, %cst_63 {dimension_numbers = #tpu.dot_dimension_numbers<[1], [0], [0], [1], [0, 0, 1, 1], [], []>} : vector<64x64xbf16>, vector<64x32xbf16>, vector<64x32xf32> -> vector<64x32xf32>
    %cst_64 = arith.constant dense<0.000000e+00> : vector<64x32xf32>
    %86 = tpu.matmul %75, %59, %cst_64 {dimension_numbers = #tpu.dot_dimension_numbers<[1], [0], [0], [1], [0, 0, 1, 1], [], []>} : vector<64x64xbf16>, vector<64x32xbf16>, vector<64x32xf32> -> vector<64x32xf32>
    %87 = arith.addf %85, %86 : vector<64x32xf32>
    %cst_65 = arith.constant dense<0.000000e+00> : vector<64x32xf32>
    %88 = tpu.matmul %76, %60, %cst_65 {dimension_numbers = #tpu.dot_dimension_numbers<[1], [0], [0], [1], [0, 0, 1, 1], [], []>} : vector<64x64xbf16>, vector<64x32xbf16>, vector<64x32xf32> -> vector<64x32xf32>
    %89 = arith.addf %87, %88 : vector<64x32xf32>
    %90 = vector.broadcast %61 : vector<1x32xf32> to vector<64x32xf32>
    %91 = arith.addf %89, %90 : vector<64x32xf32>
    %cst_66 = arith.constant 0.000000e+00 : f32
    %92 = vector.broadcast %cst_66 : f32 to vector<64x32xf32>
    %93 = arith.maximumf %91, %92 : vector<64x32xf32>
    %94 = tpu.concatenate %93, %93 in 1 : vector<64x32xf32>, vector<64x32xf32> -> vector<64x64xf32>
    %95 = arith.truncf %94 : vector<64x64xf32> to vector<64x64xbf16>
    %c0_67 = arith.constant 0 : index
    %c0_68 = arith.constant 0 : index
    %96 = vector.load %arg35[%c0_67, %c0_68] : memref<64x64xbf16, #tpu.memory_space<vmem>>, vector<64x64xbf16>
    tpu.vector_store %arg35[%c0_67, %c0_68], %95 {strides = array<i32>} : memref<64x64xbf16, #tpu.memory_space<vmem>>, vector<64x64xbf16>,
    %c0_69 = arith.constant 0 : index
    %c0_70 = arith.constant 0 : index
    %97 = vector.load %arg22[%c0_69, %c0_70] : memref<32x32xbf16, #tpu.memory_space<vmem>>, vector<32x32xbf16>
    %c0_71 = arith.constant 0 : index
    %c0_72 = arith.constant 0 : index
    %98 = vector.load %arg23[%c0_71, %c0_72] : memref<1x32xf32, #tpu.memory_space<vmem>>, vector<1x32xf32>
    %c0_73 = arith.constant 0 : index
    %c0_74 = arith.constant 0 : index
    %99 = vector.load %arg24[%c0_73, %c0_74] : memref<32x32xbf16, #tpu.memory_space<vmem>>, vector<32x32xbf16>
    %c0_75 = arith.constant 0 : index
    %c0_76 = arith.constant 0 : index
    %100 = vector.load %arg25[%c0_75, %c0_76] : memref<1x32xf32, #tpu.memory_space<vmem>>, vector<1x32xf32>
    %c0_77 = arith.constant 0 : index
    %c0_78 = arith.constant 0 : index
    %101 = vector.load %arg26[%c0_77, %c0_78] : memref<32x32xbf16, #tpu.memory_space<vmem>>, vector<32x32xbf16>
    %c0_79 = arith.constant 0 : index
    %c0_80 = arith.constant 0 : index
    %102 = vector.load %arg27[%c0_79, %c0_80] : memref<32x32xbf16, #tpu.memory_space<vmem>>, vector<32x32xbf16>
    %c0_81 = arith.constant 0 : index
    %c0_82 = arith.constant 0 : index
    %103 = vector.load %arg28[%c0_81, %c0_82] : memref<1x32xf32, #tpu.memory_space<vmem>>, vector<1x32xf32>
    %c0_83 = arith.constant 0 : index
    %c0_84 = arith.constant 0 : index
    %104 = vector.load %arg29[%c0_83, %c0_84] : memref<32x32xbf16, #tpu.memory_space<vmem>>, vector<32x32xbf16>
    %c0_85 = arith.constant 0 : index
    %c0_86 = arith.constant 0 : index
    %105 = vector.load %arg30[%c0_85, %c0_86] : memref<32x32xbf16, #tpu.memory_space<vmem>>, vector<32x32xbf16>
    %c0_87 = arith.constant 0 : index
    %c0_88 = arith.constant 0 : index
    %106 = vector.load %arg31[%c0_87, %c0_88] : memref<32x32xbf16, #tpu.memory_space<vmem>>, vector<32x32xbf16>
    %c0_89 = arith.constant 0 : index
    %c0_90 = arith.constant 0 : index
    %107 = vector.load %arg32[%c0_89, %c0_90] : memref<1x32xf32, #tpu.memory_space<vmem>>, vector<1x32xf32>
    %108 = arith.truncf %23 : vector<64x32xf32> to vector<64x32xbf16>
    %cst_91 = arith.constant dense<0.000000e+00> : vector<64x32xf32>
    %109 = tpu.matmul %108, %97, %cst_91 {dimension_numbers = #tpu.dot_dimension_numbers<[1], [0], [0], [1], [0, 0, 1, 1], [], []>} : vector<64x32xbf16>, vector<32x32xbf16>, vector<64x32xf32> -> vector<64x32xf32>
    %110 = vector.broadcast %98 : vector<1x32xf32> to vector<64x32xf32>
    %111 = arith.addf %109, %110 : vector<64x32xf32>
    %cst_92 = arith.constant 0.000000e+00 : f32
    %112 = vector.broadcast %cst_92 : f32 to vector<64x32xf32>
    %113 = arith.maximumf %111, %112 : vector<64x32xf32>
    %114 = arith.truncf %113 : vector<64x32xf32> to vector<64x32xbf16>
    %cst_93 = arith.constant dense<0.000000e+00> : vector<64x32xf32>
    %115 = tpu.matmul %114, %99, %cst_93 {dimension_numbers = #tpu.dot_dimension_numbers<[1], [0], [0], [1], [0, 0, 1, 1], [], []>} : vector<64x32xbf16>, vector<32x32xbf16>, vector<64x32xf32> -> vector<64x32xf32>
    %116 = vector.broadcast %100 : vector<1x32xf32> to vector<64x32xf32>
    %117 = arith.addf %115, %116 : vector<64x32xf32>
    %118 = arith.addf %117, %23 : vector<64x32xf32>
    %cst_94 = arith.constant 0.000000e+00 : f32
    %119 = vector.broadcast %cst_94 : f32 to vector<64x32xf32>
    %120 = arith.maximumf %118, %119 : vector<64x32xf32>
    %121 = arith.truncf %93 : vector<64x32xf32> to vector<64x32xbf16>
    %122 = arith.truncf %120 : vector<64x32xf32> to vector<64x32xbf16>
    %cst_95 = arith.constant dense<0.000000e+00> : vector<64x32xf32>
    %123 = tpu.matmul %121, %101, %cst_95 {dimension_numbers = #tpu.dot_dimension_numbers<[1], [0], [0], [1], [0, 0, 1, 1], [], []>} : vector<64x32xbf16>, vector<32x32xbf16>, vector<64x32xf32> -> vector<64x32xf32>
    %cst_96 = arith.constant dense<0.000000e+00> : vector<64x32xf32>
    %124 = tpu.matmul %122, %102, %cst_96 {dimension_numbers = #tpu.dot_dimension_numbers<[1], [0], [0], [1], [0, 0, 1, 1], [], []>} : vector<64x32xbf16>, vector<32x32xbf16>, vector<64x32xf32> -> vector<64x32xf32>
    %125 = arith.addf %123, %124 : vector<64x32xf32>
    %126 = vector.broadcast %103 : vector<1x32xf32> to vector<64x32xf32>
    %127 = arith.addf %125, %126 : vector<64x32xf32>
    %cst_97 = arith.constant 0.000000e+00 : f32
    %128 = vector.broadcast %cst_97 : f32 to vector<64x32xf32>
    %129 = arith.maximumf %127, %128 : vector<64x32xf32>
    %130 = arith.truncf %129 : vector<64x32xf32> to vector<64x32xbf16>
    %cst_98 = arith.constant dense<0.000000e+00> : vector<64x32xf32>
    %131 = tpu.matmul %130, %104, %cst_98 {dimension_numbers = #tpu.dot_dimension_numbers<[1], [0], [0], [1], [0, 0, 1, 1], [], []>} : vector<64x32xbf16>, vector<32x32xbf16>, vector<64x32xf32> -> vector<64x32xf32>
    %cst_99 = arith.constant dense<0.000000e+00> : vector<64x32xf32>
    %132 = tpu.matmul %121, %105, %cst_99 {dimension_numbers = #tpu.dot_dimension_numbers<[1], [0], [0], [1], [0, 0, 1, 1], [], []>} : vector<64x32xbf16>, vector<32x32xbf16>, vector<64x32xf32> -> vector<64x32xf32>
    %133 = arith.addf %131, %132 : vector<64x32xf32>
    %cst_100 = arith.constant dense<0.000000e+00> : vector<64x32xf32>
    %134 = tpu.matmul %122, %106, %cst_100 {dimension_numbers = #tpu.dot_dimension_numbers<[1], [0], [0], [1], [0, 0, 1, 1], [], []>} : vector<64x32xbf16>, vector<32x32xbf16>, vector<64x32xf32> -> vector<64x32xf32>
    %135 = arith.addf %133, %134 : vector<64x32xf32>
    %136 = vector.broadcast %107 : vector<1x32xf32> to vector<64x32xf32>
    %137 = arith.addf %135, %136 : vector<64x32xf32>
    %cst_101 = arith.constant 0.000000e+00 : f32
    %138 = vector.broadcast %cst_101 : f32 to vector<64x32xf32>
    %139 = arith.maximumf %137, %138 : vector<64x32xf32>
    %140 = arith.truncf %29 : vector<64x32xf32> to vector<64x32xbf16>
    %cst_102 = arith.constant dense<0.000000e+00> : vector<64x32xf32>
    %141 = tpu.matmul %140, %97, %cst_102 {dimension_numbers = #tpu.dot_dimension_numbers<[1], [0], [0], [1], [0, 0, 1, 1], [], []>} : vector<64x32xbf16>, vector<32x32xbf16>, vector<64x32xf32> -> vector<64x32xf32>
    %142 = vector.broadcast %98 : vector<1x32xf32> to vector<64x32xf32>
    %143 = arith.addf %141, %142 : vector<64x32xf32>
    %cst_103 = arith.constant 0.000000e+00 : f32
    %144 = vector.broadcast %cst_103 : f32 to vector<64x32xf32>
    %145 = arith.maximumf %143, %144 : vector<64x32xf32>
    %146 = arith.truncf %145 : vector<64x32xf32> to vector<64x32xbf16>
    %cst_104 = arith.constant dense<0.000000e+00> : vector<64x32xf32>
    %147 = tpu.matmul %146, %99, %cst_104 {dimension_numbers = #tpu.dot_dimension_numbers<[1], [0], [0], [1], [0, 0, 1, 1], [], []>} : vector<64x32xbf16>, vector<32x32xbf16>, vector<64x32xf32> -> vector<64x32xf32>
    %148 = vector.broadcast %100 : vector<1x32xf32> to vector<64x32xf32>
    %149 = arith.addf %147, %148 : vector<64x32xf32>
    %150 = arith.addf %149, %29 : vector<64x32xf32>
    %cst_105 = arith.constant 0.000000e+00 : f32
    %151 = vector.broadcast %cst_105 : f32 to vector<64x32xf32>
    %152 = arith.maximumf %150, %151 : vector<64x32xf32>
    %153 = arith.truncf %93 : vector<64x32xf32> to vector<64x32xbf16>
    %154 = arith.truncf %152 : vector<64x32xf32> to vector<64x32xbf16>
    %cst_106 = arith.constant dense<0.000000e+00> : vector<64x32xf32>
    %155 = tpu.matmul %153, %101, %cst_106 {dimension_numbers = #tpu.dot_dimension_numbers<[1], [0], [0], [1], [0, 0, 1, 1], [], []>} : vector<64x32xbf16>, vector<32x32xbf16>, vector<64x32xf32> -> vector<64x32xf32>
    %cst_107 = arith.constant dense<0.000000e+00> : vector<64x32xf32>
    %156 = tpu.matmul %154, %102, %cst_107 {dimension_numbers = #tpu.dot_dimension_numbers<[1], [0], [0], [1], [0, 0, 1, 1], [], []>} : vector<64x32xbf16>, vector<32x32xbf16>, vector<64x32xf32> -> vector<64x32xf32>
    %157 = arith.addf %155, %156 : vector<64x32xf32>
    %158 = vector.broadcast %103 : vector<1x32xf32> to vector<64x32xf32>
    %159 = arith.addf %157, %158 : vector<64x32xf32>
    %cst_108 = arith.constant 0.000000e+00 : f32
    %160 = vector.broadcast %cst_108 : f32 to vector<64x32xf32>
    %161 = arith.maximumf %159, %160 : vector<64x32xf32>
    %162 = arith.truncf %161 : vector<64x32xf32> to vector<64x32xbf16>
    %cst_109 = arith.constant dense<0.000000e+00> : vector<64x32xf32>
    %163 = tpu.matmul %162, %104, %cst_109 {dimension_numbers = #tpu.dot_dimension_numbers<[1], [0], [0], [1], [0, 0, 1, 1], [], []>} : vector<64x32xbf16>, vector<32x32xbf16>, vector<64x32xf32> -> vector<64x32xf32>
    %cst_110 = arith.constant dense<0.000000e+00> : vector<64x32xf32>
    %164 = tpu.matmul %153, %105, %cst_110 {dimension_numbers = #tpu.dot_dimension_numbers<[1], [0], [0], [1], [0, 0, 1, 1], [], []>} : vector<64x32xbf16>, vector<32x32xbf16>, vector<64x32xf32> -> vector<64x32xf32>
    %165 = arith.addf %163, %164 : vector<64x32xf32>
    %cst_111 = arith.constant dense<0.000000e+00> : vector<64x32xf32>
    %166 = tpu.matmul %154, %106, %cst_111 {dimension_numbers = #tpu.dot_dimension_numbers<[1], [0], [0], [1], [0, 0, 1, 1], [], []>} : vector<64x32xbf16>, vector<32x32xbf16>, vector<64x32xf32> -> vector<64x32xf32>
    %167 = arith.addf %165, %166 : vector<64x32xf32>
    %168 = vector.broadcast %107 : vector<1x32xf32> to vector<64x32xf32>
    %169 = arith.addf %167, %168 : vector<64x32xf32>
    %cst_112 = arith.constant 0.000000e+00 : f32
    %170 = vector.broadcast %cst_112 : f32 to vector<64x32xf32>
    %171 = arith.maximumf %169, %170 : vector<64x32xf32>
    %172 = tpu.concatenate %139, %139, %171, %171 in 1 : vector<64x32xf32>, vector<64x32xf32>, vector<64x32xf32>, vector<64x32xf32> -> vector<64x128xf32>
    %c0_113 = arith.constant 0 : index
    %c0_114 = arith.constant 0 : index
    %173 = vector.load %arg36[%c0_113, %c0_114] : memref<64x128xf32, #tpu.memory_space<vmem>>, vector<64x128xf32>
    tpu.vector_store %arg36[%c0_113, %c0_114], %172 {strides = array<i32>} : memref<64x128xf32, #tpu.memory_space<vmem>>, vector<64x128xf32>,
    return
  }
  func.func @transform_0(%arg0: i32) -> (i32, i32) {
    %c0_i32 = arith.constant 0 : i32
    %c0_i32_0 = arith.constant 0 : i32
    return %arg0, %c0_i32 : i32, i32
  }
  func.func @transform_1(%arg0: i32) -> (i32, i32) {
    %c0_i32 = arith.constant 0 : i32
    %c0_i32_0 = arith.constant 0 : i32
    %c0_i32_1 = arith.constant 0 : i32
    return %c0_i32, %c0_i32_0 : i32, i32
  }
  func.func @transform_2(%arg0: i32) -> (i32, i32) {
    %c0_i32 = arith.constant 0 : i32
    %c0_i32_0 = arith.constant 0 : i32
    %c0_i32_1 = arith.constant 0 : i32
    return %c0_i32, %c0_i32_0 : i32, i32
  }
  func.func @transform_3(%arg0: i32) -> (i32, i32) {
    %c0_i32 = arith.constant 0 : i32
    %c0_i32_0 = arith.constant 0 : i32
    %c0_i32_1 = arith.constant 0 : i32
    return %c0_i32, %c0_i32_0 : i32, i32
  }
  func.func @transform_4(%arg0: i32) -> (i32, i32) {
    %c0_i32 = arith.constant 0 : i32
    %c0_i32_0 = arith.constant 0 : i32
    %c0_i32_1 = arith.constant 0 : i32
    return %c0_i32, %c0_i32_0 : i32, i32
  }
  func.func @transform_5(%arg0: i32) -> (i32, i32) {
    %c0_i32 = arith.constant 0 : i32
    %c0_i32_0 = arith.constant 0 : i32
    %c0_i32_1 = arith.constant 0 : i32
    return %c0_i32, %c0_i32_0 : i32, i32
  }
  func.func @transform_6(%arg0: i32) -> (i32, i32) {
    %c0_i32 = arith.constant 0 : i32
    %c0_i32_0 = arith.constant 0 : i32
    %c0_i32_1 = arith.constant 0 : i32
    return %c0_i32, %c0_i32_0 : i32, i32
  }
  func.func @transform_7(%arg0: i32) -> (i32, i32) {
    %c0_i32 = arith.constant 0 : i32
    %c0_i32_0 = arith.constant 0 : i32
    %c0_i32_1 = arith.constant 0 : i32
    return %c0_i32, %c0_i32_0 : i32, i32
  }
  func.func @transform_8(%arg0: i32) -> (i32, i32) {
    %c0_i32 = arith.constant 0 : i32
    %c0_i32_0 = arith.constant 0 : i32
    %c0_i32_1 = arith.constant 0 : i32
    return %c0_i32, %c0_i32_0 : i32, i32
  }
  func.func @transform_9(%arg0: i32) -> (i32, i32) {
    %c0_i32 = arith.constant 0 : i32
    %c0_i32_0 = arith.constant 0 : i32
    %c0_i32_1 = arith.constant 0 : i32
    return %c0_i32, %c0_i32_0 : i32, i32
  }
  func.func @transform_10(%arg0: i32) -> (i32, i32) {
    %c0_i32 = arith.constant 0 : i32
    %c0_i32_0 = arith.constant 0 : i32
    %c0_i32_1 = arith.constant 0 : i32
    return %c0_i32, %c0_i32_0 : i32, i32
  }
  func.func @transform_11(%arg0: i32) -> (i32, i32) {
    %c0_i32 = arith.constant 0 : i32
    %c0_i32_0 = arith.constant 0 : i32
    %c0_i32_1 = arith.constant 0 : i32
    return %c0_i32, %c0_i32_0 : i32, i32
  }
  func.func @transform_12(%arg0: i32) -> (i32, i32) {
    %c0_i32 = arith.constant 0 : i32
    %c0_i32_0 = arith.constant 0 : i32
    %c0_i32_1 = arith.constant 0 : i32
    return %c0_i32, %c0_i32_0 : i32, i32
  }
  func.func @transform_13(%arg0: i32) -> (i32, i32) {
    %c0_i32 = arith.constant 0 : i32
    %c0_i32_0 = arith.constant 0 : i32
    %c0_i32_1 = arith.constant 0 : i32
    return %c0_i32, %c0_i32_0 : i32, i32
  }
  func.func @transform_14(%arg0: i32) -> (i32, i32) {
    %c0_i32 = arith.constant 0 : i32
    %c0_i32_0 = arith.constant 0 : i32
    %c0_i32_1 = arith.constant 0 : i32
    return %c0_i32, %c0_i32_0 : i32, i32
  }
  func.func @transform_15(%arg0: i32) -> (i32, i32) {
    %c0_i32 = arith.constant 0 : i32
    %c0_i32_0 = arith.constant 0 : i32
    %c0_i32_1 = arith.constant 0 : i32
    return %c0_i32, %c0_i32_0 : i32, i32
  }
  func.func @transform_16(%arg0: i32) -> (i32, i32) {
    %c0_i32 = arith.constant 0 : i32
    %c0_i32_0 = arith.constant 0 : i32
    %c0_i32_1 = arith.constant 0 : i32
    return %c0_i32, %c0_i32_0 : i32, i32
  }
  func.func @transform_17(%arg0: i32) -> (i32, i32) {
    %c0_i32 = arith.constant 0 : i32
    %c0_i32_0 = arith.constant 0 : i32
    %c0_i32_1 = arith.constant 0 : i32
    return %c0_i32, %c0_i32_0 : i32, i32
  }
  func.func @transform_18(%arg0: i32) -> (i32, i32) {
    %c0_i32 = arith.constant 0 : i32
    %c0_i32_0 = arith.constant 0 : i32
    %c0_i32_1 = arith.constant 0 : i32
    return %c0_i32, %c0_i32_0 : i32, i32
  }
  func.func @transform_19(%arg0: i32) -> (i32, i32) {
    %c0_i32 = arith.constant 0 : i32
    %c0_i32_0 = arith.constant 0 : i32
    %c0_i32_1 = arith.constant 0 : i32
    return %c0_i32, %c0_i32_0 : i32, i32
  }
  func.func @transform_20(%arg0: i32) -> (i32, i32) {
    %c0_i32 = arith.constant 0 : i32
    %c0_i32_0 = arith.constant 0 : i32
    %c0_i32_1 = arith.constant 0 : i32
    return %c0_i32, %c0_i32_0 : i32, i32
  }
  func.func @transform_21(%arg0: i32) -> (i32, i32) {
    %c0_i32 = arith.constant 0 : i32
    %c0_i32_0 = arith.constant 0 : i32
    %c0_i32_1 = arith.constant 0 : i32
    return %c0_i32, %c0_i32_0 : i32, i32
  }
  func.func @transform_22(%arg0: i32) -> (i32, i32) {
    %c0_i32 = arith.constant 0 : i32
    %c0_i32_0 = arith.constant 0 : i32
    %c0_i32_1 = arith.constant 0 : i32
    return %c0_i32, %c0_i32_0 : i32, i32
  }
  func.func @transform_23(%arg0: i32) -> (i32, i32) {
    %c0_i32 = arith.constant 0 : i32
    %c0_i32_0 = arith.constant 0 : i32
    %c0_i32_1 = arith.constant 0 : i32
    return %c0_i32, %c0_i32_0 : i32, i32
  }
  func.func @transform_24(%arg0: i32) -> (i32, i32) {
    %c0_i32 = arith.constant 0 : i32
    %c0_i32_0 = arith.constant 0 : i32
    %c0_i32_1 = arith.constant 0 : i32
    return %c0_i32, %c0_i32_0 : i32, i32
  }
  func.func @transform_25(%arg0: i32) -> (i32, i32) {
    %c0_i32 = arith.constant 0 : i32
    %c0_i32_0 = arith.constant 0 : i32
    %c0_i32_1 = arith.constant 0 : i32
    return %c0_i32, %c0_i32_0 : i32, i32
  }
  func.func @transform_26(%arg0: i32) -> (i32, i32) {
    %c0_i32 = arith.constant 0 : i32
    %c0_i32_0 = arith.constant 0 : i32
    %c0_i32_1 = arith.constant 0 : i32
    return %c0_i32, %c0_i32_0 : i32, i32
  }
  func.func @transform_27(%arg0: i32) -> (i32, i32) {
    %c0_i32 = arith.constant 0 : i32
    %c0_i32_0 = arith.constant 0 : i32
    %c0_i32_1 = arith.constant 0 : i32
    return %c0_i32, %c0_i32_0 : i32, i32
  }
  func.func @transform_28(%arg0: i32) -> (i32, i32) {
    %c0_i32 = arith.constant 0 : i32
    %c0_i32_0 = arith.constant 0 : i32
    %c0_i32_1 = arith.constant 0 : i32
    return %c0_i32, %c0_i32_0 : i32, i32
  }
  func.func @transform_29(%arg0: i32) -> (i32, i32) {
    %c0_i32 = arith.constant 0 : i32
    %c0_i32_0 = arith.constant 0 : i32
    %c0_i32_1 = arith.constant 0 : i32
    return %c0_i32, %c0_i32_0 : i32, i32
  }
  func.func @transform_30(%arg0: i32) -> (i32, i32) {
    %c0_i32 = arith.constant 0 : i32
    %c0_i32_0 = arith.constant 0 : i32
    %c0_i32_1 = arith.constant 0 : i32
    return %c0_i32, %c0_i32_0 : i32, i32
  }
  func.func @transform_31(%arg0: i32) -> (i32, i32) {
    %c0_i32 = arith.constant 0 : i32
    %c0_i32_0 = arith.constant 0 : i32
    %c0_i32_1 = arith.constant 0 : i32
    return %c0_i32, %c0_i32_0 : i32, i32
  }
  func.func @transform_32(%arg0: i32) -> (i32, i32) {
    %c0_i32 = arith.constant 0 : i32
    %c0_i32_0 = arith.constant 0 : i32
    return %arg0, %c0_i32 : i32, i32
  }
  func.func @transform_33(%arg0: i32) -> (i32, i32) {
    %c0_i32 = arith.constant 0 : i32
    %c0_i32_0 = arith.constant 0 : i32
    return %arg0, %c0_i32 : i32, i32
  }
  func.func @transform_34(%arg0: i32) -> (i32, i32) {
    %c0_i32 = arith.constant 0 : i32
    %c0_i32_0 = arith.constant 0 : i32
    return %arg0, %c0_i32 : i32, i32
  }
  func.func @transform_35(%arg0: i32) -> (i32, i32) {
    %c0_i32 = arith.constant 0 : i32
    %c0_i32_0 = arith.constant 0 : i32
    return %arg0, %c0_i32 : i32, i32
  }
}

</mosaic_0001>

<llo_original>
// kernel: _core_impl.1
$region0: #{_core_impl.1}
  #allocation0 [shape = 'u32[]', space=smem, size = 0x4, offset = 0x4, fixed_abs, tag = 'smem constant byte address 0x4 - core index']
  #allocation1 [shape = 'u32[144,128]{1,0:T(1,128)}', space=vmem, size = 0x12000, scoped, tag = 'internal scratch']
  %s0 = inlined_call_operand.smem [shape: u32[36], index: -1, kind: input, shape index: {}]
  %s1 = sld [smem:[%s0]]
  %s2 = scalar_lea.smem %s0, 1
  %s3 = sld [smem:[%s2]]
  %s4 = scalar_lea.smem %s0, 2
  %s5 = sld [smem:[%s4]]
  %s6 = scalar_lea.smem %s0, 3
  %s7 = sld [smem:[%s6]]
  %s8 = scalar_lea.smem %s0, 4
  %s9 = sld [smem:[%s8]]
  %s10 = scalar_lea.smem %s0, 5
  %s11 = sld [smem:[%s10]]
  %s12 = scalar_lea.smem %s0, 6
  %s13 = sld [smem:[%s12]]
  %s14 = scalar_lea.smem %s0, 7
  %s15 = sld [smem:[%s14]]
  %s16 = scalar_lea.smem %s0, 8
  %s17 = sld [smem:[%s16]]
  %s18 = scalar_lea.smem %s0, 9
  %s19 = sld [smem:[%s18]]
  %s20 = scalar_lea.smem %s0, 10
  %s21 = sld [smem:[%s20]]
  %s22 = scalar_lea.smem %s0, 11
  %s23 = sld [smem:[%s22]]
  %s24 = scalar_lea.smem %s0, 12
  %s25 = sld [smem:[%s24]]
  %s26 = scalar_lea.smem %s0, 13
  %s27 = sld [smem:[%s26]]
  %s28 = scalar_lea.smem %s0, 14
  %s29 = sld [smem:[%s28]]
  %s30 = scalar_lea.smem %s0, 15
  %s31 = sld [smem:[%s30]]
  %s32 = scalar_lea.smem %s0, 16
  %s33 = sld [smem:[%s32]]
  %s34 = scalar_lea.smem %s0, 17
  %s35 = sld [smem:[%s34]]
  %s36 = scalar_lea.smem %s0, 18
  %s37 = sld [smem:[%s36]]
  %s38 = scalar_lea.smem %s0, 19
  %s39 = sld [smem:[%s38]]
  %s40 = scalar_lea.smem %s0, 20
  %s41 = sld [smem:[%s40]]
  %s42 = scalar_lea.smem %s0, 21
  %s43 = sld [smem:[%s42]]
  %s44 = scalar_lea.smem %s0, 22
  %s45 = sld [smem:[%s44]]
  %s46 = scalar_lea.smem %s0, 23
  %s47 = sld [smem:[%s46]]
  %s48 = scalar_lea.smem %s0, 24
  %s49 = sld [smem:[%s48]]
  %s50 = scalar_lea.smem %s0, 25
  %s51 = sld [smem:[%s50]]
  %s52 = scalar_lea.smem %s0, 26
  %s53 = sld [smem:[%s52]]
  %s54 = scalar_lea.smem %s0, 27
  %s55 = sld [smem:[%s54]]
  %s56 = scalar_lea.smem %s0, 28
  %s57 = sld [smem:[%s56]]
  %s58 = scalar_lea.smem %s0, 29
  %s59 = sld [smem:[%s58]]
  %s60 = scalar_lea.smem %s0, 30
  %s61 = sld [smem:[%s60]]
  %s62 = scalar_lea.smem %s0, 31
  %s63 = sld [smem:[%s62]]
  %s64 = scalar_lea.smem %s0, 32
  %s65 = sld [smem:[%s64]]
  %s66 = scalar_lea.smem %s0, 33
  %s67 = sld [smem:[%s66]]
  %s68 = scalar_lea.smem %s0, 34
  %s69 = sld [smem:[%s68]]
  %s70 = scalar_lea.smem %s0, 35
  %s71 = sld [smem:[%s70]]
  %72 = xla_tuple %s65, %s67, %s69, %s71
  %s73 = sld [smem:[#allocation0]]
  $region162: #{_core_impl.1} parent=0
    _
  %s75 = ssub.s32 1, %s73
  %s76 = scalar_select 0, %s75, %s73
  $region1: #{_core_impl.1} parent=0
    #allocation2 [shape = 'u8[16384]{0}', space=vmem, size = 0x4000, scoped, tag = 'output window, operand 1, single buffered']
    #allocation3 [shape = 's32[1]{0}', space=sflag, size = 0x4, scoped, tag = 'scoped memory for _core_impl.1']
    %77 = vsyncpa [#allocation3], 0
    // Predicated region
    $region2: #{_core_impl.1} parent=1 // pred_check
      _
    $region3: #{_core_impl.1} parent=1 // pred_check_branch
      %79 = sbr.rel (0) target = $region5
    $region4: #{_core_impl.1} parent=1 // pred_region
      _
    $region5: #{_core_impl.1} parent=1 // pred_fallthru
      _
    // Predicated region
    $region6: #{_core_impl.1} parent=1 // pred_check
      _
    $region7: #{_core_impl.1} parent=1 // pred_check_branch
      %81 = sbr.rel (0) target = $region9
    $region8: #{_core_impl.1} parent=1 // pred_region
      _
    $region9: #{_core_impl.1} parent=1 // pred_fallthru
      _
    // Predicated region
    $region10: #{_core_impl.1} parent=1 // pred_check
      _
    $region11: #{_core_impl.1} parent=1 // pred_check_branch
      %83 = sbr.rel (0) target = $region13
    $region12: #{_core_impl.1} parent=1 // pred_region
      _
    $region13: #{_core_impl.1} parent=1 // pred_fallthru
      _
    // Predicated region
    $region14: #{_core_impl.1} parent=1 // pred_check
      _
    $region15: #{_core_impl.1} parent=1 // pred_check_branch
      %85 = sbr.rel (0) target = $region17
    $region16: #{_core_impl.1} parent=1 // pred_region
      _
    $region17: #{_core_impl.1} parent=1 // pred_fallthru
      _
    // Predicated region
    $region18: #{_core_impl.1} parent=1 // pred_check
      _
    $region19: #{_core_impl.1} parent=1 // pred_check_branch
      %87 = sbr.rel (0) target = $region21
    $region20: #{_core_impl.1} parent=1 // pred_region
      _
    $region21: #{_core_impl.1} parent=1 // pred_fallthru
      _
    // Predicated region
    $region22: #{_core_impl.1} parent=1 // pred_check
      _
    $region23: #{_core_impl.1} parent=1 // pred_check_branch
      %89 = sbr.rel (0) target = $region25
    $region24: #{_core_impl.1} parent=1 // pred_region
      _
    $region25: #{_core_impl.1} parent=1 // pred_fallthru
      _
    // Predicated region
    $region26: #{_core_impl.1} parent=1 // pred_check
      _
    $region27: #{_core_impl.1} parent=1 // pred_check_branch
      %91 = sbr.rel (0) target = $region29
    $region28: #{_core_impl.1} parent=1 // pred_region
      _
    $region29: #{_core_impl.1} parent=1 // pred_fallthru
      _
    // Predicated region
    $region30: #{_core_impl.1} parent=1 // pred_check
      _
    $region31: #{_core_impl.1} parent=1 // pred_check_branch
      %93 = sbr.rel (0) target = $region33
    $region32: #{_core_impl.1} parent=1 // pred_region
      _
    $region33: #{_core_impl.1} parent=1 // pred_fallthru
      _
    // Predicated region
    $region34: #{_core_impl.1} parent=1 // pred_check
      _
    $region35: #{_core_impl.1} parent=1 // pred_check_branch
      %95 = sbr.rel (0) target = $region37
    $region36: #{_core_impl.1} parent=1 // pred_region
      _
    $region37: #{_core_impl.1} parent=1 // pred_fallthru
      _
    // Predicated region
    $region38: #{_core_impl.1} parent=1 // pred_check
      _
    $region39: #{_core_impl.1} parent=1 // pred_check_branch
      %97 = sbr.rel (0) target = $region41
    $region40: #{_core_impl.1} parent=1 // pred_region
      _
    $region41: #{_core_impl.1} parent=1 // pred_fallthru
      _
    // Predicated region
    $region42: #{_core_impl.1} parent=1 // pred_check
      _
    $region43: #{_core_impl.1} parent=1 // pred_check_branch
      %99 = sbr.rel (0) target = $region45
    $region44: #{_core_impl.1} parent=1 // pred_region
      _
    $region45: #{_core_impl.1} parent=1 // pred_fallthru
      _
    // Predicated region
    $region46: #{_core_impl.1} parent=1 // pred_check
      _
    $region47: #{_core_impl.1} parent=1 // pred_check_branch
      %101 = sbr.rel (0) target = $region49
    $region48: #{_core_impl.1} parent=1 // pred_region
      _
    $region49: #{_core_impl.1} parent=1 // pred_fallthru
      _
    // Predicated region
    $region50: #{_core_impl.1} parent=1 // pred_check
      _
    $region51: #{_core_impl.1} parent=1 // pred_check_branch
      %103 = sbr.rel (0) target = $region53
    $region52: #{_core_impl.1} parent=1 // pred_region
      _
    $region53: #{_core_impl.1} parent=1 // pred_fallthru
      _
    // Predicated region
    $region54: #{_core_impl.1} parent=1 // pred_check
      _
    $region55: #{_core_impl.1} parent=1 // pred_check_branch
      %105 = sbr.rel (0) target = $region57
    $region56: #{_core_impl.1} parent=1 // pred_region
      _
    $region57: #{_core_impl.1} parent=1 // pred_fallthru
      _
    // Predicated region
    $region58: #{_core_impl.1} parent=1 // pred_check
      _
    $region59: #{_core_impl.1} parent=1 // pred_check_branch
      %107 = sbr.rel (0) target = $region61
    $region60: #{_core_impl.1} parent=1 // pred_region
      _
    $region61: #{_core_impl.1} parent=1 // pred_fallthru
      _
    // Predicated region
    $region62: #{_core_impl.1} parent=1 // pred_check
      _
    $region63: #{_core_impl.1} parent=1 // pred_check_branch
      %109 = sbr.rel (0) target = $region65
    $region64: #{_core_impl.1} parent=1 // pred_region
      _
    $region65: #{_core_impl.1} parent=1 // pred_fallthru
      _
    // Predicated region
    $region66: #{_core_impl.1} parent=1 // pred_check
      _
    $region67: #{_core_impl.1} parent=1 // pred_check_branch
      %111 = sbr.rel (0) target = $region69
    $region68: #{_core_impl.1} parent=1 // pred_region
      _
    $region69: #{_core_impl.1} parent=1 // pred_fallthru
      _
    // Predicated region
    $region70: #{_core_impl.1} parent=1 // pred_check
      _
    $region71: #{_core_impl.1} parent=1 // pred_check_branch
      %113 = sbr.rel (0) target = $region73
    $region72: #{_core_impl.1} parent=1 // pred_region
      _
    $region73: #{_core_impl.1} parent=1 // pred_fallthru
      _
    // Predicated region
    $region74: #{_core_impl.1} parent=1 // pred_check
      _
    $region75: #{_core_impl.1} parent=1 // pred_check_branch
      %115 = sbr.rel (0) target = $region77
    $region76: #{_core_impl.1} parent=1 // pred_region
      _
    $region77: #{_core_impl.1} parent=1 // pred_fallthru
      _
    // Predicated region
    $region78: #{_core_impl.1} parent=1 // pred_check
      _
    $region79: #{_core_impl.1} parent=1 // pred_check_branch
      %117 = sbr.rel (0) target = $region81
    $region80: #{_core_impl.1} parent=1 // pred_region
      _
    $region81: #{_core_impl.1} parent=1 // pred_fallthru
      _
    // Predicated region
    $region82: #{_core_impl.1} parent=1 // pred_check
      _
    $region83: #{_core_impl.1} parent=1 // pred_check_branch
      %119 = sbr.rel (0) target = $region85
    $region84: #{_core_impl.1} parent=1 // pred_region
      _
    $region85: #{_core_impl.1} parent=1 // pred_fallthru
      _
    // Predicated region
    $region86: #{_core_impl.1} parent=1 // pred_check
      _
    $region87: #{_core_impl.1} parent=1 // pred_check_branch
      %121 = sbr.rel (0) target = $region89
    $region88: #{_core_impl.1} parent=1 // pred_region
      _
    $region89: #{_core_impl.1} parent=1 // pred_fallthru
      _
    // Predicated region
    $region90: #{_core_impl.1} parent=1 // pred_check
      _
    $region91: #{_core_impl.1} parent=1 // pred_check_branch
      %123 = sbr.rel (0) target = $region93
    $region92: #{_core_impl.1} parent=1 // pred_region
      _
    $region93: #{_core_impl.1} parent=1 // pred_fallthru
      _
    // Predicated region
    $region94: #{_core_impl.1} parent=1 // pred_check
      _
    $region95: #{_core_impl.1} parent=1 // pred_check_branch
      %125 = sbr.rel (0) target = $region97
    $region96: #{_core_impl.1} parent=1 // pred_region
      _
    $region97: #{_core_impl.1} parent=1 // pred_fallthru
      _
    // Predicated region
    $region98: #{_core_impl.1} parent=1 // pred_check
      _
    $region99: #{_core_impl.1} parent=1 // pred_check_branch
      %127 = sbr.rel (0) target = $region101
    $region100: #{_core_impl.1} parent=1 // pred_region
      _
    $region101: #{_core_impl.1} parent=1 // pred_fallthru
      _
    // Predicated region
    $region102: #{_core_impl.1} parent=1 // pred_check
      _
    $region103: #{_core_impl.1} parent=1 // pred_check_branch
      %129 = sbr.rel (0) target = $region105
    $region104: #{_core_impl.1} parent=1 // pred_region
      _
    $region105: #{_core_impl.1} parent=1 // pred_fallthru
      _
    // Predicated region
    $region106: #{_core_impl.1} parent=1 // pred_check
      _
    $region107: #{_core_impl.1} parent=1 // pred_check_branch
      %131 = sbr.rel (0) target = $region109
    $region108: #{_core_impl.1} parent=1 // pred_region
      _
    $region109: #{_core_impl.1} parent=1 // pred_fallthru
      _
    // Predicated region
    $region110: #{_core_impl.1} parent=1 // pred_check
      _
    $region111: #{_core_impl.1} parent=1 // pred_check_branch
      %133 = sbr.rel (0) target = $region113
    $region112: #{_core_impl.1} parent=1 // pred_region
      _
    $region113: #{_core_impl.1} parent=1 // pred_fallthru
      _
    // Predicated region
    $region114: #{_core_impl.1} parent=1 // pred_check
      _
    $region115: #{_core_impl.1} parent=1 // pred_check_branch
      %135 = sbr.rel (0) target = $region117
    $region116: #{_core_impl.1} parent=1 // pred_region
      _
    $region117: #{_core_impl.1} parent=1 // pred_fallthru
      _
    // Predicated region
    $region118: #{_core_impl.1} parent=1 // pred_check
      _
    $region119: #{_core_impl.1} parent=1 // pred_check_branch
      %137 = sbr.rel (0) target = $region121
    $region120: #{_core_impl.1} parent=1 // pred_region
      _
    $region121: #{_core_impl.1} parent=1 // pred_fallthru
      _
    // Predicated region
    $region122: #{_core_impl.1} parent=1 // pred_check
      _
    $region123: #{_core_impl.1} parent=1 // pred_check_branch
      %139 = sbr.rel (0) target = $region125
    $region124: #{_core_impl.1} parent=1 // pred_region
      _
    $region125: #{_core_impl.1} parent=1 // pred_fallthru
      _
    // Predicated region
    $region126: #{_core_impl.1} parent=1 // pred_check
      _
    $region127: #{_core_impl.1} parent=1 // pred_check_branch
      %141 = sbr.rel (0) target = $region129
    $region128: #{_core_impl.1} parent=1 // pred_region
      _
    $region129: #{_core_impl.1} parent=1 // pred_fallthru
      _
    %v143 = vld [vmem:[%s1] sm:$0xff]
    %v144 = vld [vmem:[%s1 + $0x8] sm:$0xff]
    %v145 = vld [vmem:[%s1 + $0x10] sm:$0xff]
    %v146 = vld [vmem:[%s1 + $0x18] sm:$0xff]
    %v147 = vld [vmem:[%s1 + $0x20] sm:$0xff]
    %v148 = vld [vmem:[%s1 + $0x28] sm:$0xff]
    %v149 = vld [vmem:[%s1 + $0x30] sm:$0xff]
    %v150 = vld [vmem:[%s1 + $0x38] sm:$0xff]
    %v151 = vld [vmem:[%s3] sm:$0xf]
    %v152 = vld [vmem:[%s3 + $0x4] sm:$0xf]
    %v153 = vld [vmem:[%s5] sm:$0xf]
    %v154 = vld [vmem:[%s5 + $0x4] sm:$0xf]
    %v155 = vld [vmem:[%s7] sm:$0x1]
    %v156 = vpack.c.bf16 %v144, %v143
    %v157 = vpack.c.bf16 %v146, %v145
    %v158 = vpack.c.bf16 %v148, %v147
    %v159 = vpack.c.bf16 %v150, %v149
    %v161 = vlaneseq
    %v162 = vshrl.u32 %v161, 7
    %v163 = vsub.s32 0, %v162
    %v164 = vrot.slane %v155, %v163
    %v168 = vunpack.c.l.b16 %v151
    %v169 = vunpack.c.l.b16 %v152
    %v170 = vpack.c.b16 %v169, %v168
    %vm172 = vcmask 130048
    %v174 = vsel %vm172, %v156, 0
    %v177 = vsel %vm172, %v157, 0
    %v180 = vsel %vm172, %v158, 0
    %v183 = vsel %vm172, %v159, 0
    %185 = vmatprep.subr.bf16.mxu0 0
    %186 = vmatpush1.bf16.msra.mxu0 %v170
    %187 = vmatprep.subr.bf16.mxu0 0
    %188 = vmatpush1.bf16.msra.mxu0 0
    %189 = vmatprep.subr.bf16.mxu0 0
    %190 = vmatpush1.bf16.msra.mxu0 0
    %191 = vmatprep.subr.bf16.mxu0 0
    %192 = vmatpush1.bf16.msra.mxu0 0
    %193 = vmatprep.subr.bf16.mxu0 0
    %194 = vmatpush1.bf16.msra.mxu0 0
    %195 = vmatprep.subr.bf16.mxu0 0
    %196 = vmatpush1.bf16.msra.mxu0 0
    %197 = vmatprep.subr.bf16.mxu0 0
    %198 = vmatpush1.bf16.msra.mxu0 0
    %199 = vmatprep.subr.bf16.mxu0 0
    %200 = vmatpush1.bf16.msra.mxu0 0
    %201 = vmatprep.subr.bf16.mxu0 0
    %202 = vmatpush1.bf16.msra.mxu0 0
    %203 = vmatprep.subr.bf16.mxu0 0
    %204 = vmatpush1.bf16.msra.mxu0 0
    %205 = vmatprep.subr.bf16.mxu0 0
    %206 = vmatpush1.bf16.msra.mxu0 0
    %207 = vmatprep.subr.bf16.mxu0 0
    %208 = vmatpush1.bf16.msra.mxu0 0
    %209 = vmatprep.subr.bf16.mxu0 0
    %210 = vmatpush1.bf16.msra.mxu0 0
    %211 = vmatprep.subr.bf16.mxu0 0
    %212 = vmatpush1.bf16.msra.mxu0 0
    %213 = vmatprep.subr.bf16.mxu0 0
    %214 = vmatpush1.bf16.msra.mxu0 0
    %215 = vmatprep.subr.bf16.mxu0 0
    %216 = vmatpush1.bf16.msra.mxu0 0
    %217 = vmatprep.mubr.bf16.mxu0 0
    %218 = vmatmul.mubr.bf16.gmra.mrb[0].mxu0 %v174
    %v219 = vpop.f32.mrb[0].mxu0
    %v220 = vadd.f32 %v164, %v219
    %v221 = vpop.f32.mrb[0].mxu0
    %v222 = vpop.f32.mrb[0].mxu0
    %v223 = vadd.f32 %v164, %v222
    %v224 = vpop.f32.mrb[0].mxu0
    %225 = vmatprep.mubr.bf16.mxu0 0
    %226 = vmatmul.mubr.bf16.gmra.mrb[0].mxu0 %v177
    %v227 = vpop.f32.mrb[0].mxu0
    %v228 = vadd.f32 %v164, %v227
    %v229 = vpop.f32.mrb[0].mxu0
    %v230 = vpop.f32.mrb[0].mxu0
    %v231 = vadd.f32 %v164, %v230
    %v232 = vpop.f32.mrb[0].mxu0
    %233 = vmatprep.mubr.bf16.mxu0 0
    %234 = vmatmul.mubr.bf16.gmra.mrb[0].mxu0 %v180
    %v235 = vpop.f32.mrb[0].mxu0
    %v236 = vadd.f32 %v164, %v235
    %v237 = vpop.f32.mrb[0].mxu0
    %v238 = vpop.f32.mrb[0].mxu0
    %v239 = vadd.f32 %v164, %v238
    %v240 = vpop.f32.mrb[0].mxu0
    %241 = vmatprep.mubr.bf16.mxu0 0
    %242 = vmatmul.mubr.bf16.gmra.mrb[0].mxu0 %v183
    %v243 = vpop.f32.mrb[0].mxu0
    %v244 = vadd.f32 %v164, %v243
    %v245 = vpop.f32.mrb[0].mxu0
    %v246 = vpop.f32.mrb[0].mxu0
    %v247 = vadd.f32 %v164, %v246
    %v248 = vpop.f32.mrb[0].mxu0
    %249 = vdwg.mxu0
    %v250 = vmax.f32 %v220, 0.0
    %v251 = vmax.f32 %v223, 0.0
    %v252 = vmax.f32 %v228, 0.0
    %v253 = vmax.f32 %v231, 0.0
    %v254 = vmax.f32 %v236, 0.0
    %v255 = vmax.f32 %v239, 0.0
    %v256 = vmax.f32 %v244, 0.0
    %v257 = vmax.f32 %v247, 0.0
    %v260 = vunpack.c.l.b16 %v153
    %v261 = vunpack.c.l.b16 %v154
    %v262 = vpack.c.b16 %v261, %v260
    %264 = vmatprep.subr.bf16.mxu0 0
    %265 = vmatpush1.bf16.msra.mxu0 %v262
    %266 = vmatprep.subr.bf16.mxu0 0
    %267 = vmatpush1.bf16.msra.mxu0 0
    %268 = vmatprep.subr.bf16.mxu0 0
    %269 = vmatpush1.bf16.msra.mxu0 0
    %270 = vmatprep.subr.bf16.mxu0 0
    %271 = vmatpush1.bf16.msra.mxu0 0
    %272 = vmatprep.subr.bf16.mxu0 0
    %273 = vmatpush1.bf16.msra.mxu0 0
    %274 = vmatprep.subr.bf16.mxu0 0
    %275 = vmatpush1.bf16.msra.mxu0 0
    %276 = vmatprep.subr.bf16.mxu0 0
    %277 = vmatpush1.bf16.msra.mxu0 0
    %278 = vmatprep.subr.bf16.mxu0 0
    %279 = vmatpush1.bf16.msra.mxu0 0
    %280 = vmatprep.subr.bf16.mxu0 0
    %281 = vmatpush1.bf16.msra.mxu0 0
    %282 = vmatprep.subr.bf16.mxu0 0
    %283 = vmatpush1.bf16.msra.mxu0 0
    %284 = vmatprep.subr.bf16.mxu0 0
    %285 = vmatpush1.bf16.msra.mxu0 0
    %286 = vmatprep.subr.bf16.mxu0 0
    %287 = vmatpush1.bf16.msra.mxu0 0
    %288 = vmatprep.subr.bf16.mxu0 0
    %289 = vmatpush1.bf16.msra.mxu0 0
    %290 = vmatprep.subr.bf16.mxu0 0
    %291 = vmatpush1.bf16.msra.mxu0 0
    %292 = vmatprep.subr.bf16.mxu0 0
    %293 = vmatpush1.bf16.msra.mxu0 0
    %294 = vmatprep.subr.bf16.mxu0 0
    %295 = vmatpush1.bf16.msra.mxu0 0
    %296 = vmatprep.mubr.bf16.mxu0 0
    %297 = vmatmul.mubr.bf16.gmra.mrb[0].mxu0 %v174
    %v298 = vpop.f32.mrb[0].mxu0
    %v299 = vadd.f32 %v164, %v298
    %v300 = vpop.f32.mrb[0].mxu0
    %v301 = vpop.f32.mrb[0].mxu0
    %v302 = vadd.f32 %v164, %v301
    %v303 = vpop.f32.mrb[0].mxu0
    %304 = vmatprep.mubr.bf16.mxu0 0
    %305 = vmatmul.mubr.bf16.gmra.mrb[0].mxu0 %v177
    %v306 = vpop.f32.mrb[0].mxu0
    %v307 = vadd.f32 %v164, %v306
    %v308 = vpop.f32.mrb[0].mxu0
    %v309 = vpop.f32.mrb[0].mxu0
    %v310 = vadd.f32 %v164, %v309
    %v311 = vpop.f32.mrb[0].mxu0
    %312 = vmatprep.mubr.bf16.mxu0 0
    %313 = vmatmul.mubr.bf16.gmra.mrb[0].mxu0 %v180
    %v314 = vpop.f32.mrb[0].mxu0
    %v315 = vadd.f32 %v164, %v314
    %v316 = vpop.f32.mrb[0].mxu0
    %v317 = vpop.f32.mrb[0].mxu0
    %v318 = vadd.f32 %v164, %v317
    %v319 = vpop.f32.mrb[0].mxu0
    %320 = vmatprep.mubr.bf16.mxu0 0
    %321 = vmatmul.mubr.bf16.gmra.mrb[0].mxu0 %v183
    %v322 = vpop.f32.mrb[0].mxu0
    %v323 = vadd.f32 %v164, %v322
    %v324 = vpop.f32.mrb[0].mxu0
    %v325 = vpop.f32.mrb[0].mxu0
    %v326 = vadd.f32 %v164, %v325
    %v327 = vpop.f32.mrb[0].mxu0
    %328 = vdwg.mxu0
    %v329 = vmax.f32 %v299, 0.0
    %v330 = vmax.f32 %v302, 0.0
    %v331 = vmax.f32 %v307, 0.0
    %v332 = vmax.f32 %v310, 0.0
    %v333 = vmax.f32 %v315, 0.0
    %v334 = vmax.f32 %v318, 0.0
    %v335 = vmax.f32 %v323, 0.0
    %v336 = vmax.f32 %v326, 0.0
    %v337 = vld [vmem:[%s9] sm:$0xf]
    %v338 = vld [vmem:[%s9 + $0x4] sm:$0xf]
    %v339 = vld [vmem:[%s9 + $0x8] sm:$0xf]
    %v340 = vld [vmem:[%s9 + $0xc] sm:$0xf]
    %v341 = vld [vmem:[%s11] sm:$0x1]
    %v342 = vpack.c.bf16 %v251, %v250
    %v343 = vpack.c.bf16 %v253, %v252
    %v344 = vpack.c.bf16 %v255, %v254
    %v345 = vpack.c.bf16 %v257, %v256
    %v347 = vlaneseq
    %v348 = vshrl.u32 %v347, 7
    %v349 = vsub.s32 0, %v348
    %v350 = vrot.slane %v341, %v349
    %v356 = vunpack.c.l.b16 %v337
    %v357 = vunpack.c.l.b16 %v338
    %v358 = vunpack.c.l.b16 %v339
    %v359 = vunpack.c.l.b16 %v340
    %v360 = vpack.c.b16 %v357, %v356
    %v361 = vpack.c.b16 %v359, %v358
    %vm364 = vcmask 261120
    %v366 = vsel %vm364, %v342, 0
    %v369 = vsel %vm364, %v343, 0
    %v372 = vsel %vm364, %v344, 0
    %v375 = vsel %vm364, %v345, 0
    %377 = vmatprep.subr.bf16.mxu0 0
    %378 = vmatpush1.bf16.msra.mxu0 %v360
    %379 = vmatprep.subr.bf16.mxu0 0
    %380 = vmatpush1.bf16.msra.mxu0 %v361
    %381 = vmatprep.subr.bf16.mxu0 0
    %382 = vmatpush1.bf16.msra.mxu0 0
    %383 = vmatprep.subr.bf16.mxu0 0
    %384 = vmatpush1.bf16.msra.mxu0 0
    %385 = vmatprep.subr.bf16.mxu0 0
    %386 = vmatpush1.bf16.msra.mxu0 0
    %387 = vmatprep.subr.bf16.mxu0 0
    %388 = vmatpush1.bf16.msra.mxu0 0
    %389 = vmatprep.subr.bf16.mxu0 0
    %390 = vmatpush1.bf16.msra.mxu0 0
    %391 = vmatprep.subr.bf16.mxu0 0
    %392 = vmatpush1.bf16.msra.mxu0 0
    %393 = vmatprep.subr.bf16.mxu0 0
    %394 = vmatpush1.bf16.msra.mxu0 0
    %395 = vmatprep.subr.bf16.mxu0 0
    %396 = vmatpush1.bf16.msra.mxu0 0
    %397 = vmatprep.subr.bf16.mxu0 0
    %398 = vmatpush1.bf16.msra.mxu0 0
    %399 = vmatprep.subr.bf16.mxu0 0
    %400 = vmatpush1.bf16.msra.mxu0 0
    %401 = vmatprep.subr.bf16.mxu0 0
    %402 = vmatpush1.bf16.msra.mxu0 0
    %403 = vmatprep.subr.bf16.mxu0 0
    %404 = vmatpush1.bf16.msra.mxu0 0
    %405 = vmatprep.subr.bf16.mxu0 0
    %406 = vmatpush1.bf16.msra.mxu0 0
    %407 = vmatprep.subr.bf16.mxu0 0
    %408 = vmatpush1.bf16.msra.mxu0 0
    %409 = vmatprep.mubr.bf16.mxu0 0
    %410 = vmatmul.mubr.bf16.gmra.mrb[0].mxu0 %v366
    %v411 = vpop.f32.mrb[0].mxu0
    %v412 = vadd.f32 %v350, %v411
    %v413 = vpop.f32.mrb[0].mxu0
    %v414 = vpop.f32.mrb[0].mxu0
    %v415 = vadd.f32 %v350, %v414
    %v416 = vpop.f32.mrb[0].mxu0
    %417 = vmatprep.mubr.bf16.mxu0 0
    %418 = vmatmul.mubr.bf16.gmra.mrb[0].mxu0 %v369
    %v419 = vpop.f32.mrb[0].mxu0
    %v420 = vadd.f32 %v350, %v419
    %v421 = vpop.f32.mrb[0].mxu0
    %v422 = vpop.f32.mrb[0].mxu0
    %v423 = vadd.f32 %v350, %v422
    %v424 = vpop.f32.mrb[0].mxu0
    %425 = vmatprep.mubr.bf16.mxu0 0
    %426 = vmatmul.mubr.bf16.gmra.mrb[0].mxu0 %v372
    %v427 = vpop.f32.mrb[0].mxu0
    %v428 = vadd.f32 %v350, %v427
    %v429 = vpop.f32.mrb[0].mxu0
    %v430 = vpop.f32.mrb[0].mxu0
    %v431 = vadd.f32 %v350, %v430
    %v432 = vpop.f32.mrb[0].mxu0
    %433 = vmatprep.mubr.bf16.mxu0 0
    %434 = vmatmul.mubr.bf16.gmra.mrb[0].mxu0 %v375
    %v435 = vpop.f32.mrb[0].mxu0
    %v436 = vadd.f32 %v350, %v435
    %v437 = vpop.f32.mrb[0].mxu0
    %v438 = vpop.f32.mrb[0].mxu0
    %v439 = vadd.f32 %v350, %v438
    %v440 = vpop.f32.mrb[0].mxu0
    %441 = vdwg.mxu0
    %v442 = vmax.f32 %v412, 0.0
    %v443 = vmax.f32 %v415, 0.0
    %v444 = vmax.f32 %v420, 0.0
    %v445 = vmax.f32 %v423, 0.0
    %v446 = vmax.f32 %v428, 0.0
    %v447 = vmax.f32 %v431, 0.0
    %v448 = vmax.f32 %v436, 0.0
    %v449 = vmax.f32 %v439, 0.0
    %v450 = vpack.c.bf16 %v330, %v329
    %v451 = vpack.c.bf16 %v332, %v331
    %v452 = vpack.c.bf16 %v334, %v333
    %v453 = vpack.c.bf16 %v336, %v335
    %v455 = vsel %vm364, %v450, 0
    %v458 = vsel %vm364, %v451, 0
    %v461 = vsel %vm364, %v452, 0
    %v464 = vsel %vm364, %v453, 0
    %466 = vmatprep.subr.bf16.mxu0 0
    %467 = vmatpush1.bf16.msra.mxu0 %v360
    %468 = vmatprep.subr.bf16.mxu0 0
    %469 = vmatpush1.bf16.msra.mxu0 %v361
    %470 = vmatprep.subr.bf16.mxu0 0
    %471 = vmatpush1.bf16.msra.mxu0 0
    %472 = vmatprep.subr.bf16.mxu0 0
    %473 = vmatpush1.bf16.msra.mxu0 0
    %474 = vmatprep.subr.bf16.mxu0 0
    %475 = vmatpush1.bf16.msra.mxu0 0
    %476 = vmatprep.subr.bf16.mxu0 0
    %477 = vmatpush1.bf16.msra.mxu0 0
    %478 = vmatprep.subr.bf16.mxu0 0
    %479 = vmatpush1.bf16.msra.mxu0 0
    %480 = vmatprep.subr.bf16.mxu0 0
    %481 = vmatpush1.bf16.msra.mxu0 0
    %482 = vmatprep.subr.bf16.mxu0 0
    %483 = vmatpush1.bf16.msra.mxu0 0
    %484 = vmatprep.subr.bf16.mxu0 0
    %485 = vmatpush1.bf16.msra.mxu0 0
    %486 = vmatprep.subr.bf16.mxu0 0
    %487 = vmatpush1.bf16.msra.mxu0 0
    %488 = vmatprep.subr.bf16.mxu0 0
    %489 = vmatpush1.bf16.msra.mxu0 0
    %490 = vmatprep.subr.bf16.mxu0 0
    %491 = vmatpush1.bf16.msra.mxu0 0
    %492 = vmatprep.subr.bf16.mxu0 0
    %493 = vmatpush1.bf16.msra.mxu0 0
    %494 = vmatprep.subr.bf16.mxu0 0
    %495 = vmatpush1.bf16.msra.mxu0 0
    %496 = vmatprep.subr.bf16.mxu0 0
    %497 = vmatpush1.bf16.msra.mxu0 0
    %498 = vmatprep.mubr.bf16.mxu0 0
    %499 = vmatmul.mubr.bf16.gmra.mrb[0].mxu0 %v455
    %v500 = vpop.f32.mrb[0].mxu0
    %v501 = vadd.f32 %v350, %v500
    %v502 = vpop.f32.mrb[0].mxu0
    %v503 = vpop.f32.mrb[0].mxu0
    %v504 = vadd.f32 %v350, %v503
    %v505 = vpop.f32.mrb[0].mxu0
    %506 = vmatprep.mubr.bf16.mxu0 0
    %507 = vmatmul.mubr.bf16.gmra.mrb[0].mxu0 %v458
    %v508 = vpop.f32.mrb[0].mxu0
    %v509 = vadd.f32 %v350, %v508
    %v510 = vpop.f32.mrb[0].mxu0
    %v511 = vpop.f32.mrb[0].mxu0
    %v512 = vadd.f32 %v350, %v511
    %v513 = vpop.f32.mrb[0].mxu0
    %514 = vmatprep.mubr.bf16.mxu0 0
    %515 = vmatmul.mubr.bf16.gmra.mrb[0].mxu0 %v461
    %v516 = vpop.f32.mrb[0].mxu0
    %v517 = vadd.f32 %v350, %v516
    %v518 = vpop.f32.mrb[0].mxu0
    %v519 = vpop.f32.mrb[0].mxu0
    %v520 = vadd.f32 %v350, %v519
    %v521 = vpop.f32.mrb[0].mxu0
    %522 = vmatprep.mubr.bf16.mxu0 0
    %523 = vmatmul.mubr.bf16.gmra.mrb[0].mxu0 %v464
    %v524 = vpop.f32.mrb[0].mxu0
    %v525 = vadd.f32 %v350, %v524
    %v526 = vpop.f32.mrb[0].mxu0
    %v527 = vpop.f32.mrb[0].mxu0
    %v528 = vadd.f32 %v350, %v527
    %v529 = vpop.f32.mrb[0].mxu0
    %530 = vdwg.mxu0
    %v531 = vmax.f32 %v501, 0.0
    %v532 = vmax.f32 %v504, 0.0
    %v533 = vmax.f32 %v509, 0.0
    %v534 = vmax.f32 %v512, 0.0
    %v535 = vmax.f32 %v517, 0.0
    %v536 = vmax.f32 %v520, 0.0
    %v537 = vmax.f32 %v525, 0.0
    %v538 = vmax.f32 %v528, 0.0
    %547 = vrot.lane.b32.xlu0 %v531, 32
    %v548 = vpop.permute.xlu0 %547
    %549 = vrot.lane.b32.xlu0 %v532, 32
    %v550 = vpop.permute.xlu0 %549
    %551 = vrot.lane.b32.xlu0 %v533, 32
    %v552 = vpop.permute.xlu0 %551
    %553 = vrot.lane.b32.xlu0 %v534, 32
    %v554 = vpop.permute.xlu0 %553
    %555 = vrot.lane.b32.xlu0 %v535, 32
    %v556 = vpop.permute.xlu0 %555
    %557 = vrot.lane.b32.xlu0 %v536, 32
    %v558 = vpop.permute.xlu0 %557
    %559 = vrot.lane.b32.xlu0 %v537, 32
    %v560 = vpop.permute.xlu0 %559
    %561 = vrot.lane.b32.xlu0 %v538, 32
    %v562 = vpop.permute.xlu0 %561
    %v571 = vsel %vm364, %v442, %v548
    %v572 = vsel %vm364, %v443, %v550
    %v573 = vsel %vm364, %v444, %v552
    %v574 = vsel %vm364, %v445, %v554
    %v575 = vsel %vm364, %v446, %v556
    %v576 = vsel %vm364, %v447, %v558
    %v577 = vsel %vm364, %v448, %v560
    %v578 = vsel %vm364, %v449, %v562
    %v579 = vpack.c.bf16 %v572, %v571
    %v580 = vpack.c.bf16 %v574, %v573
    %v581 = vpack.c.bf16 %v576, %v575
    %v582 = vpack.c.bf16 %v578, %v577
    %v587 = vunpack.c.l.b16 %v579
    %v588 = vunpack.c.h.b16 %v579
    %v589 = vunpack.c.l.b16 %v580
    %v590 = vunpack.c.h.b16 %v580
    %v591 = vunpack.c.l.b16 %v581
    %v592 = vunpack.c.h.b16 %v581
    %v593 = vunpack.c.l.b16 %v582
    %v594 = vunpack.c.h.b16 %v582
    %v595 = vpack.c.b16 %v587, %v587
    %v596 = vpack.c.b16 %v588, %v588
    %v597 = vpack.c.b16 %v589, %v589
    %v598 = vpack.c.b16 %v590, %v590
    %v599 = vpack.c.b16 %v591, %v591
    %v600 = vpack.c.b16 %v592, %v592
    %v601 = vpack.c.b16 %v593, %v593
    %v602 = vpack.c.b16 %v594, %v594
    %vm611 = vcmask 519168
    %612 = vst.msk [vmem:[%s65] sm:$0xf] %vm611, %v595
    %613 = vst.msk [vmem:[%s65 + $0x4] sm:$0xf] %vm611, %v596
    %614 = vst.msk [vmem:[%s65 + $0x8] sm:$0xf] %vm611, %v597
    %615 = vst.msk [vmem:[%s65 + $0xc] sm:$0xf] %vm611, %v598
    %616 = vst.msk [vmem:[%s65 + $0x10] sm:$0xf] %vm611, %v599
    %617 = vst.msk [vmem:[%s65 + $0x14] sm:$0xf] %vm611, %v600
    %618 = vst.msk [vmem:[%s65 + $0x18] sm:$0xf] %vm611, %v601
    %619 = vst.msk [vmem:[%s65 + $0x1c] sm:$0xf] %vm611, %v602
    %v620 = vld [vmem:[%s13] sm:$0xf]
    %v621 = vld [vmem:[%s13 + $0x4] sm:$0xf]
    %v622 = vld [vmem:[%s13 + $0x8] sm:$0xf]
    %v623 = vld [vmem:[%s13 + $0xc] sm:$0xf]
    %v624 = vld [vmem:[%s15] sm:$0x1]
    %v625 = vpack.c.bf16 %v443, %v442
    %v626 = vpack.c.bf16 %v445, %v444
    %v627 = vpack.c.bf16 %v447, %v446
    %v628 = vpack.c.bf16 %v449, %v448
    %v630 = vlaneseq
    %v631 = vshrl.u32 %v630, 7
    %v632 = vsub.s32 0, %v631
    %v633 = vrot.slane %v624, %v632
    %v639 = vunpack.c.l.b16 %v620
    %v640 = vunpack.c.l.b16 %v621
    %v641 = vunpack.c.l.b16 %v622
    %v642 = vunpack.c.l.b16 %v623
    %v643 = vpack.c.b16 %v640, %v639
    %v644 = vpack.c.b16 %v642, %v641
    %v648 = vsel %vm364, %v625, 0
    %v651 = vsel %vm364, %v626, 0
    %v654 = vsel %vm364, %v627, 0
    %v657 = vsel %vm364, %v628, 0
    %659 = vmatprep.subr.bf16.mxu0 0
    %660 = vmatpush1.bf16.msra.mxu0 %v643
    %661 = vmatprep.subr.bf16.mxu0 0
    %662 = vmatpush1.bf16.msra.mxu0 %v644
    %663 = vmatprep.subr.bf16.mxu0 0
    %664 = vmatpush1.bf16.msra.mxu0 0
    %665 = vmatprep.subr.bf16.mxu0 0
    %666 = vmatpush1.bf16.msra.mxu0 0
    %667 = vmatprep.subr.bf16.mxu0 0
    %668 = vmatpush1.bf16.msra.mxu0 0
    %669 = vmatprep.subr.bf16.mxu0 0
    %670 = vmatpush1.bf16.msra.mxu0 0
    %671 = vmatprep.subr.bf16.mxu0 0
    %672 = vmatpush1.bf16.msra.mxu0 0
    %673 = vmatprep.subr.bf16.mxu0 0
    %674 = vmatpush1.bf16.msra.mxu0 0
    %675 = vmatprep.subr.bf16.mxu0 0
    %676 = vmatpush1.bf16.msra.mxu0 0
    %677 = vmatprep.subr.bf16.mxu0 0
    %678 = vmatpush1.bf16.msra.mxu0 0
    %679 = vmatprep.subr.bf16.mxu0 0
    %680 = vmatpush1.bf16.msra.mxu0 0
    %681 = vmatprep.subr.bf16.mxu0 0
    %682 = vmatpush1.bf16.msra.mxu0 0
    %683 = vmatprep.subr.bf16.mxu0 0
    %684 = vmatpush1.bf16.msra.mxu0 0
    %685 = vmatprep.subr.bf16.mxu0 0
    %686 = vmatpush1.bf16.msra.mxu0 0
    %687 = vmatprep.subr.bf16.mxu0 0
    %688 = vmatpush1.bf16.msra.mxu0 0
    %689 = vmatprep.subr.bf16.mxu0 0
    %690 = vmatpush1.bf16.msra.mxu0 0
    %691 = vmatprep.mubr.bf16.mxu0 0
    %692 = vmatmul.mubr.bf16.gmra.mrb[0].mxu0 %v648
    %v693 = vpop.f32.mrb[0].mxu0
    %v694 = vadd.f32 %v633, %v693
    %v695 = vpop.f32.mrb[0].mxu0
    %v696 = vpop.f32.mrb[0].mxu0
    %v697 = vadd.f32 %v633, %v696
    %v698 = vpop.f32.mrb[0].mxu0
    %699 = vmatprep.mubr.bf16.mxu0 0
    %700 = vmatmul.mubr.bf16.gmra.mrb[0].mxu0 %v651
    %v701 = vpop.f32.mrb[0].mxu0
    %v702 = vadd.f32 %v633, %v701
    %v703 = vpop.f32.mrb[0].mxu0
    %v704 = vpop.f32.mrb[0].mxu0
    %v705 = vadd.f32 %v633, %v704
    %v706 = vpop.f32.mrb[0].mxu0
    %707 = vmatprep.mubr.bf16.mxu0 0
    %708 = vmatmul.mubr.bf16.gmra.mrb[0].mxu0 %v654
    %v709 = vpop.f32.mrb[0].mxu0
    %v710 = vadd.f32 %v633, %v709
    %v711 = vpop.f32.mrb[0].mxu0
    %v712 = vpop.f32.mrb[0].mxu0
    %v713 = vadd.f32 %v633, %v712
    %v714 = vpop.f32.mrb[0].mxu0
    %715 = vmatprep.mubr.bf16.mxu0 0
    %716 = vmatmul.mubr.bf16.gmra.mrb[0].mxu0 %v657
    %v717 = vpop.f32.mrb[0].mxu0
    %v718 = vadd.f32 %v633, %v717
    %v719 = vpop.f32.mrb[0].mxu0
    %v720 = vpop.f32.mrb[0].mxu0
    %v721 = vadd.f32 %v633, %v720
    %v722 = vpop.f32.mrb[0].mxu0
    %723 = vdwg.mxu0
    %v724 = vmax.f32 %v694, 0.0
    %v725 = vmax.f32 %v697, 0.0
    %v726 = vmax.f32 %v702, 0.0
    %v727 = vmax.f32 %v705, 0.0
    %v728 = vmax.f32 %v710, 0.0
    %v729 = vmax.f32 %v713, 0.0
    %v730 = vmax.f32 %v718, 0.0
    %v731 = vmax.f32 %v721, 0.0
    %v732 = vld [vmem:[%s17] sm:$0xf]
    %v733 = vld [vmem:[%s17 + $0x4] sm:$0xf]
    %v734 = vld [vmem:[%s17 + $0x8] sm:$0xf]
    %v735 = vld [vmem:[%s17 + $0xc] sm:$0xf]
    %v736 = vld [vmem:[%s17 + $0x10] sm:$0xf]
    %v737 = vld [vmem:[%s17 + $0x14] sm:$0xf]
    %v738 = vld [vmem:[%s17 + $0x18] sm:$0xf]
    %v739 = vld [vmem:[%s17 + $0x1c] sm:$0xf]
    %v740 = vld [vmem:[%s19] sm:$0x1]
    %v741 = vpack.c.bf16 %v725, %v724
    %v742 = vpack.c.bf16 %v727, %v726
    %v743 = vpack.c.bf16 %v729, %v728
    %v744 = vpack.c.bf16 %v731, %v730
    %v746 = vlaneseq
    %v747 = vshrl.u32 %v746, 7
    %v748 = vsub.s32 0, %v747
    %v749 = vrot.slane %v740, %v748
    %v759 = vunpack.c.l.b16 %v732
    %v760 = vunpack.c.l.b16 %v733
    %v761 = vunpack.c.l.b16 %v734
    %v762 = vunpack.c.l.b16 %v735
    %v763 = vunpack.c.l.b16 %v736
    %v764 = vunpack.c.l.b16 %v737
    %v765 = vunpack.c.l.b16 %v738
    %v766 = vunpack.c.l.b16 %v739
    %v767 = vpack.c.b16 %v760, %v759
    %v768 = vpack.c.b16 %v762, %v761
    %v769 = vpack.c.b16 %v764, %v763
    %v770 = vpack.c.b16 %v766, %v765
    %vm775 = vcmask 523264
    %v777 = vsel %vm775, %v741, 0
    %v780 = vsel %vm775, %v742, 0
    %v783 = vsel %vm775, %v743, 0
    %v786 = vsel %vm775, %v744, 0
    %788 = vmatprep.subr.bf16.mxu0 0
    %789 = vmatpush1.bf16.msra.mxu0 %v767
    %790 = vmatprep.subr.bf16.mxu0 0
    %791 = vmatpush1.bf16.msra.mxu0 %v768
    %792 = vmatprep.subr.bf16.mxu0 0
    %793 = vmatpush1.bf16.msra.mxu0 %v769
    %794 = vmatprep.subr.bf16.mxu0 0
    %795 = vmatpush1.bf16.msra.mxu0 %v770
    %796 = vmatprep.subr.bf16.mxu0 0
    %797 = vmatpush1.bf16.msra.mxu0 0
    %798 = vmatprep.subr.bf16.mxu0 0
    %799 = vmatpush1.bf16.msra.mxu0 0
    %800 = vmatprep.subr.bf16.mxu0 0
    %801 = vmatpush1.bf16.msra.mxu0 0
    %802 = vmatprep.subr.bf16.mxu0 0
    %803 = vmatpush1.bf16.msra.mxu0 0
    %804 = vmatprep.subr.bf16.mxu0 0
    %805 = vmatpush1.bf16.msra.mxu0 0
    %806 = vmatprep.subr.bf16.mxu0 0
    %807 = vmatpush1.bf16.msra.mxu0 0
    %808 = vmatprep.subr.bf16.mxu0 0
    %809 = vmatpush1.bf16.msra.mxu0 0
    %810 = vmatprep.subr.bf16.mxu0 0
    %811 = vmatpush1.bf16.msra.mxu0 0
    %812 = vmatprep.subr.bf16.mxu0 0
    %813 = vmatpush1.bf16.msra.mxu0 0
    %814 = vmatprep.subr.bf16.mxu0 0
    %815 = vmatpush1.bf16.msra.mxu0 0
    %816 = vmatprep.subr.bf16.mxu0 0
    %817 = vmatpush1.bf16.msra.mxu0 0
    %818 = vmatprep.subr.bf16.mxu0 0
    %819 = vmatpush1.bf16.msra.mxu0 0
    %820 = vmatprep.mubr.bf16.mxu0 0
    %821 = vmatmul.mubr.bf16.gmra.mrb[0].mxu0 %v777
    %v822 = vpop.f32.mrb[0].mxu0
    %v823 = vadd.f32 %v749, %v822
    %v824 = vpop.f32.mrb[0].mxu0
    %v825 = vpop.f32.mrb[0].mxu0
    %v826 = vadd.f32 %v749, %v825
    %v827 = vpop.f32.mrb[0].mxu0
    %828 = vmatprep.mubr.bf16.mxu0 0
    %829 = vmatmul.mubr.bf16.gmra.mrb[0].mxu0 %v780
    %v830 = vpop.f32.mrb[0].mxu0
    %v831 = vadd.f32 %v749, %v830
    %v832 = vpop.f32.mrb[0].mxu0
    %v833 = vpop.f32.mrb[0].mxu0
    %v834 = vadd.f32 %v749, %v833
    %v835 = vpop.f32.mrb[0].mxu0
    %836 = vmatprep.mubr.bf16.mxu0 0
    %837 = vmatmul.mubr.bf16.gmra.mrb[0].mxu0 %v783
    %v838 = vpop.f32.mrb[0].mxu0
    %v839 = vadd.f32 %v749, %v838
    %v840 = vpop.f32.mrb[0].mxu0
    %v841 = vpop.f32.mrb[0].mxu0
    %v842 = vadd.f32 %v749, %v841
    %v843 = vpop.f32.mrb[0].mxu0
    %844 = vmatprep.mubr.bf16.mxu0 0
    %845 = vmatmul.mubr.bf16.gmra.mrb[0].mxu0 %v786
    %v846 = vpop.f32.mrb[0].mxu0
    %v847 = vadd.f32 %v749, %v846
    %v848 = vpop.f32.mrb[0].mxu0
    %v849 = vpop.f32.mrb[0].mxu0
    %v850 = vadd.f32 %v749, %v849
    %v851 = vpop.f32.mrb[0].mxu0
    %852 = vdwg.mxu0
    %v853 = vmax.f32 %v823, 0.0
    %v854 = vmax.f32 %v826, 0.0
    %v855 = vmax.f32 %v831, 0.0
    %v856 = vmax.f32 %v834, 0.0
    %v857 = vmax.f32 %v839, 0.0
    %v858 = vmax.f32 %v842, 0.0
    %v859 = vmax.f32 %v847, 0.0
    %v860 = vmax.f32 %v850, 0.0
    %v861 = vpack.c.bf16 %v854, %v853
    %v862 = vpack.c.bf16 %v856, %v855
    %v863 = vpack.c.bf16 %v858, %v857
    %v864 = vpack.c.bf16 %v860, %v859
    %v869 = vunpack.c.l.b16 %v861
    %v870 = vunpack.c.h.b16 %v861
    %v871 = vunpack.c.l.b16 %v862
    %v872 = vunpack.c.h.b16 %v862
    %v873 = vunpack.c.l.b16 %v863
    %v874 = vunpack.c.h.b16 %v863
    %v875 = vunpack.c.l.b16 %v864
    %v876 = vunpack.c.h.b16 %v864
    %v877 = vpack.c.b16 %v869, %v869
    %v878 = vpack.c.b16 %v870, %v870
    %v879 = vpack.c.b16 %v871, %v871
    %v880 = vpack.c.b16 %v872, %v872
    %v881 = vpack.c.b16 %v873, %v873
    %v882 = vpack.c.b16 %v874, %v874
    %v883 = vpack.c.b16 %v875, %v875
    %v884 = vpack.c.b16 %v876, %v876
    %893 = vst.msk [vmem:[#allocation2] sm:$0xf] %vm611, %v877
    %894 = vst.msk [vmem:[#allocation2 + $0x4] sm:$0xf] %vm611, %v878
    %895 = vst.msk [vmem:[#allocation2 + $0x8] sm:$0xf] %vm611, %v879
    %896 = vst.msk [vmem:[#allocation2 + $0xc] sm:$0xf] %vm611, %v880
    %897 = vst.msk [vmem:[#allocation2 + $0x10] sm:$0xf] %vm611, %v881
    %898 = vst.msk [vmem:[#allocation2 + $0x14] sm:$0xf] %vm611, %v882
    %899 = vst.msk [vmem:[#allocation2 + $0x18] sm:$0xf] %vm611, %v883
    %900 = vst.msk [vmem:[#allocation2 + $0x1c] sm:$0xf] %vm611, %v884
    %v901 = vld [vmem:[%s21] sm:$0xf]
    %v902 = vld [vmem:[%s21 + $0x4] sm:$0xf]
    %v903 = vld [vmem:[%s21 + $0x8] sm:$0xf]
    %v904 = vld [vmem:[%s21 + $0xc] sm:$0xf]
    %v905 = vld [vmem:[%s21 + $0x10] sm:$0xf]
    %v906 = vld [vmem:[%s21 + $0x14] sm:$0xf]
    %v907 = vld [vmem:[%s21 + $0x18] sm:$0xf]
    %v908 = vld [vmem:[%s21 + $0x1c] sm:$0xf]
    %v909 = vld [vmem:[%s23] sm:$0x1]
    %v910 = vld [vmem:[%s25] sm:$0xf]
    %v911 = vld [vmem:[%s25 + $0x4] sm:$0xf]
    %v912 = vld [vmem:[%s25 + $0x8] sm:$0xf]
    %v913 = vld [vmem:[%s25 + $0xc] sm:$0xf]
    %v914 = vld [vmem:[%s25 + $0x10] sm:$0xf]
    %v915 = vld [vmem:[%s25 + $0x14] sm:$0xf]
    %v916 = vld [vmem:[%s25 + $0x18] sm:$0xf]
    %v917 = vld [vmem:[%s25 + $0x1c] sm:$0xf]
    %v918 = vld [vmem:[%s27] sm:$0x1]
    %v919 = vld [vmem:[%s29] sm:$0xf]
    %v920 = vld [vmem:[%s29 + $0x4] sm:$0xf]
    %v921 = vld [vmem:[%s29 + $0x8] sm:$0xf]
    %v922 = vld [vmem:[%s29 + $0xc] sm:$0xf]
    %v923 = vld [vmem:[%s29 + $0x10] sm:$0xf]
    %v924 = vld [vmem:[%s29 + $0x14] sm:$0xf]
    %v925 = vld [vmem:[%s29 + $0x18] sm:$0xf]
    %v926 = vld [vmem:[%s29 + $0x1c] sm:$0xf]
    %v927 = vld [vmem:[%s31] sm:$0xf]
    %v928 = vld [vmem:[%s31 + $0x4] sm:$0xf]
    %v929 = vld [vmem:[%s31 + $0x8] sm:$0xf]
    %v930 = vld [vmem:[%s31 + $0xc] sm:$0xf]
    %v931 = vld [vmem:[%s31 + $0x10] sm:$0xf]
    %v932 = vld [vmem:[%s31 + $0x14] sm:$0xf]
    %v933 = vld [vmem:[%s31 + $0x18] sm:$0xf]
    %v934 = vld [vmem:[%s31 + $0x1c] sm:$0xf]
    %v935 = vld [vmem:[%s33] sm:$0x1]
    %v936 = vld [vmem:[%s35] sm:$0xf]
    %v937 = vld [vmem:[%s35 + $0x4] sm:$0xf]
    %v938 = vld [vmem:[%s35 + $0x8] sm:$0xf]
    %v939 = vld [vmem:[%s35 + $0xc] sm:$0xf]
    %v940 = vld [vmem:[%s35 + $0x10] sm:$0xf]
    %v941 = vld [vmem:[%s35 + $0x14] sm:$0xf]
    %v942 = vld [vmem:[%s35 + $0x18] sm:$0xf]
    %v943 = vld [vmem:[%s35 + $0x1c] sm:$0xf]
    %v944 = vld [vmem:[%s37] sm:$0xf]
    %v945 = vld [vmem:[%s37 + $0x4] sm:$0xf]
    %v946 = vld [vmem:[%s37 + $0x8] sm:$0xf]
    %v947 = vld [vmem:[%s37 + $0xc] sm:$0xf]
    %v948 = vld [vmem:[%s37 + $0x10] sm:$0xf]
    %v949 = vld [vmem:[%s37 + $0x14] sm:$0xf]
    %v950 = vld [vmem:[%s37 + $0x18] sm:$0xf]
    %v951 = vld [vmem:[%s37 + $0x1c] sm:$0xf]
    %v952 = vld [vmem:[%s39] sm:$0xf]
    %v953 = vld [vmem:[%s39 + $0x4] sm:$0xf]
    %v954 = vld [vmem:[%s39 + $0x8] sm:$0xf]
    %v955 = vld [vmem:[%s39 + $0xc] sm:$0xf]
    %v956 = vld [vmem:[%s39 + $0x10] sm:$0xf]
    %v957 = vld [vmem:[%s39 + $0x14] sm:$0xf]
    %v958 = vld [vmem:[%s39 + $0x18] sm:$0xf]
    %v959 = vld [vmem:[%s39 + $0x1c] sm:$0xf]
    %v960 = vld [vmem:[%s41] sm:$0x1]
    %v962 = vlaneseq
    %v963 = vshrl.u32 %v962, 7
    %v964 = vsub.s32 0, %v963
    %v965 = vrot.slane %v909, %v964
    %v975 = vunpack.c.l.b16 %v901
    %v976 = vunpack.c.l.b16 %v902
    %v977 = vunpack.c.l.b16 %v903
    %v978 = vunpack.c.l.b16 %v904
    %v979 = vunpack.c.l.b16 %v905
    %v980 = vunpack.c.l.b16 %v906
    %v981 = vunpack.c.l.b16 %v907
    %v982 = vunpack.c.l.b16 %v908
    %v983 = vpack.c.b16 %v976, %v975
    %v984 = vpack.c.b16 %v978, %v977
    %v985 = vpack.c.b16 %v980, %v979
    %v986 = vpack.c.b16 %v982, %v981
    %v992 = vsel %vm775, %v861, 0
    %v995 = vsel %vm775, %v862, 0
    %v998 = vsel %vm775, %v863, 0
    %v1001 = vsel %vm775, %v864, 0
    %1003 = vmatprep.subr.bf16.mxu0 0
    %1004 = vmatpush1.bf16.msra.mxu0 %v983
    %1005 = vmatprep.subr.bf16.mxu0 0
    %1006 = vmatpush1.bf16.msra.mxu0 %v984
    %1007 = vmatprep.subr.bf16.mxu0 0
    %1008 = vmatpush1.bf16.msra.mxu0 %v985
    %1009 = vmatprep.subr.bf16.mxu0 0
    %1010 = vmatpush1.bf16.msra.mxu0 %v986
    %1011 = vmatprep.subr.bf16.mxu0 0
    %1012 = vmatpush1.bf16.msra.mxu0 0
    %1013 = vmatprep.subr.bf16.mxu0 0
    %1014 = vmatpush1.bf16.msra.mxu0 0
    %1015 = vmatprep.subr.bf16.mxu0 0
    %1016 = vmatpush1.bf16.msra.mxu0 0
    %1017 = vmatprep.subr.bf16.mxu0 0
    %1018 = vmatpush1.bf16.msra.mxu0 0
    %1019 = vmatprep.subr.bf16.mxu0 0
    %1020 = vmatpush1.bf16.msra.mxu0 0
    %1021 = vmatprep.subr.bf16.mxu0 0
    %1022 = vmatpush1.bf16.msra.mxu0 0
    %1023 = vmatprep.subr.bf16.mxu0 0
    %1024 = vmatpush1.bf16.msra.mxu0 0
    %1025 = vmatprep.subr.bf16.mxu0 0
    %1026 = vmatpush1.bf16.msra.mxu0 0
    %1027 = vmatprep.subr.bf16.mxu0 0
    %1028 = vmatpush1.bf16.msra.mxu0 0
    %1029 = vmatprep.subr.bf16.mxu0 0
    %1030 = vmatpush1.bf16.msra.mxu0 0
    %1031 = vmatprep.subr.bf16.mxu0 0
    %1032 = vmatpush1.bf16.msra.mxu0 0
    %1033 = vmatprep.subr.bf16.mxu0 0
    %1034 = vmatpush1.bf16.msra.mxu0 0
    %1035 = vmatprep.mubr.bf16.mxu0 0
    %1036 = vmatmul.mubr.bf16.gmra.mrb[0].mxu0 %v992
    %v1037 = vpop.f32.mrb[0].mxu0
    %v1038 = vadd.f32 %v965, %v1037
    %v1039 = vpop.f32.mrb[0].mxu0
    %v1040 = vpop.f32.mrb[0].mxu0
    %v1041 = vadd.f32 %v965, %v1040
    %v1042 = vpop.f32.mrb[0].mxu0
    %1043 = vmatprep.mubr.bf16.mxu0 0
    %1044 = vmatmul.mubr.bf16.gmra.mrb[0].mxu0 %v995
    %v1045 = vpop.f32.mrb[0].mxu0
    %v1046 = vadd.f32 %v965, %v1045
    %v1047 = vpop.f32.mrb[0].mxu0
    %v1048 = vpop.f32.mrb[0].mxu0
    %v1049 = vadd.f32 %v965, %v1048
    %v1050 = vpop.f32.mrb[0].mxu0
    %1051 = vmatprep.mubr.bf16.mxu0 0
    %1052 = vmatmul.mubr.bf16.gmra.mrb[0].mxu0 %v998
    %v1053 = vpop.f32.mrb[0].mxu0
    %v1054 = vadd.f32 %v965, %v1053
    %v1055 = vpop.f32.mrb[0].mxu0
    %v1056 = vpop.f32.mrb[0].mxu0
    %v1057 = vadd.f32 %v965, %v1056
    %v1058 = vpop.f32.mrb[0].mxu0
    %1059 = vmatprep.mubr.bf16.mxu0 0
    %1060 = vmatmul.mubr.bf16.gmra.mrb[0].mxu0 %v1001
    %v1061 = vpop.f32.mrb[0].mxu0
    %v1062 = vadd.f32 %v965, %v1061
    %v1063 = vpop.f32.mrb[0].mxu0
    %v1064 = vpop.f32.mrb[0].mxu0
    %v1065 = vadd.f32 %v965, %v1064
    %v1066 = vpop.f32.mrb[0].mxu0
    %1067 = vdwg.mxu0
    %v1068 = vmax.f32 %v1038, 0.0
    %v1069 = vmax.f32 %v1041, 0.0
    %v1070 = vmax.f32 %v1046, 0.0
    %v1071 = vmax.f32 %v1049, 0.0
    %v1072 = vmax.f32 %v1054, 0.0
    %v1073 = vmax.f32 %v1057, 0.0
    %v1074 = vmax.f32 %v1062, 0.0
    %v1075 = vmax.f32 %v1065, 0.0
    %v1076 = vpack.c.bf16 %v1069, %v1068
    %v1077 = vpack.c.bf16 %v1071, %v1070
    %v1078 = vpack.c.bf16 %v1073, %v1072
    %v1079 = vpack.c.bf16 %v1075, %v1074
    %v1081 = vlaneseq
    %v1082 = vshrl.u32 %v1081, 7
    %v1083 = vsub.s32 0, %v1082
    %v1084 = vrot.slane %v918, %v1083
    %v1094 = vunpack.c.l.b16 %v910
    %v1095 = vunpack.c.l.b16 %v911
    %v1096 = vunpack.c.l.b16 %v912
    %v1097 = vunpack.c.l.b16 %v913
    %v1098 = vunpack.c.l.b16 %v914
    %v1099 = vunpack.c.l.b16 %v915
    %v1100 = vunpack.c.l.b16 %v916
    %v1101 = vunpack.c.l.b16 %v917
    %v1102 = vpack.c.b16 %v1095, %v1094
    %v1103 = vpack.c.b16 %v1097, %v1096
    %v1104 = vpack.c.b16 %v1099, %v1098
    %v1105 = vpack.c.b16 %v1101, %v1100
    %v1111 = vsel %vm775, %v1076, 0
    %v1114 = vsel %vm775, %v1077, 0
    %v1117 = vsel %vm775, %v1078, 0
    %v1120 = vsel %vm775, %v1079, 0
    %1122 = vmatprep.subr.bf16.mxu0 0
    %1123 = vmatpush1.bf16.msra.mxu0 %v1102
    %1124 = vmatprep.subr.bf16.mxu0 0
    %1125 = vmatpush1.bf16.msra.mxu0 %v1103
    %1126 = vmatprep.subr.bf16.mxu0 0
    %1127 = vmatpush1.bf16.msra.mxu0 %v1104
    %1128 = vmatprep.subr.bf16.mxu0 0
    %1129 = vmatpush1.bf16.msra.mxu0 %v1105
    %1130 = vmatprep.subr.bf16.mxu0 0
    %1131 = vmatpush1.bf16.msra.mxu0 0
    %1132 = vmatprep.subr.bf16.mxu0 0
    %1133 = vmatpush1.bf16.msra.mxu0 0
    %1134 = vmatprep.subr.bf16.mxu0 0
    %1135 = vmatpush1.bf16.msra.mxu0 0
    %1136 = vmatprep.subr.bf16.mxu0 0
    %1137 = vmatpush1.bf16.msra.mxu0 0
    %1138 = vmatprep.subr.bf16.mxu0 0
    %1139 = vmatpush1.bf16.msra.mxu0 0
    %1140 = vmatprep.subr.bf16.mxu0 0
    %1141 = vmatpush1.bf16.msra.mxu0 0
    %1142 = vmatprep.subr.bf16.mxu0 0
    %1143 = vmatpush1.bf16.msra.mxu0 0
    %1144 = vmatprep.subr.bf16.mxu0 0
    %1145 = vmatpush1.bf16.msra.mxu0 0
    %1146 = vmatprep.subr.bf16.mxu0 0
    %1147 = vmatpush1.bf16.msra.mxu0 0
    %1148 = vmatprep.subr.bf16.mxu0 0
    %1149 = vmatpush1.bf16.msra.mxu0 0
    %1150 = vmatprep.subr.bf16.mxu0 0
    %1151 = vmatpush1.bf16.msra.mxu0 0
    %1152 = vmatprep.subr.bf16.mxu0 0
    %1153 = vmatpush1.bf16.msra.mxu0 0
    %1154 = vmatprep.mubr.bf16.mxu0 0
    %1155 = vmatmul.mubr.bf16.gmra.mrb[0].mxu0 %v1111
    %v1156 = vpop.f32.mrb[0].mxu0
    %v1157 = vadd.f32 %v1084, %v1156
    %v1158 = vpop.f32.mrb[0].mxu0
    %v1159 = vpop.f32.mrb[0].mxu0
    %v1160 = vadd.f32 %v1084, %v1159
    %v1161 = vpop.f32.mrb[0].mxu0
    %1162 = vmatprep.mubr.bf16.mxu0 0
    %1163 = vmatmul.mubr.bf16.gmra.mrb[0].mxu0 %v1114
    %v1164 = vpop.f32.mrb[0].mxu0
    %v1165 = vadd.f32 %v1084, %v1164
    %v1166 = vpop.f32.mrb[0].mxu0
    %v1167 = vpop.f32.mrb[0].mxu0
    %v1168 = vadd.f32 %v1084, %v1167
    %v1169 = vpop.f32.mrb[0].mxu0
    %1170 = vmatprep.mubr.bf16.mxu0 0
    %1171 = vmatmul.mubr.bf16.gmra.mrb[0].mxu0 %v1117
    %v1172 = vpop.f32.mrb[0].mxu0
    %v1173 = vadd.f32 %v1084, %v1172
    %v1174 = vpop.f32.mrb[0].mxu0
    %v1175 = vpop.f32.mrb[0].mxu0
    %v1176 = vadd.f32 %v1084, %v1175
    %v1177 = vpop.f32.mrb[0].mxu0
    %1178 = vmatprep.mubr.bf16.mxu0 0
    %1179 = vmatmul.mubr.bf16.gmra.mrb[0].mxu0 %v1120
    %v1180 = vpop.f32.mrb[0].mxu0
    %v1181 = vadd.f32 %v1084, %v1180
    %v1182 = vpop.f32.mrb[0].mxu0
    %v1183 = vpop.f32.mrb[0].mxu0
    %v1184 = vadd.f32 %v1084, %v1183
    %v1185 = vpop.f32.mrb[0].mxu0
    %1186 = vdwg.mxu0
    %v1187 = vadd.f32 %v1157, %v853
    %v1188 = vadd.f32 %v1160, %v854
    %v1189 = vadd.f32 %v1165, %v855
    %v1190 = vadd.f32 %v1168, %v856
    %v1191 = vadd.f32 %v1173, %v857
    %v1192 = vadd.f32 %v1176, %v858
    %v1193 = vadd.f32 %v1181, %v859
    %v1194 = vadd.f32 %v1184, %v860
    %v1195 = vmax.f32 %v1187, 0.0
    %v1196 = vmax.f32 %v1188, 0.0
    %v1197 = vmax.f32 %v1189, 0.0
    %v1198 = vmax.f32 %v1190, 0.0
    %v1199 = vmax.f32 %v1191, 0.0
    %v1200 = vmax.f32 %v1192, 0.0
    %v1201 = vmax.f32 %v1193, 0.0
    %v1202 = vmax.f32 %v1194, 0.0
    %v1203 = vpack.c.bf16 %v1196, %v1195
    %v1204 = vpack.c.bf16 %v1198, %v1197
    %v1205 = vpack.c.bf16 %v1200, %v1199
    %v1206 = vpack.c.bf16 %v1202, %v1201
    %v1215 = vunpack.c.l.b16 %v927
    %v1216 = vunpack.c.l.b16 %v928
    %v1217 = vunpack.c.l.b16 %v929
    %v1218 = vunpack.c.l.b16 %v930
    %v1219 = vunpack.c.l.b16 %v931
    %v1220 = vunpack.c.l.b16 %v932
    %v1221 = vunpack.c.l.b16 %v933
    %v1222 = vunpack.c.l.b16 %v934
    %v1223 = vpack.c.b16 %v1216, %v1215
    %v1224 = vpack.c.b16 %v1218, %v1217
    %v1225 = vpack.c.b16 %v1220, %v1219
    %v1226 = vpack.c.b16 %v1222, %v1221
    %v1232 = vsel %vm775, %v1203, 0
    %v1235 = vsel %vm775, %v1204, 0
    %v1238 = vsel %vm775, %v1205, 0
    %v1241 = vsel %vm775, %v1206, 0
    %1243 = vmatprep.subr.bf16.mxu0 0
    %1244 = vmatpush1.bf16.msra.mxu0 %v1223
    %1245 = vmatprep.subr.bf16.mxu0 0
    %1246 = vmatpush1.bf16.msra.mxu0 %v1224
    %1247 = vmatprep.subr.bf16.mxu0 0
    %1248 = vmatpush1.bf16.msra.mxu0 %v1225
    %1249 = vmatprep.subr.bf16.mxu0 0
    %1250 = vmatpush1.bf16.msra.mxu0 %v1226
    %1251 = vmatprep.subr.bf16.mxu0 0
    %1252 = vmatpush1.bf16.msra.mxu0 0
    %1253 = vmatprep.subr.bf16.mxu0 0
    %1254 = vmatpush1.bf16.msra.mxu0 0
    %1255 = vmatprep.subr.bf16.mxu0 0
    %1256 = vmatpush1.bf16.msra.mxu0 0
    %1257 = vmatprep.subr.bf16.mxu0 0
    %1258 = vmatpush1.bf16.msra.mxu0 0
    %1259 = vmatprep.subr.bf16.mxu0 0
    %1260 = vmatpush1.bf16.msra.mxu0 0
    %1261 = vmatprep.subr.bf16.mxu0 0
    %1262 = vmatpush1.bf16.msra.mxu0 0
    %1263 = vmatprep.subr.bf16.mxu0 0
    %1264 = vmatpush1.bf16.msra.mxu0 0
    %1265 = vmatprep.subr.bf16.mxu0 0
    %1266 = vmatpush1.bf16.msra.mxu0 0
    %1267 = vmatprep.subr.bf16.mxu0 0
    %1268 = vmatpush1.bf16.msra.mxu0 0
    %1269 = vmatprep.subr.bf16.mxu0 0
    %1270 = vmatpush1.bf16.msra.mxu0 0
    %1271 = vmatprep.subr.bf16.mxu0 0
    %1272 = vmatpush1.bf16.msra.mxu0 0
    %1273 = vmatprep.subr.bf16.mxu0 0
    %1274 = vmatpush1.bf16.msra.mxu0 0
    %1275 = vmatprep.mubr.bf16.mxu0 0
    %1276 = vmatmul.mubr.bf16.gmra.mrb[0].mxu0 %v1232
    %v1277 = vpop.f32.mrb[0].mxu0
    %v1278 = vadd.f32 0.0, %v1277
    %v1279 = vpop.f32.mrb[0].mxu0
    %v1280 = vpop.f32.mrb[0].mxu0
    %v1281 = vadd.f32 0.0, %v1280
    %v1282 = vpop.f32.mrb[0].mxu0
    %1283 = vmatprep.mubr.bf16.mxu0 0
    %1284 = vmatmul.mubr.bf16.gmra.mrb[0].mxu0 %v1235
    %v1285 = vpop.f32.mrb[0].mxu0
    %v1286 = vadd.f32 0.0, %v1285
    %v1287 = vpop.f32.mrb[0].mxu0
    %v1288 = vpop.f32.mrb[0].mxu0
    %v1289 = vadd.f32 0.0, %v1288
    %v1290 = vpop.f32.mrb[0].mxu0
    %1291 = vmatprep.mubr.bf16.mxu0 0
    %1292 = vmatmul.mubr.bf16.gmra.mrb[0].mxu0 %v1238
    %v1293 = vpop.f32.mrb[0].mxu0
    %v1294 = vadd.f32 0.0, %v1293
    %v1295 = vpop.f32.mrb[0].mxu0
    %v1296 = vpop.f32.mrb[0].mxu0
    %v1297 = vadd.f32 0.0, %v1296
    %v1298 = vpop.f32.mrb[0].mxu0
    %1299 = vmatprep.mubr.bf16.mxu0 0
    %1300 = vmatmul.mubr.bf16.gmra.mrb[0].mxu0 %v1241
    %v1301 = vpop.f32.mrb[0].mxu0
    %v1302 = vadd.f32 0.0, %v1301
    %v1303 = vpop.f32.mrb[0].mxu0
    %v1304 = vpop.f32.mrb[0].mxu0
    %v1305 = vadd.f32 0.0, %v1304
    %v1306 = vpop.f32.mrb[0].mxu0
    %1307 = vdwg.mxu0
    %v1316 = vunpack.c.l.b16 %v919
    %v1317 = vunpack.c.l.b16 %v920
    %v1318 = vunpack.c.l.b16 %v921
    %v1319 = vunpack.c.l.b16 %v922
    %v1320 = vunpack.c.l.b16 %v923
    %v1321 = vunpack.c.l.b16 %v924
    %v1322 = vunpack.c.l.b16 %v925
    %v1323 = vunpack.c.l.b16 %v926
    %v1324 = vpack.c.b16 %v1317, %v1316
    %v1325 = vpack.c.b16 %v1319, %v1318
    %v1326 = vpack.c.b16 %v1321, %v1320
    %v1327 = vpack.c.b16 %v1323, %v1322
    %1332 = vmatprep.subr.bf16.mxu0 0
    %1333 = vmatpush1.bf16.msra.mxu0 %v1324
    %1334 = vmatprep.subr.bf16.mxu0 0
    %1335 = vmatpush1.bf16.msra.mxu0 %v1325
    %1336 = vmatprep.subr.bf16.mxu0 0
    %1337 = vmatpush1.bf16.msra.mxu0 %v1326
    %1338 = vmatprep.subr.bf16.mxu0 0
    %1339 = vmatpush1.bf16.msra.mxu0 %v1327
    %1340 = vmatprep.subr.bf16.mxu0 0
    %1341 = vmatpush1.bf16.msra.mxu0 0
    %1342 = vmatprep.subr.bf16.mxu0 0
    %1343 = vmatpush1.bf16.msra.mxu0 0
    %1344 = vmatprep.subr.bf16.mxu0 0
    %1345 = vmatpush1.bf16.msra.mxu0 0
    %1346 = vmatprep.subr.bf16.mxu0 0
    %1347 = vmatpush1.bf16.msra.mxu0 0
    %1348 = vmatprep.subr.bf16.mxu0 0
    %1349 = vmatpush1.bf16.msra.mxu0 0
    %1350 = vmatprep.subr.bf16.mxu0 0
    %1351 = vmatpush1.bf16.msra.mxu0 0
    %1352 = vmatprep.subr.bf16.mxu0 0
    %1353 = vmatpush1.bf16.msra.mxu0 0
    %1354 = vmatprep.subr.bf16.mxu0 0
    %1355 = vmatpush1.bf16.msra.mxu0 0
    %1356 = vmatprep.subr.bf16.mxu0 0
    %1357 = vmatpush1.bf16.msra.mxu0 0
    %1358 = vmatprep.subr.bf16.mxu0 0
    %1359 = vmatpush1.bf16.msra.mxu0 0
    %1360 = vmatprep.subr.bf16.mxu0 0
    %1361 = vmatpush1.bf16.msra.mxu0 0
    %1362 = vmatprep.subr.bf16.mxu0 0
    %1363 = vmatpush1.bf16.msra.mxu0 0
    %1364 = vmatprep.mubr.bf16.mxu0 0
    %1365 = vmatmul.mubr.bf16.gmra.mrb[0].mxu0 %v992
    %v1366 = vpop.f32.mrb[0].mxu0
    %v1367 = vadd.f32 %v1278, %v1366
    %v1368 = vpop.f32.mrb[0].mxu0
    %v1369 = vpop.f32.mrb[0].mxu0
    %v1370 = vadd.f32 %v1281, %v1369
    %v1371 = vpop.f32.mrb[0].mxu0
    %1372 = vmatprep.mubr.bf16.mxu0 0
    %1373 = vmatmul.mubr.bf16.gmra.mrb[0].mxu0 %v995
    %v1374 = vpop.f32.mrb[0].mxu0
    %v1375 = vadd.f32 %v1286, %v1374
    %v1376 = vpop.f32.mrb[0].mxu0
    %v1377 = vpop.f32.mrb[0].mxu0
    %v1378 = vadd.f32 %v1289, %v1377
    %v1379 = vpop.f32.mrb[0].mxu0
    %1380 = vmatprep.mubr.bf16.mxu0 0
    %1381 = vmatmul.mubr.bf16.gmra.mrb[0].mxu0 %v998
    %v1382 = vpop.f32.mrb[0].mxu0
    %v1383 = vadd.f32 %v1294, %v1382
    %v1384 = vpop.f32.mrb[0].mxu0
    %v1385 = vpop.f32.mrb[0].mxu0
    %v1386 = vadd.f32 %v1297, %v1385
    %v1387 = vpop.f32.mrb[0].mxu0
    %1388 = vmatprep.mubr.bf16.mxu0 0
    %1389 = vmatmul.mubr.bf16.gmra.mrb[0].mxu0 %v1001
    %v1390 = vpop.f32.mrb[0].mxu0
    %v1391 = vadd.f32 %v1302, %v1390
    %v1392 = vpop.f32.mrb[0].mxu0
    %v1393 = vpop.f32.mrb[0].mxu0
    %v1394 = vadd.f32 %v1305, %v1393
    %v1395 = vpop.f32.mrb[0].mxu0
    %1396 = vdwg.mxu0
    %v1398 = vlaneseq
    %v1399 = vshrl.u32 %v1398, 7
    %v1400 = vsub.s32 0, %v1399
    %v1401 = vrot.slane %v935, %v1400
    %v1403 = vadd.f32 %v1367, %v1401
    %v1404 = vadd.f32 %v1370, %v1401
    %v1405 = vadd.f32 %v1375, %v1401
    %v1406 = vadd.f32 %v1378, %v1401
    %v1407 = vadd.f32 %v1383, %v1401
    %v1408 = vadd.f32 %v1386, %v1401
    %v1409 = vadd.f32 %v1391, %v1401
    %v1410 = vadd.f32 %v1394, %v1401
    %v1411 = vmax.f32 %v1403, 0.0
    %v1412 = vmax.f32 %v1404, 0.0
    %v1413 = vmax.f32 %v1405, 0.0
    %v1414 = vmax.f32 %v1406, 0.0
    %v1415 = vmax.f32 %v1407, 0.0
    %v1416 = vmax.f32 %v1408, 0.0
    %v1417 = vmax.f32 %v1409, 0.0
    %v1418 = vmax.f32 %v1410, 0.0
    %v1419 = vpack.c.bf16 %v1412, %v1411
    %v1420 = vpack.c.bf16 %v1414, %v1413
    %v1421 = vpack.c.bf16 %v1416, %v1415
    %v1422 = vpack.c.bf16 %v1418, %v1417
    %v1431 = vunpack.c.l.b16 %v944
    %v1432 = vunpack.c.l.b16 %v945
    %v1433 = vunpack.c.l.b16 %v946
    %v1434 = vunpack.c.l.b16 %v947
    %v1435 = vunpack.c.l.b16 %v948
    %v1436 = vunpack.c.l.b16 %v949
    %v1437 = vunpack.c.l.b16 %v950
    %v1438 = vunpack.c.l.b16 %v951
    %v1439 = vpack.c.b16 %v1432, %v1431
    %v1440 = vpack.c.b16 %v1434, %v1433
    %v1441 = vpack.c.b16 %v1436, %v1435
    %v1442 = vpack.c.b16 %v1438, %v1437
    %1447 = vmatprep.subr.bf16.mxu0 0
    %1448 = vmatpush1.bf16.msra.mxu0 %v1439
    %1449 = vmatprep.subr.bf16.mxu0 0
    %1450 = vmatpush1.bf16.msra.mxu0 %v1440
    %1451 = vmatprep.subr.bf16.mxu0 0
    %1452 = vmatpush1.bf16.msra.mxu0 %v1441
    %1453 = vmatprep.subr.bf16.mxu0 0
    %1454 = vmatpush1.bf16.msra.mxu0 %v1442
    %1455 = vmatprep.subr.bf16.mxu0 0
    %1456 = vmatpush1.bf16.msra.mxu0 0
    %1457 = vmatprep.subr.bf16.mxu0 0
    %1458 = vmatpush1.bf16.msra.mxu0 0
    %1459 = vmatprep.subr.bf16.mxu0 0
    %1460 = vmatpush1.bf16.msra.mxu0 0
    %1461 = vmatprep.subr.bf16.mxu0 0
    %1462 = vmatpush1.bf16.msra.mxu0 0
    %1463 = vmatprep.subr.bf16.mxu0 0
    %1464 = vmatpush1.bf16.msra.mxu0 0
    %1465 = vmatprep.subr.bf16.mxu0 0
    %1466 = vmatpush1.bf16.msra.mxu0 0
    %1467 = vmatprep.subr.bf16.mxu0 0
    %1468 = vmatpush1.bf16.msra.mxu0 0
    %1469 = vmatprep.subr.bf16.mxu0 0
    %1470 = vmatpush1.bf16.msra.mxu0 0
    %1471 = vmatprep.subr.bf16.mxu0 0
    %1472 = vmatpush1.bf16.msra.mxu0 0
    %1473 = vmatprep.subr.bf16.mxu0 0
    %1474 = vmatpush1.bf16.msra.mxu0 0
    %1475 = vmatprep.subr.bf16.mxu0 0
    %1476 = vmatpush1.bf16.msra.mxu0 0
    %1477 = vmatprep.subr.bf16.mxu0 0
    %1478 = vmatpush1.bf16.msra.mxu0 0
    %1479 = vmatprep.mubr.bf16.mxu0 0
    %1480 = vmatmul.mubr.bf16.gmra.mrb[0].mxu0 %v992
    %v1481 = vpop.f32.mrb[0].mxu0
    %v1482 = vadd.f32 0.0, %v1481
    %v1483 = vpop.f32.mrb[0].mxu0
    %v1484 = vpop.f32.mrb[0].mxu0
    %v1485 = vadd.f32 0.0, %v1484
    %v1486 = vpop.f32.mrb[0].mxu0
    %1487 = vmatprep.mubr.bf16.mxu0 0
    %1488 = vmatmul.mubr.bf16.gmra.mrb[0].mxu0 %v995
    %v1489 = vpop.f32.mrb[0].mxu0
    %v1490 = vadd.f32 0.0, %v1489
    %v1491 = vpop.f32.mrb[0].mxu0
    %v1492 = vpop.f32.mrb[0].mxu0
    %v1493 = vadd.f32 0.0, %v1492
    %v1494 = vpop.f32.mrb[0].mxu0
    %1495 = vmatprep.mubr.bf16.mxu0 0
    %1496 = vmatmul.mubr.bf16.gmra.mrb[0].mxu0 %v998
    %v1497 = vpop.f32.mrb[0].mxu0
    %v1498 = vadd.f32 0.0, %v1497
    %v1499 = vpop.f32.mrb[0].mxu0
    %v1500 = vpop.f32.mrb[0].mxu0
    %v1501 = vadd.f32 0.0, %v1500
    %v1502 = vpop.f32.mrb[0].mxu0
    %1503 = vmatprep.mubr.bf16.mxu0 0
    %1504 = vmatmul.mubr.bf16.gmra.mrb[0].mxu0 %v1001
    %v1505 = vpop.f32.mrb[0].mxu0
    %v1506 = vadd.f32 0.0, %v1505
    %v1507 = vpop.f32.mrb[0].mxu0
    %v1508 = vpop.f32.mrb[0].mxu0
    %v1509 = vadd.f32 0.0, %v1508
    %v1510 = vpop.f32.mrb[0].mxu0
    %1511 = vdwg.mxu0
    %v1520 = vunpack.c.l.b16 %v936
    %v1521 = vunpack.c.l.b16 %v937
    %v1522 = vunpack.c.l.b16 %v938
    %v1523 = vunpack.c.l.b16 %v939
    %v1524 = vunpack.c.l.b16 %v940
    %v1525 = vunpack.c.l.b16 %v941
    %v1526 = vunpack.c.l.b16 %v942
    %v1527 = vunpack.c.l.b16 %v943
    %v1528 = vpack.c.b16 %v1521, %v1520
    %v1529 = vpack.c.b16 %v1523, %v1522
    %v1530 = vpack.c.b16 %v1525, %v1524
    %v1531 = vpack.c.b16 %v1527, %v1526
    %v1537 = vsel %vm775, %v1419, 0
    %v1540 = vsel %vm775, %v1420, 0
    %v1543 = vsel %vm775, %v1421, 0
    %v1546 = vsel %vm775, %v1422, 0
    %1548 = vmatprep.subr.bf16.mxu0 0
    %1549 = vmatpush1.bf16.msra.mxu0 %v1528
    %1550 = vmatprep.subr.bf16.mxu0 0
    %1551 = vmatpush1.bf16.msra.mxu0 %v1529
    %1552 = vmatprep.subr.bf16.mxu0 0
    %1553 = vmatpush1.bf16.msra.mxu0 %v1530
    %1554 = vmatprep.subr.bf16.mxu0 0
    %1555 = vmatpush1.bf16.msra.mxu0 %v1531
    %1556 = vmatprep.subr.bf16.mxu0 0
    %1557 = vmatpush1.bf16.msra.mxu0 0
    %1558 = vmatprep.subr.bf16.mxu0 0
    %1559 = vmatpush1.bf16.msra.mxu0 0
    %1560 = vmatprep.subr.bf16.mxu0 0
    %1561 = vmatpush1.bf16.msra.mxu0 0
    %1562 = vmatprep.subr.bf16.mxu0 0
    %1563 = vmatpush1.bf16.msra.mxu0 0
    %1564 = vmatprep.subr.bf16.mxu0 0
    %1565 = vmatpush1.bf16.msra.mxu0 0
    %1566 = vmatprep.subr.bf16.mxu0 0
    %1567 = vmatpush1.bf16.msra.mxu0 0
    %1568 = vmatprep.subr.bf16.mxu0 0
    %1569 = vmatpush1.bf16.msra.mxu0 0
    %1570 = vmatprep.subr.bf16.mxu0 0
    %1571 = vmatpush1.bf16.msra.mxu0 0
    %1572 = vmatprep.subr.bf16.mxu0 0
    %1573 = vmatpush1.bf16.msra.mxu0 0
    %1574 = vmatprep.subr.bf16.mxu0 0
    %1575 = vmatpush1.bf16.msra.mxu0 0
    %1576 = vmatprep.subr.bf16.mxu0 0
    %1577 = vmatpush1.bf16.msra.mxu0 0
    %1578 = vmatprep.subr.bf16.mxu0 0
    %1579 = vmatpush1.bf16.msra.mxu0 0
    %1580 = vmatprep.mubr.bf16.mxu0 0
    %1581 = vmatmul.mubr.bf16.gmra.mrb[0].mxu0 %v1537
    %v1582 = vpop.f32.mrb[0].mxu0
    %v1583 = vadd.f32 %v1482, %v1582
    %v1584 = vpop.f32.mrb[0].mxu0
    %v1585 = vpop.f32.mrb[0].mxu0
    %v1586 = vadd.f32 %v1485, %v1585
    %v1587 = vpop.f32.mrb[0].mxu0
    %1588 = vmatprep.mubr.bf16.mxu0 0
    %1589 = vmatmul.mubr.bf16.gmra.mrb[0].mxu0 %v1540
    %v1590 = vpop.f32.mrb[0].mxu0
    %v1591 = vadd.f32 %v1490, %v1590
    %v1592 = vpop.f32.mrb[0].mxu0
    %v1593 = vpop.f32.mrb[0].mxu0
    %v1594 = vadd.f32 %v1493, %v1593
    %v1595 = vpop.f32.mrb[0].mxu0
    %1596 = vmatprep.mubr.bf16.mxu0 0
    %1597 = vmatmul.mubr.bf16.gmra.mrb[0].mxu0 %v1543
    %v1598 = vpop.f32.mrb[0].mxu0
    %v1599 = vadd.f32 %v1498, %v1598
    %v1600 = vpop.f32.mrb[0].mxu0
    %v1601 = vpop.f32.mrb[0].mxu0
    %v1602 = vadd.f32 %v1501, %v1601
    %v1603 = vpop.f32.mrb[0].mxu0
    %1604 = vmatprep.mubr.bf16.mxu0 0
    %1605 = vmatmul.mubr.bf16.gmra.mrb[0].mxu0 %v1546
    %v1606 = vpop.f32.mrb[0].mxu0
    %v1607 = vadd.f32 %v1506, %v1606
    %v1608 = vpop.f32.mrb[0].mxu0
    %v1609 = vpop.f32.mrb[0].mxu0
    %v1610 = vadd.f32 %v1509, %v1609
    %v1611 = vpop.f32.mrb[0].mxu0
    %1612 = vdwg.mxu0
    %v1621 = vunpack.c.l.b16 %v952
    %v1622 = vunpack.c.l.b16 %v953
    %v1623 = vunpack.c.l.b16 %v954
    %v1624 = vunpack.c.l.b16 %v955
    %v1625 = vunpack.c.l.b16 %v956
    %v1626 = vunpack.c.l.b16 %v957
    %v1627 = vunpack.c.l.b16 %v958
    %v1628 = vunpack.c.l.b16 %v959
    %v1629 = vpack.c.b16 %v1622, %v1621
    %v1630 = vpack.c.b16 %v1624, %v1623
    %v1631 = vpack.c.b16 %v1626, %v1625
    %v1632 = vpack.c.b16 %v1628, %v1627
    %1637 = vmatprep.subr.bf16.mxu0 0
    %1638 = vmatpush1.bf16.msra.mxu0 %v1629
    %1639 = vmatprep.subr.bf16.mxu0 0
    %1640 = vmatpush1.bf16.msra.mxu0 %v1630
    %1641 = vmatprep.subr.bf16.mxu0 0
    %1642 = vmatpush1.bf16.msra.mxu0 %v1631
    %1643 = vmatprep.subr.bf16.mxu0 0
    %1644 = vmatpush1.bf16.msra.mxu0 %v1632
    %1645 = vmatprep.subr.bf16.mxu0 0
    %1646 = vmatpush1.bf16.msra.mxu0 0
    %1647 = vmatprep.subr.bf16.mxu0 0
    %1648 = vmatpush1.bf16.msra.mxu0 0
    %1649 = vmatprep.subr.bf16.mxu0 0
    %1650 = vmatpush1.bf16.msra.mxu0 0
    %1651 = vmatprep.subr.bf16.mxu0 0
    %1652 = vmatpush1.bf16.msra.mxu0 0
    %1653 = vmatprep.subr.bf16.mxu0 0
    %1654 = vmatpush1.bf16.msra.mxu0 0
    %1655 = vmatprep.subr.bf16.mxu0 0
    %1656 = vmatpush1.bf16.msra.mxu0 0
    %1657 = vmatprep.subr.bf16.mxu0 0
    %1658 = vmatpush1.bf16.msra.mxu0 0
    %1659 = vmatprep.subr.bf16.mxu0 0
    %1660 = vmatpush1.bf16.msra.mxu0 0
    %1661 = vmatprep.subr.bf16.mxu0 0
    %1662 = vmatpush1.bf16.msra.mxu0 0
    %1663 = vmatprep.subr.bf16.mxu0 0
    %1664 = vmatpush1.bf16.msra.mxu0 0
    %1665 = vmatprep.subr.bf16.mxu0 0
    %1666 = vmatpush1.bf16.msra.mxu0 0
    %1667 = vmatprep.subr.bf16.mxu0 0
    %1668 = vmatpush1.bf16.msra.mxu0 0
    %1669 = vmatprep.mubr.bf16.mxu0 0
    %1670 = vmatmul.mubr.bf16.gmra.mrb[0].mxu0 %v1232
    %v1671 = vpop.f32.mrb[0].mxu0
    %v1672 = vadd.f32 0.0, %v1671
    %v1673 = vpop.f32.mrb[0].mxu0
    %v1674 = vpop.f32.mrb[0].mxu0
    %v1675 = vadd.f32 0.0, %v1674
    %v1676 = vpop.f32.mrb[0].mxu0
    %1677 = vmatprep.mubr.bf16.mxu0 0
    %1678 = vmatmul.mubr.bf16.gmra.mrb[0].mxu0 %v1235
    %v1679 = vpop.f32.mrb[0].mxu0
    %v1680 = vadd.f32 0.0, %v1679
    %v1681 = vpop.f32.mrb[0].mxu0
    %v1682 = vpop.f32.mrb[0].mxu0
    %v1683 = vadd.f32 0.0, %v1682
    %v1684 = vpop.f32.mrb[0].mxu0
    %1685 = vmatprep.mubr.bf16.mxu0 0
    %1686 = vmatmul.mubr.bf16.gmra.mrb[0].mxu0 %v1238
    %v1687 = vpop.f32.mrb[0].mxu0
    %v1688 = vadd.f32 0.0, %v1687
    %v1689 = vpop.f32.mrb[0].mxu0
    %v1690 = vpop.f32.mrb[0].mxu0
    %v1691 = vadd.f32 0.0, %v1690
    %v1692 = vpop.f32.mrb[0].mxu0
    %1693 = vmatprep.mubr.bf16.mxu0 0
    %1694 = vmatmul.mubr.bf16.gmra.mrb[0].mxu0 %v1241
    %v1695 = vpop.f32.mrb[0].mxu0
    %v1696 = vadd.f32 0.0, %v1695
    %v1697 = vpop.f32.mrb[0].mxu0
    %v1698 = vpop.f32.mrb[0].mxu0
    %v1699 = vadd.f32 0.0, %v1698
    %v1700 = vpop.f32.mrb[0].mxu0
    %1701 = vdwg.mxu0
    %v1702 = vadd.f32 %v1583, %v1672
    %v1703 = vadd.f32 %v1586, %v1675
    %v1704 = vadd.f32 %v1591, %v1680
    %v1705 = vadd.f32 %v1594, %v1683
    %v1706 = vadd.f32 %v1599, %v1688
    %v1707 = vadd.f32 %v1602, %v1691
    %v1708 = vadd.f32 %v1607, %v1696
    %v1709 = vadd.f32 %v1610, %v1699
    %v1711 = vlaneseq
    %v1712 = vshrl.u32 %v1711, 7
    %v1713 = vsub.s32 0, %v1712
    %v1714 = vrot.slane %v960, %v1713
    %v1716 = vadd.f32 %v1702, %v1714
    %v1717 = vadd.f32 %v1703, %v1714
    %v1718 = vadd.f32 %v1704, %v1714
    %v1719 = vadd.f32 %v1705, %v1714
    %v1720 = vadd.f32 %v1706, %v1714
    %v1721 = vadd.f32 %v1707, %v1714
    %v1722 = vadd.f32 %v1708, %v1714
    %v1723 = vadd.f32 %v1709, %v1714
    %v1724 = vmax.f32 %v1716, 0.0
    %v1725 = vmax.f32 %v1717, 0.0
    %v1726 = vmax.f32 %v1718, 0.0
    %v1727 = vmax.f32 %v1719, 0.0
    %v1728 = vmax.f32 %v1720, 0.0
    %v1729 = vmax.f32 %v1721, 0.0
    %v1730 = vmax.f32 %v1722, 0.0
    %v1731 = vmax.f32 %v1723, 0.0
    %1740 = vrot.lane.b32.xlu0 %v1724, 32
    %v1741 = vpop.permute.xlu0 %1740
    %1742 = vrot.lane.b32.xlu0 %v1725, 32
    %v1743 = vpop.permute.xlu0 %1742
    %1744 = vrot.lane.b32.xlu0 %v1726, 32
    %v1745 = vpop.permute.xlu0 %1744
    %1746 = vrot.lane.b32.xlu0 %v1727, 32
    %v1747 = vpop.permute.xlu0 %1746
    %1748 = vrot.lane.b32.xlu0 %v1728, 32
    %v1749 = vpop.permute.xlu0 %1748
    %1750 = vrot.lane.b32.xlu0 %v1729, 32
    %v1751 = vpop.permute.xlu0 %1750
    %1752 = vrot.lane.b32.xlu0 %v1730, 32
    %v1753 = vpop.permute.xlu0 %1752
    %1754 = vrot.lane.b32.xlu0 %v1731, 32
    %v1755 = vpop.permute.xlu0 %1754
    %v1764 = vsel %vm364, %v1724, %v1741
    %v1765 = vsel %vm364, %v1725, %v1743
    %v1766 = vsel %vm364, %v1726, %v1745
    %v1767 = vsel %vm364, %v1727, %v1747
    %v1768 = vsel %vm364, %v1728, %v1749
    %v1769 = vsel %vm364, %v1729, %v1751
    %v1770 = vsel %vm364, %v1730, %v1753
    %v1771 = vsel %vm364, %v1731, %v1755
    %v1772 = vpack.c.bf16 %v1765, %v1764
    %v1773 = vpack.c.bf16 %v1767, %v1766
    %v1774 = vpack.c.bf16 %v1769, %v1768
    %v1775 = vpack.c.bf16 %v1771, %v1770
    %v1780 = vunpack.c.l.b16 %v1772
    %v1781 = vunpack.c.h.b16 %v1772
    %v1782 = vunpack.c.l.b16 %v1773
    %v1783 = vunpack.c.h.b16 %v1773
    %v1784 = vunpack.c.l.b16 %v1774
    %v1785 = vunpack.c.h.b16 %v1774
    %v1786 = vunpack.c.l.b16 %v1775
    %v1787 = vunpack.c.h.b16 %v1775
    %v1788 = vpack.c.b16 %v1780, %v1780
    %v1789 = vpack.c.b16 %v1781, %v1781
    %v1790 = vpack.c.b16 %v1782, %v1782
    %v1791 = vpack.c.b16 %v1783, %v1783
    %v1792 = vpack.c.b16 %v1784, %v1784
    %v1793 = vpack.c.b16 %v1785, %v1785
    %v1794 = vpack.c.b16 %v1786, %v1786
    %v1795 = vpack.c.b16 %v1787, %v1787
    %1804 = vst.msk [vmem:[%s69] sm:$0xf] %vm611, %v1788
    %1805 = vst.msk [vmem:[%s69 + $0x4] sm:$0xf] %vm611, %v1789
    %1806 = vst.msk [vmem:[%s69 + $0x8] sm:$0xf] %vm611, %v1790
    %1807 = vst.msk [vmem:[%s69 + $0xc] sm:$0xf] %vm611, %v1791
    %1808 = vst.msk [vmem:[%s69 + $0x10] sm:$0xf] %vm611, %v1792
    %1809 = vst.msk [vmem:[%s69 + $0x14] sm:$0xf] %vm611, %v1793
    %1810 = vst.msk [vmem:[%s69 + $0x18] sm:$0xf] %vm611, %v1794
    %1811 = vst.msk [vmem:[%s69 + $0x1c] sm:$0xf] %vm611, %v1795
    %v1812 = vld [vmem:[%s43] sm:$0xf]
    %v1813 = vld [vmem:[%s43 + $0x4] sm:$0xf]
    %v1814 = vld [vmem:[%s43 + $0x8] sm:$0xf]
    %v1815 = vld [vmem:[%s43 + $0xc] sm:$0xf]
    %v1816 = vld [vmem:[%s45] sm:$0x1]
    %v1817 = vld [vmem:[%s47] sm:$0xf]
    %v1818 = vld [vmem:[%s47 + $0x4] sm:$0xf]
    %v1819 = vld [vmem:[%s47 + $0x8] sm:$0xf]
    %v1820 = vld [vmem:[%s47 + $0xc] sm:$0xf]
    %v1821 = vld [vmem:[%s49] sm:$0x1]
    %v1822 = vld [vmem:[%s51] sm:$0xf]
    %v1823 = vld [vmem:[%s51 + $0x4] sm:$0xf]
    %v1824 = vld [vmem:[%s51 + $0x8] sm:$0xf]
    %v1825 = vld [vmem:[%s51 + $0xc] sm:$0xf]
    %v1826 = vld [vmem:[%s53] sm:$0xf]
    %v1827 = vld [vmem:[%s53 + $0x4] sm:$0xf]
    %v1828 = vld [vmem:[%s53 + $0x8] sm:$0xf]
    %v1829 = vld [vmem:[%s53 + $0xc] sm:$0xf]
    %v1830 = vld [vmem:[%s55] sm:$0x1]
    %v1831 = vld [vmem:[%s57] sm:$0xf]
    %v1832 = vld [vmem:[%s57 + $0x4] sm:$0xf]
    %v1833 = vld [vmem:[%s57 + $0x8] sm:$0xf]
    %v1834 = vld [vmem:[%s57 + $0xc] sm:$0xf]
    %v1835 = vld [vmem:[%s59] sm:$0xf]
    %v1836 = vld [vmem:[%s59 + $0x4] sm:$0xf]
    %v1837 = vld [vmem:[%s59 + $0x8] sm:$0xf]
    %v1838 = vld [vmem:[%s59 + $0xc] sm:$0xf]
    %v1839 = vld [vmem:[%s61] sm:$0xf]
    %v1840 = vld [vmem:[%s61 + $0x4] sm:$0xf]
    %v1841 = vld [vmem:[%s61 + $0x8] sm:$0xf]
    %v1842 = vld [vmem:[%s61 + $0xc] sm:$0xf]
    %v1843 = vld [vmem:[%s63] sm:$0x1]
    %v1845 = vlaneseq
    %v1846 = vshrl.u32 %v1845, 7
    %v1847 = vsub.s32 0, %v1846
    %v1848 = vrot.slane %v1816, %v1847
    %v1854 = vunpack.c.l.b16 %v1812
    %v1855 = vunpack.c.l.b16 %v1813
    %v1856 = vunpack.c.l.b16 %v1814
    %v1857 = vunpack.c.l.b16 %v1815
    %v1858 = vpack.c.b16 %v1855, %v1854
    %v1859 = vpack.c.b16 %v1857, %v1856
    %1862 = vmatprep.subr.bf16.mxu0 0
    %1863 = vmatpush1.bf16.msra.mxu0 %v1858
    %1864 = vmatprep.subr.bf16.mxu0 0
    %1865 = vmatpush1.bf16.msra.mxu0 %v1859
    %1866 = vmatprep.subr.bf16.mxu0 0
    %1867 = vmatpush1.bf16.msra.mxu0 0
    %1868 = vmatprep.subr.bf16.mxu0 0
    %1869 = vmatpush1.bf16.msra.mxu0 0
    %1870 = vmatprep.subr.bf16.mxu0 0
    %1871 = vmatpush1.bf16.msra.mxu0 0
    %1872 = vmatprep.subr.bf16.mxu0 0
    %1873 = vmatpush1.bf16.msra.mxu0 0
    %1874 = vmatprep.subr.bf16.mxu0 0
    %1875 = vmatpush1.bf16.msra.mxu0 0
    %1876 = vmatprep.subr.bf16.mxu0 0
    %1877 = vmatpush1.bf16.msra.mxu0 0
    %1878 = vmatprep.subr.bf16.mxu0 0
    %1879 = vmatpush1.bf16.msra.mxu0 0
    %1880 = vmatprep.subr.bf16.mxu0 0
    %1881 = vmatpush1.bf16.msra.mxu0 0
    %1882 = vmatprep.subr.bf16.mxu0 0
    %1883 = vmatpush1.bf16.msra.mxu0 0
    %1884 = vmatprep.subr.bf16.mxu0 0
    %1885 = vmatpush1.bf16.msra.mxu0 0
    %1886 = vmatprep.subr.bf16.mxu0 0
    %1887 = vmatpush1.bf16.msra.mxu0 0
    %1888 = vmatprep.subr.bf16.mxu0 0
    %1889 = vmatpush1.bf16.msra.mxu0 0
    %1890 = vmatprep.subr.bf16.mxu0 0
    %1891 = vmatpush1.bf16.msra.mxu0 0
    %1892 = vmatprep.subr.bf16.mxu0 0
    %1893 = vmatpush1.bf16.msra.mxu0 0
    %1894 = vmatprep.mubr.bf16.mxu0 0
    %1895 = vmatmul.mubr.bf16.gmra.mrb[0].mxu0 %v648
    %v1896 = vpop.f32.mrb[0].mxu0
    %v1897 = vadd.f32 %v1848, %v1896
    %v1898 = vpop.f32.mrb[0].mxu0
    %v1899 = vpop.f32.mrb[0].mxu0
    %v1900 = vadd.f32 %v1848, %v1899
    %v1901 = vpop.f32.mrb[0].mxu0
    %1902 = vmatprep.mubr.bf16.mxu0 0
    %1903 = vmatmul.mubr.bf16.gmra.mrb[0].mxu0 %v651
    %v1904 = vpop.f32.mrb[0].mxu0
    %v1905 = vadd.f32 %v1848, %v1904
    %v1906 = vpop.f32.mrb[0].mxu0
    %v1907 = vpop.f32.mrb[0].mxu0
    %v1908 = vadd.f32 %v1848, %v1907
    %v1909 = vpop.f32.mrb[0].mxu0
    %1910 = vmatprep.mubr.bf16.mxu0 0
    %1911 = vmatmul.mubr.bf16.gmra.mrb[0].mxu0 %v654
    %v1912 = vpop.f32.mrb[0].mxu0
    %v1913 = vadd.f32 %v1848, %v1912
    %v1914 = vpop.f32.mrb[0].mxu0
    %v1915 = vpop.f32.mrb[0].mxu0
    %v1916 = vadd.f32 %v1848, %v1915
    %v1917 = vpop.f32.mrb[0].mxu0
    %1918 = vmatprep.mubr.bf16.mxu0 0
    %1919 = vmatmul.mubr.bf16.gmra.mrb[0].mxu0 %v657
    %v1920 = vpop.f32.mrb[0].mxu0
    %v1921 = vadd.f32 %v1848, %v1920
    %v1922 = vpop.f32.mrb[0].mxu0
    %v1923 = vpop.f32.mrb[0].mxu0
    %v1924 = vadd.f32 %v1848, %v1923
    %v1925 = vpop.f32.mrb[0].mxu0
    %1926 = vdwg.mxu0
    %v1927 = vmax.f32 %v1897, 0.0
    %v1928 = vmax.f32 %v1900, 0.0
    %v1929 = vmax.f32 %v1905, 0.0
    %v1930 = vmax.f32 %v1908, 0.0
    %v1931 = vmax.f32 %v1913, 0.0
    %v1932 = vmax.f32 %v1916, 0.0
    %v1933 = vmax.f32 %v1921, 0.0
    %v1934 = vmax.f32 %v1924, 0.0
    %v1935 = vpack.c.bf16 %v1928, %v1927
    %v1936 = vpack.c.bf16 %v1930, %v1929
    %v1937 = vpack.c.bf16 %v1932, %v1931
    %v1938 = vpack.c.bf16 %v1934, %v1933
    %v1940 = vlaneseq
    %v1941 = vshrl.u32 %v1940, 7
    %v1942 = vsub.s32 0, %v1941
    %v1943 = vrot.slane %v1821, %v1942
    %v1949 = vunpack.c.l.b16 %v1817
    %v1950 = vunpack.c.l.b16 %v1818
    %v1951 = vunpack.c.l.b16 %v1819
    %v1952 = vunpack.c.l.b16 %v1820
    %v1953 = vpack.c.b16 %v1950, %v1949
    %v1954 = vpack.c.b16 %v1952, %v1951
    %v1958 = vsel %vm364, %v1935, 0
    %v1961 = vsel %vm364, %v1936, 0
    %v1964 = vsel %vm364, %v1937, 0
    %v1967 = vsel %vm364, %v1938, 0
    %1969 = vmatprep.subr.bf16.mxu0 0
    %1970 = vmatpush1.bf16.msra.mxu0 %v1953
    %1971 = vmatprep.subr.bf16.mxu0 0
    %1972 = vmatpush1.bf16.msra.mxu0 %v1954
    %1973 = vmatprep.subr.bf16.mxu0 0
    %1974 = vmatpush1.bf16.msra.mxu0 0
    %1975 = vmatprep.subr.bf16.mxu0 0
    %1976 = vmatpush1.bf16.msra.mxu0 0
    %1977 = vmatprep.subr.bf16.mxu0 0
    %1978 = vmatpush1.bf16.msra.mxu0 0
    %1979 = vmatprep.subr.bf16.mxu0 0
    %1980 = vmatpush1.bf16.msra.mxu0 0
    %1981 = vmatprep.subr.bf16.mxu0 0
    %1982 = vmatpush1.bf16.msra.mxu0 0
    %1983 = vmatprep.subr.bf16.mxu0 0
    %1984 = vmatpush1.bf16.msra.mxu0 0
    %1985 = vmatprep.subr.bf16.mxu0 0
    %1986 = vmatpush1.bf16.msra.mxu0 0
    %1987 = vmatprep.subr.bf16.mxu0 0
    %1988 = vmatpush1.bf16.msra.mxu0 0
    %1989 = vmatprep.subr.bf16.mxu0 0
    %1990 = vmatpush1.bf16.msra.mxu0 0
    %1991 = vmatprep.subr.bf16.mxu0 0
    %1992 = vmatpush1.bf16.msra.mxu0 0
    %1993 = vmatprep.subr.bf16.mxu0 0
    %1994 = vmatpush1.bf16.msra.mxu0 0
    %1995 = vmatprep.subr.bf16.mxu0 0
    %1996 = vmatpush1.bf16.msra.mxu0 0
    %1997 = vmatprep.subr.bf16.mxu0 0
    %1998 = vmatpush1.bf16.msra.mxu0 0
    %1999 = vmatprep.subr.bf16.mxu0 0
    %2000 = vmatpush1.bf16.msra.mxu0 0
    %2001 = vmatprep.mubr.bf16.mxu0 0
    %2002 = vmatmul.mubr.bf16.gmra.mrb[0].mxu0 %v1958
    %v2003 = vpop.f32.mrb[0].mxu0
    %v2004 = vadd.f32 %v1943, %v2003
    %v2005 = vpop.f32.mrb[0].mxu0
    %v2006 = vpop.f32.mrb[0].mxu0
    %v2007 = vadd.f32 %v1943, %v2006
    %v2008 = vpop.f32.mrb[0].mxu0
    %2009 = vmatprep.mubr.bf16.mxu0 0
    %2010 = vmatmul.mubr.bf16.gmra.mrb[0].mxu0 %v1961
    %v2011 = vpop.f32.mrb[0].mxu0
    %v2012 = vadd.f32 %v1943, %v2011
    %v2013 = vpop.f32.mrb[0].mxu0
    %v2014 = vpop.f32.mrb[0].mxu0
    %v2015 = vadd.f32 %v1943, %v2014
    %v2016 = vpop.f32.mrb[0].mxu0
    %2017 = vmatprep.mubr.bf16.mxu0 0
    %2018 = vmatmul.mubr.bf16.gmra.mrb[0].mxu0 %v1964
    %v2019 = vpop.f32.mrb[0].mxu0
    %v2020 = vadd.f32 %v1943, %v2019
    %v2021 = vpop.f32.mrb[0].mxu0
    %v2022 = vpop.f32.mrb[0].mxu0
    %v2023 = vadd.f32 %v1943, %v2022
    %v2024 = vpop.f32.mrb[0].mxu0
    %2025 = vmatprep.mubr.bf16.mxu0 0
    %2026 = vmatmul.mubr.bf16.gmra.mrb[0].mxu0 %v1967
    %v2027 = vpop.f32.mrb[0].mxu0
    %v2028 = vadd.f32 %v1943, %v2027
    %v2029 = vpop.f32.mrb[0].mxu0
    %v2030 = vpop.f32.mrb[0].mxu0
    %v2031 = vadd.f32 %v1943, %v2030
    %v2032 = vpop.f32.mrb[0].mxu0
    %2033 = vdwg.mxu0
    %v2034 = vadd.f32 %v2004, %v442
    %v2035 = vadd.f32 %v2007, %v443
    %v2036 = vadd.f32 %v2012, %v444
    %v2037 = vadd.f32 %v2015, %v445
    %v2038 = vadd.f32 %v2020, %v446
    %v2039 = vadd.f32 %v2023, %v447
    %v2040 = vadd.f32 %v2028, %v448
    %v2041 = vadd.f32 %v2031, %v449
    %v2042 = vmax.f32 %v2034, 0.0
    %v2043 = vmax.f32 %v2035, 0.0
    %v2044 = vmax.f32 %v2036, 0.0
    %v2045 = vmax.f32 %v2037, 0.0
    %v2046 = vmax.f32 %v2038, 0.0
    %v2047 = vmax.f32 %v2039, 0.0
    %v2048 = vmax.f32 %v2040, 0.0
    %v2049 = vmax.f32 %v2041, 0.0
    %v2050 = vpack.c.bf16 %v1725, %v1724
    %v2051 = vpack.c.bf16 %v1727, %v1726
    %v2052 = vpack.c.bf16 %v1729, %v1728
    %v2053 = vpack.c.bf16 %v1731, %v1730
    %v2054 = vpack.c.bf16 %v2043, %v2042
    %v2055 = vpack.c.bf16 %v2045, %v2044
    %v2056 = vpack.c.bf16 %v2047, %v2046
    %v2057 = vpack.c.bf16 %v2049, %v2048
    %v2062 = vunpack.c.l.b16 %v1826
    %v2063 = vunpack.c.l.b16 %v1827
    %v2064 = vunpack.c.l.b16 %v1828
    %v2065 = vunpack.c.l.b16 %v1829
    %v2066 = vpack.c.b16 %v2063, %v2062
    %v2067 = vpack.c.b16 %v2065, %v2064
    %v2071 = vsel %vm364, %v2054, 0
    %v2074 = vsel %vm364, %v2055, 0
    %v2077 = vsel %vm364, %v2056, 0
    %v2080 = vsel %vm364, %v2057, 0
    %2082 = vmatprep.subr.bf16.mxu0 0
    %2083 = vmatpush1.bf16.msra.mxu0 %v2066
    %2084 = vmatprep.subr.bf16.mxu0 0
    %2085 = vmatpush1.bf16.msra.mxu0 %v2067
    %2086 = vmatprep.subr.bf16.mxu0 0
    %2087 = vmatpush1.bf16.msra.mxu0 0
    %2088 = vmatprep.subr.bf16.mxu0 0
    %2089 = vmatpush1.bf16.msra.mxu0 0
    %2090 = vmatprep.subr.bf16.mxu0 0
    %2091 = vmatpush1.bf16.msra.mxu0 0
    %2092 = vmatprep.subr.bf16.mxu0 0
    %2093 = vmatpush1.bf16.msra.mxu0 0
    %2094 = vmatprep.subr.bf16.mxu0 0
    %2095 = vmatpush1.bf16.msra.mxu0 0
    %2096 = vmatprep.subr.bf16.mxu0 0
    %2097 = vmatpush1.bf16.msra.mxu0 0
    %2098 = vmatprep.subr.bf16.mxu0 0
    %2099 = vmatpush1.bf16.msra.mxu0 0
    %2100 = vmatprep.subr.bf16.mxu0 0
    %2101 = vmatpush1.bf16.msra.mxu0 0
    %2102 = vmatprep.subr.bf16.mxu0 0
    %2103 = vmatpush1.bf16.msra.mxu0 0
    %2104 = vmatprep.subr.bf16.mxu0 0
    %2105 = vmatpush1.bf16.msra.mxu0 0
    %2106 = vmatprep.subr.bf16.mxu0 0
    %2107 = vmatpush1.bf16.msra.mxu0 0
    %2108 = vmatprep.subr.bf16.mxu0 0
    %2109 = vmatpush1.bf16.msra.mxu0 0
    %2110 = vmatprep.subr.bf16.mxu0 0
    %2111 = vmatpush1.bf16.msra.mxu0 0
    %2112 = vmatprep.subr.bf16.mxu0 0
    %2113 = vmatpush1.bf16.msra.mxu0 0
    %2114 = vmatprep.mubr.bf16.mxu0 0
    %2115 = vmatmul.mubr.bf16.gmra.mrb[0].mxu0 %v2071
    %v2116 = vpop.f32.mrb[0].mxu0
    %v2117 = vadd.f32 0.0, %v2116
    %v2118 = vpop.f32.mrb[0].mxu0
    %v2119 = vpop.f32.mrb[0].mxu0
    %v2120 = vadd.f32 0.0, %v2119
    %v2121 = vpop.f32.mrb[0].mxu0
    %2122 = vmatprep.mubr.bf16.mxu0 0
    %2123 = vmatmul.mubr.bf16.gmra.mrb[0].mxu0 %v2074
    %v2124 = vpop.f32.mrb[0].mxu0
    %v2125 = vadd.f32 0.0, %v2124
    %v2126 = vpop.f32.mrb[0].mxu0
    %v2127 = vpop.f32.mrb[0].mxu0
    %v2128 = vadd.f32 0.0, %v2127
    %v2129 = vpop.f32.mrb[0].mxu0
    %2130 = vmatprep.mubr.bf16.mxu0 0
    %2131 = vmatmul.mubr.bf16.gmra.mrb[0].mxu0 %v2077
    %v2132 = vpop.f32.mrb[0].mxu0
    %v2133 = vadd.f32 0.0, %v2132
    %v2134 = vpop.f32.mrb[0].mxu0
    %v2135 = vpop.f32.mrb[0].mxu0
    %v2136 = vadd.f32 0.0, %v2135
    %v2137 = vpop.f32.mrb[0].mxu0
    %2138 = vmatprep.mubr.bf16.mxu0 0
    %2139 = vmatmul.mubr.bf16.gmra.mrb[0].mxu0 %v2080
    %v2140 = vpop.f32.mrb[0].mxu0
    %v2141 = vadd.f32 0.0, %v2140
    %v2142 = vpop.f32.mrb[0].mxu0
    %v2143 = vpop.f32.mrb[0].mxu0
    %v2144 = vadd.f32 0.0, %v2143
    %v2145 = vpop.f32.mrb[0].mxu0
    %2146 = vdwg.mxu0
    %v2151 = vunpack.c.l.b16 %v1822
    %v2152 = vunpack.c.l.b16 %v1823
    %v2153 = vunpack.c.l.b16 %v1824
    %v2154 = vunpack.c.l.b16 %v1825
    %v2155 = vpack.c.b16 %v2152, %v2151
    %v2156 = vpack.c.b16 %v2154, %v2153
    %v2160 = vsel %vm364, %v2050, 0
    %v2163 = vsel %vm364, %v2051, 0
    %v2166 = vsel %vm364, %v2052, 0
    %v2169 = vsel %vm364, %v2053, 0
    %2171 = vmatprep.subr.bf16.mxu0 0
    %2172 = vmatpush1.bf16.msra.mxu0 %v2155
    %2173 = vmatprep.subr.bf16.mxu0 0
    %2174 = vmatpush1.bf16.msra.mxu0 %v2156
    %2175 = vmatprep.subr.bf16.mxu0 0
    %2176 = vmatpush1.bf16.msra.mxu0 0
    %2177 = vmatprep.subr.bf16.mxu0 0
    %2178 = vmatpush1.bf16.msra.mxu0 0
    %2179 = vmatprep.subr.bf16.mxu0 0
    %2180 = vmatpush1.bf16.msra.mxu0 0
    %2181 = vmatprep.subr.bf16.mxu0 0
    %2182 = vmatpush1.bf16.msra.mxu0 0
    %2183 = vmatprep.subr.bf16.mxu0 0
    %2184 = vmatpush1.bf16.msra.mxu0 0
    %2185 = vmatprep.subr.bf16.mxu0 0
    %2186 = vmatpush1.bf16.msra.mxu0 0
    %2187 = vmatprep.subr.bf16.mxu0 0
    %2188 = vmatpush1.bf16.msra.mxu0 0
    %2189 = vmatprep.subr.bf16.mxu0 0
    %2190 = vmatpush1.bf16.msra.mxu0 0
    %2191 = vmatprep.subr.bf16.mxu0 0
    %2192 = vmatpush1.bf16.msra.mxu0 0
    %2193 = vmatprep.subr.bf16.mxu0 0
    %2194 = vmatpush1.bf16.msra.mxu0 0
    %2195 = vmatprep.subr.bf16.mxu0 0
    %2196 = vmatpush1.bf16.msra.mxu0 0
    %2197 = vmatprep.subr.bf16.mxu0 0
    %2198 = vmatpush1.bf16.msra.mxu0 0
    %2199 = vmatprep.subr.bf16.mxu0 0
    %2200 = vmatpush1.bf16.msra.mxu0 0
    %2201 = vmatprep.subr.bf16.mxu0 0
    %2202 = vmatpush1.bf16.msra.mxu0 0
    %2203 = vmatprep.mubr.bf16.mxu0 0
    %2204 = vmatmul.mubr.bf16.gmra.mrb[0].mxu0 %v2160
    %v2205 = vpop.f32.mrb[0].mxu0
    %v2206 = vadd.f32 %v2117, %v2205
    %v2207 = vpop.f32.mrb[0].mxu0
    %v2208 = vpop.f32.mrb[0].mxu0
    %v2209 = vadd.f32 %v2120, %v2208
    %v2210 = vpop.f32.mrb[0].mxu0
    %2211 = vmatprep.mubr.bf16.mxu0 0
    %2212 = vmatmul.mubr.bf16.gmra.mrb[0].mxu0 %v2163
    %v2213 = vpop.f32.mrb[0].mxu0
    %v2214 = vadd.f32 %v2125, %v2213
    %v2215 = vpop.f32.mrb[0].mxu0
    %v2216 = vpop.f32.mrb[0].mxu0
    %v2217 = vadd.f32 %v2128, %v2216
    %v2218 = vpop.f32.mrb[0].mxu0
    %2219 = vmatprep.mubr.bf16.mxu0 0
    %2220 = vmatmul.mubr.bf16.gmra.mrb[0].mxu0 %v2166
    %v2221 = vpop.f32.mrb[0].mxu0
    %v2222 = vadd.f32 %v2133, %v2221
    %v2223 = vpop.f32.mrb[0].mxu0
    %v2224 = vpop.f32.mrb[0].mxu0
    %v2225 = vadd.f32 %v2136, %v2224
    %v2226 = vpop.f32.mrb[0].mxu0
    %2227 = vmatprep.mubr.bf16.mxu0 0
    %2228 = vmatmul.mubr.bf16.gmra.mrb[0].mxu0 %v2169
    %v2229 = vpop.f32.mrb[0].mxu0
    %v2230 = vadd.f32 %v2141, %v2229
    %v2231 = vpop.f32.mrb[0].mxu0
    %v2232 = vpop.f32.mrb[0].mxu0
    %v2233 = vadd.f32 %v2144, %v2232
    %v2234 = vpop.f32.mrb[0].mxu0
    %2235 = vdwg.mxu0
    %v2237 = vlaneseq
    %v2238 = vshrl.u32 %v2237, 7
    %v2239 = vsub.s32 0, %v2238
    %v2240 = vrot.slane %v1830, %v2239
    %v2242 = vadd.f32 %v2206, %v2240
    %v2243 = vadd.f32 %v2209, %v2240
    %v2244 = vadd.f32 %v2214, %v2240
    %v2245 = vadd.f32 %v2217, %v2240
    %v2246 = vadd.f32 %v2222, %v2240
    %v2247 = vadd.f32 %v2225, %v2240
    %v2248 = vadd.f32 %v2230, %v2240
    %v2249 = vadd.f32 %v2233, %v2240
    %v2250 = vmax.f32 %v2242, 0.0
    %v2251 = vmax.f32 %v2243, 0.0
    %v2252 = vmax.f32 %v2244, 0.0
    %v2253 = vmax.f32 %v2245, 0.0
    %v2254 = vmax.f32 %v2246, 0.0
    %v2255 = vmax.f32 %v2247, 0.0
    %v2256 = vmax.f32 %v2248, 0.0
    %v2257 = vmax.f32 %v2249, 0.0
    %v2258 = vpack.c.bf16 %v2251, %v2250
    %v2259 = vpack.c.bf16 %v2253, %v2252
    %v2260 = vpack.c.bf16 %v2255, %v2254
    %v2261 = vpack.c.bf16 %v2257, %v2256
    %v2266 = vunpack.c.l.b16 %v1835
    %v2267 = vunpack.c.l.b16 %v1836
    %v2268 = vunpack.c.l.b16 %v1837
    %v2269 = vunpack.c.l.b16 %v1838
    %v2270 = vpack.c.b16 %v2267, %v2266
    %v2271 = vpack.c.b16 %v2269, %v2268
    %2274 = vmatprep.subr.bf16.mxu0 0
    %2275 = vmatpush1.bf16.msra.mxu0 %v2270
    %2276 = vmatprep.subr.bf16.mxu0 0
    %2277 = vmatpush1.bf16.msra.mxu0 %v2271
    %2278 = vmatprep.subr.bf16.mxu0 0
    %2279 = vmatpush1.bf16.msra.mxu0 0
    %2280 = vmatprep.subr.bf16.mxu0 0
    %2281 = vmatpush1.bf16.msra.mxu0 0
    %2282 = vmatprep.subr.bf16.mxu0 0
    %2283 = vmatpush1.bf16.msra.mxu0 0
    %2284 = vmatprep.subr.bf16.mxu0 0
    %2285 = vmatpush1.bf16.msra.mxu0 0
    %2286 = vmatprep.subr.bf16.mxu0 0
    %2287 = vmatpush1.bf16.msra.mxu0 0
    %2288 = vmatprep.subr.bf16.mxu0 0
    %2289 = vmatpush1.bf16.msra.mxu0 0
    %2290 = vmatprep.subr.bf16.mxu0 0
    %2291 = vmatpush1.bf16.msra.mxu0 0
    %2292 = vmatprep.subr.bf16.mxu0 0
    %2293 = vmatpush1.bf16.msra.mxu0 0
    %2294 = vmatprep.subr.bf16.mxu0 0
    %2295 = vmatpush1.bf16.msra.mxu0 0
    %2296 = vmatprep.subr.bf16.mxu0 0
    %2297 = vmatpush1.bf16.msra.mxu0 0
    %2298 = vmatprep.subr.bf16.mxu0 0
    %2299 = vmatpush1.bf16.msra.mxu0 0
    %2300 = vmatprep.subr.bf16.mxu0 0
    %2301 = vmatpush1.bf16.msra.mxu0 0
    %2302 = vmatprep.subr.bf16.mxu0 0
    %2303 = vmatpush1.bf16.msra.mxu0 0
    %2304 = vmatprep.subr.bf16.mxu0 0
    %2305 = vmatpush1.bf16.msra.mxu0 0
    %2306 = vmatprep.mubr.bf16.mxu0 0
    %2307 = vmatmul.mubr.bf16.gmra.mrb[0].mxu0 %v2160
    %v2308 = vpop.f32.mrb[0].mxu0
    %v2309 = vadd.f32 0.0, %v2308
    %v2310 = vpop.f32.mrb[0].mxu0
    %v2311 = vpop.f32.mrb[0].mxu0
    %v2312 = vadd.f32 0.0, %v2311
    %v2313 = vpop.f32.mrb[0].mxu0
    %2314 = vmatprep.mubr.bf16.mxu0 0
    %2315 = vmatmul.mubr.bf16.gmra.mrb[0].mxu0 %v2163
    %v2316 = vpop.f32.mrb[0].mxu0
    %v2317 = vadd.f32 0.0, %v2316
    %v2318 = vpop.f32.mrb[0].mxu0
    %v2319 = vpop.f32.mrb[0].mxu0
    %v2320 = vadd.f32 0.0, %v2319
    %v2321 = vpop.f32.mrb[0].mxu0
    %2322 = vmatprep.mubr.bf16.mxu0 0
    %2323 = vmatmul.mubr.bf16.gmra.mrb[0].mxu0 %v2166
    %v2324 = vpop.f32.mrb[0].mxu0
    %v2325 = vadd.f32 0.0, %v2324
    %v2326 = vpop.f32.mrb[0].mxu0
    %v2327 = vpop.f32.mrb[0].mxu0
    %v2328 = vadd.f32 0.0, %v2327
    %v2329 = vpop.f32.mrb[0].mxu0
    %2330 = vmatprep.mubr.bf16.mxu0 0
    %2331 = vmatmul.mubr.bf16.gmra.mrb[0].mxu0 %v2169
    %v2332 = vpop.f32.mrb[0].mxu0
    %v2333 = vadd.f32 0.0, %v2332
    %v2334 = vpop.f32.mrb[0].mxu0
    %v2335 = vpop.f32.mrb[0].mxu0
    %v2336 = vadd.f32 0.0, %v2335
    %v2337 = vpop.f32.mrb[0].mxu0
    %2338 = vdwg.mxu0
    %v2343 = vunpack.c.l.b16 %v1831
    %v2344 = vunpack.c.l.b16 %v1832
    %v2345 = vunpack.c.l.b16 %v1833
    %v2346 = vunpack.c.l.b16 %v1834
    %v2347 = vpack.c.b16 %v2344, %v2343
    %v2348 = vpack.c.b16 %v2346, %v2345
    %v2352 = vsel %vm364, %v2258, 0
    %v2355 = vsel %vm364, %v2259, 0
    %v2358 = vsel %vm364, %v2260, 0
    %v2361 = vsel %vm364, %v2261, 0
    %2363 = vmatprep.subr.bf16.mxu0 0
    %2364 = vmatpush1.bf16.msra.mxu0 %v2347
    %2365 = vmatprep.subr.bf16.mxu0 0
    %2366 = vmatpush1.bf16.msra.mxu0 %v2348
    %2367 = vmatprep.subr.bf16.mxu0 0
    %2368 = vmatpush1.bf16.msra.mxu0 0
    %2369 = vmatprep.subr.bf16.mxu0 0
    %2370 = vmatpush1.bf16.msra.mxu0 0
    %2371 = vmatprep.subr.bf16.mxu0 0
    %2372 = vmatpush1.bf16.msra.mxu0 0
    %2373 = vmatprep.subr.bf16.mxu0 0
    %2374 = vmatpush1.bf16.msra.mxu0 0
    %2375 = vmatprep.subr.bf16.mxu0 0
    %2376 = vmatpush1.bf16.msra.mxu0 0
    %2377 = vmatprep.subr.bf16.mxu0 0
    %2378 = vmatpush1.bf16.msra.mxu0 0
    %2379 = vmatprep.subr.bf16.mxu0 0
    %2380 = vmatpush1.bf16.msra.mxu0 0
    %2381 = vmatprep.subr.bf16.mxu0 0
    %2382 = vmatpush1.bf16.msra.mxu0 0
    %2383 = vmatprep.subr.bf16.mxu0 0
    %2384 = vmatpush1.bf16.msra.mxu0 0
    %2385 = vmatprep.subr.bf16.mxu0 0
    %2386 = vmatpush1.bf16.msra.mxu0 0
    %2387 = vmatprep.subr.bf16.mxu0 0
    %2388 = vmatpush1.bf16.msra.mxu0 0
    %2389 = vmatprep.subr.bf16.mxu0 0
    %2390 = vmatpush1.bf16.msra.mxu0 0
    %2391 = vmatprep.subr.bf16.mxu0 0
    %2392 = vmatpush1.bf16.msra.mxu0 0
    %2393 = vmatprep.subr.bf16.mxu0 0
    %2394 = vmatpush1.bf16.msra.mxu0 0
    %2395 = vmatprep.mubr.bf16.mxu0 0
    %2396 = vmatmul.mubr.bf16.gmra.mrb[0].mxu0 %v2352
    %v2397 = vpop.f32.mrb[0].mxu0
    %v2398 = vadd.f32 %v2309, %v2397
    %v2399 = vpop.f32.mrb[0].mxu0
    %v2400 = vpop.f32.mrb[0].mxu0
    %v2401 = vadd.f32 %v2312, %v2400
    %v2402 = vpop.f32.mrb[0].mxu0
    %2403 = vmatprep.mubr.bf16.mxu0 0
    %2404 = vmatmul.mubr.bf16.gmra.mrb[0].mxu0 %v2355
    %v2405 = vpop.f32.mrb[0].mxu0
    %v2406 = vadd.f32 %v2317, %v2405
    %v2407 = vpop.f32.mrb[0].mxu0
    %v2408 = vpop.f32.mrb[0].mxu0
    %v2409 = vadd.f32 %v2320, %v2408
    %v2410 = vpop.f32.mrb[0].mxu0
    %2411 = vmatprep.mubr.bf16.mxu0 0
    %2412 = vmatmul.mubr.bf16.gmra.mrb[0].mxu0 %v2358
    %v2413 = vpop.f32.mrb[0].mxu0
    %v2414 = vadd.f32 %v2325, %v2413
    %v2415 = vpop.f32.mrb[0].mxu0
    %v2416 = vpop.f32.mrb[0].mxu0
    %v2417 = vadd.f32 %v2328, %v2416
    %v2418 = vpop.f32.mrb[0].mxu0
    %2419 = vmatprep.mubr.bf16.mxu0 0
    %2420 = vmatmul.mubr.bf16.gmra.mrb[0].mxu0 %v2361
    %v2421 = vpop.f32.mrb[0].mxu0
    %v2422 = vadd.f32 %v2333, %v2421
    %v2423 = vpop.f32.mrb[0].mxu0
    %v2424 = vpop.f32.mrb[0].mxu0
    %v2425 = vadd.f32 %v2336, %v2424
    %v2426 = vpop.f32.mrb[0].mxu0
    %2427 = vdwg.mxu0
    %v2432 = vunpack.c.l.b16 %v1839
    %v2433 = vunpack.c.l.b16 %v1840
    %v2434 = vunpack.c.l.b16 %v1841
    %v2435 = vunpack.c.l.b16 %v1842
    %v2436 = vpack.c.b16 %v2433, %v2432
    %v2437 = vpack.c.b16 %v2435, %v2434
    %2440 = vmatprep.subr.bf16.mxu0 0
    %2441 = vmatpush1.bf16.msra.mxu0 %v2436
    %2442 = vmatprep.subr.bf16.mxu0 0
    %2443 = vmatpush1.bf16.msra.mxu0 %v2437
    %2444 = vmatprep.subr.bf16.mxu0 0
    %2445 = vmatpush1.bf16.msra.mxu0 0
    %2446 = vmatprep.subr.bf16.mxu0 0
    %2447 = vmatpush1.bf16.msra.mxu0 0
    %2448 = vmatprep.subr.bf16.mxu0 0
    %2449 = vmatpush1.bf16.msra.mxu0 0
    %2450 = vmatprep.subr.bf16.mxu0 0
    %2451 = vmatpush1.bf16.msra.mxu0 0
    %2452 = vmatprep.subr.bf16.mxu0 0
    %2453 = vmatpush1.bf16.msra.mxu0 0
    %2454 = vmatprep.subr.bf16.mxu0 0
    %2455 = vmatpush1.bf16.msra.mxu0 0
    %2456 = vmatprep.subr.bf16.mxu0 0
    %2457 = vmatpush1.bf16.msra.mxu0 0
    %2458 = vmatprep.subr.bf16.mxu0 0
    %2459 = vmatpush1.bf16.msra.mxu0 0
    %2460 = vmatprep.subr.bf16.mxu0 0
    %2461 = vmatpush1.bf16.msra.mxu0 0
    %2462 = vmatprep.subr.bf16.mxu0 0
    %2463 = vmatpush1.bf16.msra.mxu0 0
    %2464 = vmatprep.subr.bf16.mxu0 0
    %2465 = vmatpush1.bf16.msra.mxu0 0
    %2466 = vmatprep.subr.bf16.mxu0 0
    %2467 = vmatpush1.bf16.msra.mxu0 0
    %2468 = vmatprep.subr.bf16.mxu0 0
    %2469 = vmatpush1.bf16.msra.mxu0 0
    %2470 = vmatprep.subr.bf16.mxu0 0
    %2471 = vmatpush1.bf16.msra.mxu0 0
    %2472 = vmatprep.mubr.bf16.mxu0 0
    %2473 = vmatmul.mubr.bf16.gmra.mrb[0].mxu0 %v2071
    %v2474 = vpop.f32.mrb[0].mxu0
    %v2475 = vadd.f32 0.0, %v2474
    %v2476 = vpop.f32.mrb[0].mxu0
    %v2477 = vpop.f32.mrb[0].mxu0
    %v2478 = vadd.f32 0.0, %v2477
    %v2479 = vpop.f32.mrb[0].mxu0
    %2480 = vmatprep.mubr.bf16.mxu0 0
    %2481 = vmatmul.mubr.bf16.gmra.mrb[0].mxu0 %v2074
    %v2482 = vpop.f32.mrb[0].mxu0
    %v2483 = vadd.f32 0.0, %v2482
    %v2484 = vpop.f32.mrb[0].mxu0
    %v2485 = vpop.f32.mrb[0].mxu0
    %v2486 = vadd.f32 0.0, %v2485
    %v2487 = vpop.f32.mrb[0].mxu0
    %2488 = vmatprep.mubr.bf16.mxu0 0
    %2489 = vmatmul.mubr.bf16.gmra.mrb[0].mxu0 %v2077
    %v2490 = vpop.f32.mrb[0].mxu0
    %v2491 = vadd.f32 0.0, %v2490
    %v2492 = vpop.f32.mrb[0].mxu0
    %v2493 = vpop.f32.mrb[0].mxu0
    %v2494 = vadd.f32 0.0, %v2493
    %v2495 = vpop.f32.mrb[0].mxu0
    %2496 = vmatprep.mubr.bf16.mxu0 0
    %2497 = vmatmul.mubr.bf16.gmra.mrb[0].mxu0 %v2080
    %v2498 = vpop.f32.mrb[0].mxu0
    %v2499 = vadd.f32 0.0, %v2498
    %v2500 = vpop.f32.mrb[0].mxu0
    %v2501 = vpop.f32.mrb[0].mxu0
    %v2502 = vadd.f32 0.0, %v2501
    %v2503 = vpop.f32.mrb[0].mxu0
    %2504 = vdwg.mxu0
    %v2505 = vadd.f32 %v2398, %v2475
    %v2506 = vadd.f32 %v2401, %v2478
    %v2507 = vadd.f32 %v2406, %v2483
    %v2508 = vadd.f32 %v2409, %v2486
    %v2509 = vadd.f32 %v2414, %v2491
    %v2510 = vadd.f32 %v2417, %v2494
    %v2511 = vadd.f32 %v2422, %v2499
    %v2512 = vadd.f32 %v2425, %v2502
    %v2514 = vlaneseq
    %v2515 = vshrl.u32 %v2514, 7
    %v2516 = vsub.s32 0, %v2515
    %v2517 = vrot.slane %v1843, %v2516
    %v2519 = vadd.f32 %v2505, %v2517
    %v2520 = vadd.f32 %v2506, %v2517
    %v2521 = vadd.f32 %v2507, %v2517
    %v2522 = vadd.f32 %v2508, %v2517
    %v2523 = vadd.f32 %v2509, %v2517
    %v2524 = vadd.f32 %v2510, %v2517
    %v2525 = vadd.f32 %v2511, %v2517
    %v2526 = vadd.f32 %v2512, %v2517
    %v2527 = vmax.f32 %v2519, 0.0
    %v2528 = vmax.f32 %v2520, 0.0
    %v2529 = vmax.f32 %v2521, 0.0
    %v2530 = vmax.f32 %v2522, 0.0
    %v2531 = vmax.f32 %v2523, 0.0
    %v2532 = vmax.f32 %v2524, 0.0
    %v2533 = vmax.f32 %v2525, 0.0
    %v2534 = vmax.f32 %v2526, 0.0
    %v2535 = vpack.c.bf16 %v532, %v531
    %v2536 = vpack.c.bf16 %v534, %v533
    %v2537 = vpack.c.bf16 %v536, %v535
    %v2538 = vpack.c.bf16 %v538, %v537
    %v2540 = vsel %vm364, %v2535, 0
    %v2543 = vsel %vm364, %v2536, 0
    %v2546 = vsel %vm364, %v2537, 0
    %v2549 = vsel %vm364, %v2538, 0
    %2551 = vmatprep.subr.bf16.mxu0 0
    %2552 = vmatpush1.bf16.msra.mxu0 %v1858
    %2553 = vmatprep.subr.bf16.mxu0 0
    %2554 = vmatpush1.bf16.msra.mxu0 %v1859
    %2555 = vmatprep.subr.bf16.mxu0 0
    %2556 = vmatpush1.bf16.msra.mxu0 0
    %2557 = vmatprep.subr.bf16.mxu0 0
    %2558 = vmatpush1.bf16.msra.mxu0 0
    %2559 = vmatprep.subr.bf16.mxu0 0
    %2560 = vmatpush1.bf16.msra.mxu0 0
    %2561 = vmatprep.subr.bf16.mxu0 0
    %2562 = vmatpush1.bf16.msra.mxu0 0
    %2563 = vmatprep.subr.bf16.mxu0 0
    %2564 = vmatpush1.bf16.msra.mxu0 0
    %2565 = vmatprep.subr.bf16.mxu0 0
    %2566 = vmatpush1.bf16.msra.mxu0 0
    %2567 = vmatprep.subr.bf16.mxu0 0
    %2568 = vmatpush1.bf16.msra.mxu0 0
    %2569 = vmatprep.subr.bf16.mxu0 0
    %2570 = vmatpush1.bf16.msra.mxu0 0
    %2571 = vmatprep.subr.bf16.mxu0 0
    %2572 = vmatpush1.bf16.msra.mxu0 0
    %2573 = vmatprep.subr.bf16.mxu0 0
    %2574 = vmatpush1.bf16.msra.mxu0 0
    %2575 = vmatprep.subr.bf16.mxu0 0
    %2576 = vmatpush1.bf16.msra.mxu0 0
    %2577 = vmatprep.subr.bf16.mxu0 0
    %2578 = vmatpush1.bf16.msra.mxu0 0
    %2579 = vmatprep.subr.bf16.mxu0 0
    %2580 = vmatpush1.bf16.msra.mxu0 0
    %2581 = vmatprep.subr.bf16.mxu0 0
    %2582 = vmatpush1.bf16.msra.mxu0 0
    %2583 = vmatprep.mubr.bf16.mxu0 0
    %2584 = vmatmul.mubr.bf16.gmra.mrb[0].mxu0 %v2540
    %v2585 = vpop.f32.mrb[0].mxu0
    %v2586 = vadd.f32 %v1848, %v2585
    %v2587 = vpop.f32.mrb[0].mxu0
    %v2588 = vpop.f32.mrb[0].mxu0
    %v2589 = vadd.f32 %v1848, %v2588
    %v2590 = vpop.f32.mrb[0].mxu0
    %2591 = vmatprep.mubr.bf16.mxu0 0
    %2592 = vmatmul.mubr.bf16.gmra.mrb[0].mxu0 %v2543
    %v2593 = vpop.f32.mrb[0].mxu0
    %v2594 = vadd.f32 %v1848, %v2593
    %v2595 = vpop.f32.mrb[0].mxu0
    %v2596 = vpop.f32.mrb[0].mxu0
    %v2597 = vadd.f32 %v1848, %v2596
    %v2598 = vpop.f32.mrb[0].mxu0
    %2599 = vmatprep.mubr.bf16.mxu0 0
    %2600 = vmatmul.mubr.bf16.gmra.mrb[0].mxu0 %v2546
    %v2601 = vpop.f32.mrb[0].mxu0
    %v2602 = vadd.f32 %v1848, %v2601
    %v2603 = vpop.f32.mrb[0].mxu0
    %v2604 = vpop.f32.mrb[0].mxu0
    %v2605 = vadd.f32 %v1848, %v2604
    %v2606 = vpop.f32.mrb[0].mxu0
    %2607 = vmatprep.mubr.bf16.mxu0 0
    %2608 = vmatmul.mubr.bf16.gmra.mrb[0].mxu0 %v2549
    %v2609 = vpop.f32.mrb[0].mxu0
    %v2610 = vadd.f32 %v1848, %v2609
    %v2611 = vpop.f32.mrb[0].mxu0
    %v2612 = vpop.f32.mrb[0].mxu0
    %v2613 = vadd.f32 %v1848, %v2612
    %v2614 = vpop.f32.mrb[0].mxu0
    %2615 = vdwg.mxu0
    %v2616 = vmax.f32 %v2586, 0.0
    %v2617 = vmax.f32 %v2589, 0.0
    %v2618 = vmax.f32 %v2594, 0.0
    %v2619 = vmax.f32 %v2597, 0.0
    %v2620 = vmax.f32 %v2602, 0.0
    %v2621 = vmax.f32 %v2605, 0.0
    %v2622 = vmax.f32 %v2610, 0.0
    %v2623 = vmax.f32 %v2613, 0.0
    %v2624 = vpack.c.bf16 %v2617, %v2616
    %v2625 = vpack.c.bf16 %v2619, %v2618
    %v2626 = vpack.c.bf16 %v2621, %v2620
    %v2627 = vpack.c.bf16 %v2623, %v2622
    %v2629 = vsel %vm364, %v2624, 0
    %v2632 = vsel %vm364, %v2625, 0
    %v2635 = vsel %vm364, %v2626, 0
    %v2638 = vsel %vm364, %v2627, 0
    %2640 = vmatprep.subr.bf16.mxu0 0
    %2641 = vmatpush1.bf16.msra.mxu0 %v1953
    %2642 = vmatprep.subr.bf16.mxu0 0
    %2643 = vmatpush1.bf16.msra.mxu0 %v1954
    %2644 = vmatprep.subr.bf16.mxu0 0
    %2645 = vmatpush1.bf16.msra.mxu0 0
    %2646 = vmatprep.subr.bf16.mxu0 0
    %2647 = vmatpush1.bf16.msra.mxu0 0
    %2648 = vmatprep.subr.bf16.mxu0 0
    %2649 = vmatpush1.bf16.msra.mxu0 0
    %2650 = vmatprep.subr.bf16.mxu0 0
    %2651 = vmatpush1.bf16.msra.mxu0 0
    %2652 = vmatprep.subr.bf16.mxu0 0
    %2653 = vmatpush1.bf16.msra.mxu0 0
    %2654 = vmatprep.subr.bf16.mxu0 0
    %2655 = vmatpush1.bf16.msra.mxu0 0
    %2656 = vmatprep.subr.bf16.mxu0 0
    %2657 = vmatpush1.bf16.msra.mxu0 0
    %2658 = vmatprep.subr.bf16.mxu0 0
    %2659 = vmatpush1.bf16.msra.mxu0 0
    %2660 = vmatprep.subr.bf16.mxu0 0
    %2661 = vmatpush1.bf16.msra.mxu0 0
    %2662 = vmatprep.subr.bf16.mxu0 0
    %2663 = vmatpush1.bf16.msra.mxu0 0
    %2664 = vmatprep.subr.bf16.mxu0 0
    %2665 = vmatpush1.bf16.msra.mxu0 0
    %2666 = vmatprep.subr.bf16.mxu0 0
    %2667 = vmatpush1.bf16.msra.mxu0 0
    %2668 = vmatprep.subr.bf16.mxu0 0
    %2669 = vmatpush1.bf16.msra.mxu0 0
    %2670 = vmatprep.subr.bf16.mxu0 0
    %2671 = vmatpush1.bf16.msra.mxu0 0
    %2672 = vmatprep.mubr.bf16.mxu0 0
    %2673 = vmatmul.mubr.bf16.gmra.mrb[0].mxu0 %v2629
    %v2674 = vpop.f32.mrb[0].mxu0
    %v2675 = vadd.f32 %v1943, %v2674
    %v2676 = vpop.f32.mrb[0].mxu0
    %v2677 = vpop.f32.mrb[0].mxu0
    %v2678 = vadd.f32 %v1943, %v2677
    %v2679 = vpop.f32.mrb[0].mxu0
    %2680 = vmatprep.mubr.bf16.mxu0 0
    %2681 = vmatmul.mubr.bf16.gmra.mrb[0].mxu0 %v2632
    %v2682 = vpop.f32.mrb[0].mxu0
    %v2683 = vadd.f32 %v1943, %v2682
    %v2684 = vpop.f32.mrb[0].mxu0
    %v2685 = vpop.f32.mrb[0].mxu0
    %v2686 = vadd.f32 %v1943, %v2685
    %v2687 = vpop.f32.mrb[0].mxu0
    %2688 = vmatprep.mubr.bf16.mxu0 0
    %2689 = vmatmul.mubr.bf16.gmra.mrb[0].mxu0 %v2635
    %v2690 = vpop.f32.mrb[0].mxu0
    %v2691 = vadd.f32 %v1943, %v2690
    %v2692 = vpop.f32.mrb[0].mxu0
    %v2693 = vpop.f32.mrb[0].mxu0
    %v2694 = vadd.f32 %v1943, %v2693
    %v2695 = vpop.f32.mrb[0].mxu0
    %2696 = vmatprep.mubr.bf16.mxu0 0
    %2697 = vmatmul.mubr.bf16.gmra.mrb[0].mxu0 %v2638
    %v2698 = vpop.f32.mrb[0].mxu0
    %v2699 = vadd.f32 %v1943, %v2698
    %v2700 = vpop.f32.mrb[0].mxu0
    %v2701 = vpop.f32.mrb[0].mxu0
    %v2702 = vadd.f32 %v1943, %v2701
    %v2703 = vpop.f32.mrb[0].mxu0
    %2704 = vdwg.mxu0
    %v2705 = vadd.f32 %v2675, %v531
    %v2706 = vadd.f32 %v2678, %v532
    %v2707 = vadd.f32 %v2683, %v533
    %v2708 = vadd.f32 %v2686, %v534
    %v2709 = vadd.f32 %v2691, %v535
    %v2710 = vadd.f32 %v2694, %v536
    %v2711 = vadd.f32 %v2699, %v537
    %v2712 = vadd.f32 %v2702, %v538
    %v2713 = vmax.f32 %v2705, 0.0
    %v2714 = vmax.f32 %v2706, 0.0
    %v2715 = vmax.f32 %v2707, 0.0
    %v2716 = vmax.f32 %v2708, 0.0
    %v2717 = vmax.f32 %v2709, 0.0
    %v2718 = vmax.f32 %v2710, 0.0
    %v2719 = vmax.f32 %v2711, 0.0
    %v2720 = vmax.f32 %v2712, 0.0
    %v2721 = vpack.c.bf16 %v2714, %v2713
    %v2722 = vpack.c.bf16 %v2716, %v2715
    %v2723 = vpack.c.bf16 %v2718, %v2717
    %v2724 = vpack.c.bf16 %v2720, %v2719
    %v2726 = vsel %vm364, %v2721, 0
    %v2729 = vsel %vm364, %v2722, 0
    %v2732 = vsel %vm364, %v2723, 0
    %v2735 = vsel %vm364, %v2724, 0
    %2737 = vmatprep.subr.bf16.mxu0 0
    %2738 = vmatpush1.bf16.msra.mxu0 %v2066
    %2739 = vmatprep.subr.bf16.mxu0 0
    %2740 = vmatpush1.bf16.msra.mxu0 %v2067
    %2741 = vmatprep.subr.bf16.mxu0 0
    %2742 = vmatpush1.bf16.msra.mxu0 0
    %2743 = vmatprep.subr.bf16.mxu0 0
    %2744 = vmatpush1.bf16.msra.mxu0 0
    %2745 = vmatprep.subr.bf16.mxu0 0
    %2746 = vmatpush1.bf16.msra.mxu0 0
    %2747 = vmatprep.subr.bf16.mxu0 0
    %2748 = vmatpush1.bf16.msra.mxu0 0
    %2749 = vmatprep.subr.bf16.mxu0 0
    %2750 = vmatpush1.bf16.msra.mxu0 0
    %2751 = vmatprep.subr.bf16.mxu0 0
    %2752 = vmatpush1.bf16.msra.mxu0 0
    %2753 = vmatprep.subr.bf16.mxu0 0
    %2754 = vmatpush1.bf16.msra.mxu0 0
    %2755 = vmatprep.subr.bf16.mxu0 0
    %2756 = vmatpush1.bf16.msra.mxu0 0
    %2757 = vmatprep.subr.bf16.mxu0 0
    %2758 = vmatpush1.bf16.msra.mxu0 0
    %2759 = vmatprep.subr.bf16.mxu0 0
    %2760 = vmatpush1.bf16.msra.mxu0 0
    %2761 = vmatprep.subr.bf16.mxu0 0
    %2762 = vmatpush1.bf16.msra.mxu0 0
    %2763 = vmatprep.subr.bf16.mxu0 0
    %2764 = vmatpush1.bf16.msra.mxu0 0
    %2765 = vmatprep.subr.bf16.mxu0 0
    %2766 = vmatpush1.bf16.msra.mxu0 0
    %2767 = vmatprep.subr.bf16.mxu0 0
    %2768 = vmatpush1.bf16.msra.mxu0 0
    %2769 = vmatprep.mubr.bf16.mxu0 0
    %2770 = vmatmul.mubr.bf16.gmra.mrb[0].mxu0 %v2726
    %v2771 = vpop.f32.mrb[0].mxu0
    %v2772 = vadd.f32 0.0, %v2771
    %v2773 = vpop.f32.mrb[0].mxu0
    %v2774 = vpop.f32.mrb[0].mxu0
    %v2775 = vadd.f32 0.0, %v2774
    %v2776 = vpop.f32.mrb[0].mxu0
    %2777 = vmatprep.mubr.bf16.mxu0 0
    %2778 = vmatmul.mubr.bf16.gmra.mrb[0].mxu0 %v2729
    %v2779 = vpop.f32.mrb[0].mxu0
    %v2780 = vadd.f32 0.0, %v2779
    %v2781 = vpop.f32.mrb[0].mxu0
    %v2782 = vpop.f32.mrb[0].mxu0
    %v2783 = vadd.f32 0.0, %v2782
    %v2784 = vpop.f32.mrb[0].mxu0
    %2785 = vmatprep.mubr.bf16.mxu0 0
    %2786 = vmatmul.mubr.bf16.gmra.mrb[0].mxu0 %v2732
    %v2787 = vpop.f32.mrb[0].mxu0
    %v2788 = vadd.f32 0.0, %v2787
    %v2789 = vpop.f32.mrb[0].mxu0
    %v2790 = vpop.f32.mrb[0].mxu0
    %v2791 = vadd.f32 0.0, %v2790
    %v2792 = vpop.f32.mrb[0].mxu0
    %2793 = vmatprep.mubr.bf16.mxu0 0
    %2794 = vmatmul.mubr.bf16.gmra.mrb[0].mxu0 %v2735
    %v2795 = vpop.f32.mrb[0].mxu0
    %v2796 = vadd.f32 0.0, %v2795
    %v2797 = vpop.f32.mrb[0].mxu0
    %v2798 = vpop.f32.mrb[0].mxu0
    %v2799 = vadd.f32 0.0, %v2798
    %v2800 = vpop.f32.mrb[0].mxu0
    %2801 = vdwg.mxu0
    %2802 = vmatprep.subr.bf16.mxu0 0
    %2803 = vmatpush1.bf16.msra.mxu0 %v2155
    %2804 = vmatprep.subr.bf16.mxu0 0
    %2805 = vmatpush1.bf16.msra.mxu0 %v2156
    %2806 = vmatprep.subr.bf16.mxu0 0
    %2807 = vmatpush1.bf16.msra.mxu0 0
    %2808 = vmatprep.subr.bf16.mxu0 0
    %2809 = vmatpush1.bf16.msra.mxu0 0
    %2810 = vmatprep.subr.bf16.mxu0 0
    %2811 = vmatpush1.bf16.msra.mxu0 0
    %2812 = vmatprep.subr.bf16.mxu0 0
    %2813 = vmatpush1.bf16.msra.mxu0 0
    %2814 = vmatprep.subr.bf16.mxu0 0
    %2815 = vmatpush1.bf16.msra.mxu0 0
    %2816 = vmatprep.subr.bf16.mxu0 0
    %2817 = vmatpush1.bf16.msra.mxu0 0
    %2818 = vmatprep.subr.bf16.mxu0 0
    %2819 = vmatpush1.bf16.msra.mxu0 0
    %2820 = vmatprep.subr.bf16.mxu0 0
    %2821 = vmatpush1.bf16.msra.mxu0 0
    %2822 = vmatprep.subr.bf16.mxu0 0
    %2823 = vmatpush1.bf16.msra.mxu0 0
    %2824 = vmatprep.subr.bf16.mxu0 0
    %2825 = vmatpush1.bf16.msra.mxu0 0
    %2826 = vmatprep.subr.bf16.mxu0 0
    %2827 = vmatpush1.bf16.msra.mxu0 0
    %2828 = vmatprep.subr.bf16.mxu0 0
    %2829 = vmatpush1.bf16.msra.mxu0 0
    %2830 = vmatprep.subr.bf16.mxu0 0
    %2831 = vmatpush1.bf16.msra.mxu0 0
    %2832 = vmatprep.subr.bf16.mxu0 0
    %2833 = vmatpush1.bf16.msra.mxu0 0
    %2834 = vmatprep.mubr.bf16.mxu0 0
    %2835 = vmatmul.mubr.bf16.gmra.mrb[0].mxu0 %v2160
    %v2836 = vpop.f32.mrb[0].mxu0
    %v2837 = vadd.f32 %v2772, %v2836
    %v2838 = vpop.f32.mrb[0].mxu0
    %v2839 = vpop.f32.mrb[0].mxu0
    %v2840 = vadd.f32 %v2775, %v2839
    %v2841 = vpop.f32.mrb[0].mxu0
    %2842 = vmatprep.mubr.bf16.mxu0 0
    %2843 = vmatmul.mubr.bf16.gmra.mrb[0].mxu0 %v2163
    %v2844 = vpop.f32.mrb[0].mxu0
    %v2845 = vadd.f32 %v2780, %v2844
    %v2846 = vpop.f32.mrb[0].mxu0
    %v2847 = vpop.f32.mrb[0].mxu0
    %v2848 = vadd.f32 %v2783, %v2847
    %v2849 = vpop.f32.mrb[0].mxu0
    %2850 = vmatprep.mubr.bf16.mxu0 0
    %2851 = vmatmul.mubr.bf16.gmra.mrb[0].mxu0 %v2166
    %v2852 = vpop.f32.mrb[0].mxu0
    %v2853 = vadd.f32 %v2788, %v2852
    %v2854 = vpop.f32.mrb[0].mxu0
    %v2855 = vpop.f32.mrb[0].mxu0
    %v2856 = vadd.f32 %v2791, %v2855
    %v2857 = vpop.f32.mrb[0].mxu0
    %2858 = vmatprep.mubr.bf16.mxu0 0
    %2859 = vmatmul.mubr.bf16.gmra.mrb[0].mxu0 %v2169
    %v2860 = vpop.f32.mrb[0].mxu0
    %v2861 = vadd.f32 %v2796, %v2860
    %v2862 = vpop.f32.mrb[0].mxu0
    %v2863 = vpop.f32.mrb[0].mxu0
    %v2864 = vadd.f32 %v2799, %v2863
    %v2865 = vpop.f32.mrb[0].mxu0
    %2866 = vdwg.mxu0
    %v2867 = vadd.f32 %v2837, %v2240
    %v2868 = vadd.f32 %v2840, %v2240
    %v2869 = vadd.f32 %v2845, %v2240
    %v2870 = vadd.f32 %v2848, %v2240
    %v2871 = vadd.f32 %v2853, %v2240
    %v2872 = vadd.f32 %v2856, %v2240
    %v2873 = vadd.f32 %v2861, %v2240
    %v2874 = vadd.f32 %v2864, %v2240
    %v2875 = vmax.f32 %v2867, 0.0
    %v2876 = vmax.f32 %v2868, 0.0
    %v2877 = vmax.f32 %v2869, 0.0
    %v2878 = vmax.f32 %v2870, 0.0
    %v2879 = vmax.f32 %v2871, 0.0
    %v2880 = vmax.f32 %v2872, 0.0
    %v2881 = vmax.f32 %v2873, 0.0
    %v2882 = vmax.f32 %v2874, 0.0
    %v2883 = vpack.c.bf16 %v2876, %v2875
    %v2884 = vpack.c.bf16 %v2878, %v2877
    %v2885 = vpack.c.bf16 %v2880, %v2879
    %v2886 = vpack.c.bf16 %v2882, %v2881
    %v2888 = vsel %vm364, %v2883, 0
    %v2891 = vsel %vm364, %v2884, 0
    %v2894 = vsel %vm364, %v2885, 0
    %v2897 = vsel %vm364, %v2886, 0
    %2899 = vmatprep.subr.bf16.mxu0 0
    %2900 = vmatpush1.bf16.msra.mxu0 %v2347
    %2901 = vmatprep.subr.bf16.mxu0 0
    %2902 = vmatpush1.bf16.msra.mxu0 %v2348
    %2903 = vmatprep.subr.bf16.mxu0 0
    %2904 = vmatpush1.bf16.msra.mxu0 0
    %2905 = vmatprep.subr.bf16.mxu0 0
    %2906 = vmatpush1.bf16.msra.mxu0 0
    %2907 = vmatprep.subr.bf16.mxu0 0
    %2908 = vmatpush1.bf16.msra.mxu0 0
    %2909 = vmatprep.subr.bf16.mxu0 0
    %2910 = vmatpush1.bf16.msra.mxu0 0
    %2911 = vmatprep.subr.bf16.mxu0 0
    %2912 = vmatpush1.bf16.msra.mxu0 0
    %2913 = vmatprep.subr.bf16.mxu0 0
    %2914 = vmatpush1.bf16.msra.mxu0 0
    %2915 = vmatprep.subr.bf16.mxu0 0
    %2916 = vmatpush1.bf16.msra.mxu0 0
    %2917 = vmatprep.subr.bf16.mxu0 0
    %2918 = vmatpush1.bf16.msra.mxu0 0
    %2919 = vmatprep.subr.bf16.mxu0 0
    %2920 = vmatpush1.bf16.msra.mxu0 0
    %2921 = vmatprep.subr.bf16.mxu0 0
    %2922 = vmatpush1.bf16.msra.mxu0 0
    %2923 = vmatprep.subr.bf16.mxu0 0
    %2924 = vmatpush1.bf16.msra.mxu0 0
    %2925 = vmatprep.subr.bf16.mxu0 0
    %2926 = vmatpush1.bf16.msra.mxu0 0
    %2927 = vmatprep.subr.bf16.mxu0 0
    %2928 = vmatpush1.bf16.msra.mxu0 0
    %2929 = vmatprep.subr.bf16.mxu0 0
    %2930 = vmatpush1.bf16.msra.mxu0 0
    %2931 = vmatprep.mubr.bf16.mxu0 0
    %2932 = vmatmul.mubr.bf16.gmra.mrb[0].mxu0 %v2888
    %v2933 = vpop.f32.mrb[0].mxu0
    %v2934 = vadd.f32 %v2309, %v2933
    %v2935 = vpop.f32.mrb[0].mxu0
    %v2936 = vpop.f32.mrb[0].mxu0
    %v2937 = vadd.f32 %v2312, %v2936
    %v2938 = vpop.f32.mrb[0].mxu0
    %2939 = vmatprep.mubr.bf16.mxu0 0
    %2940 = vmatmul.mubr.bf16.gmra.mrb[0].mxu0 %v2891
    %v2941 = vpop.f32.mrb[0].mxu0
    %v2942 = vadd.f32 %v2317, %v2941
    %v2943 = vpop.f32.mrb[0].mxu0
    %v2944 = vpop.f32.mrb[0].mxu0
    %v2945 = vadd.f32 %v2320, %v2944
    %v2946 = vpop.f32.mrb[0].mxu0
    %2947 = vmatprep.mubr.bf16.mxu0 0
    %2948 = vmatmul.mubr.bf16.gmra.mrb[0].mxu0 %v2894
    %v2949 = vpop.f32.mrb[0].mxu0
    %v2950 = vadd.f32 %v2325, %v2949
    %v2951 = vpop.f32.mrb[0].mxu0
    %v2952 = vpop.f32.mrb[0].mxu0
    %v2953 = vadd.f32 %v2328, %v2952
    %v2954 = vpop.f32.mrb[0].mxu0
    %2955 = vmatprep.mubr.bf16.mxu0 0
    %2956 = vmatmul.mubr.bf16.gmra.mrb[0].mxu0 %v2897
    %v2957 = vpop.f32.mrb[0].mxu0
    %v2958 = vadd.f32 %v2333, %v2957
    %v2959 = vpop.f32.mrb[0].mxu0
    %v2960 = vpop.f32.mrb[0].mxu0
    %v2961 = vadd.f32 %v2336, %v2960
    %v2962 = vpop.f32.mrb[0].mxu0
    %2963 = vdwg.mxu0
    %2964 = vmatprep.subr.bf16.mxu0 0
    %2965 = vmatpush1.bf16.msra.mxu0 %v2436
    %2966 = vmatprep.subr.bf16.mxu0 0
    %2967 = vmatpush1.bf16.msra.mxu0 %v2437
    %2968 = vmatprep.subr.bf16.mxu0 0
    %2969 = vmatpush1.bf16.msra.mxu0 0
    %2970 = vmatprep.subr.bf16.mxu0 0
    %2971 = vmatpush1.bf16.msra.mxu0 0
    %2972 = vmatprep.subr.bf16.mxu0 0
    %2973 = vmatpush1.bf16.msra.mxu0 0
    %2974 = vmatprep.subr.bf16.mxu0 0
    %2975 = vmatpush1.bf16.msra.mxu0 0
    %2976 = vmatprep.subr.bf16.mxu0 0
    %2977 = vmatpush1.bf16.msra.mxu0 0
    %2978 = vmatprep.subr.bf16.mxu0 0
    %2979 = vmatpush1.bf16.msra.mxu0 0
    %2980 = vmatprep.subr.bf16.mxu0 0
    %2981 = vmatpush1.bf16.msra.mxu0 0
    %2982 = vmatprep.subr.bf16.mxu0 0
    %2983 = vmatpush1.bf16.msra.mxu0 0
    %2984 = vmatprep.subr.bf16.mxu0 0
    %2985 = vmatpush1.bf16.msra.mxu0 0
    %2986 = vmatprep.subr.bf16.mxu0 0
    %2987 = vmatpush1.bf16.msra.mxu0 0
    %2988 = vmatprep.subr.bf16.mxu0 0
    %2989 = vmatpush1.bf16.msra.mxu0 0
    %2990 = vmatprep.subr.bf16.mxu0 0
    %2991 = vmatpush1.bf16.msra.mxu0 0
    %2992 = vmatprep.subr.bf16.mxu0 0
    %2993 = vmatpush1.bf16.msra.mxu0 0
    %2994 = vmatprep.subr.bf16.mxu0 0
    %2995 = vmatpush1.bf16.msra.mxu0 0
    %2996 = vmatprep.mubr.bf16.mxu0 0
    %2997 = vmatmul.mubr.bf16.gmra.mrb[0].mxu0 %v2726
    %v2998 = vpop.f32.mrb[0].mxu0
    %v2999 = vadd.f32 0.0, %v2998
    %v3000 = vpop.f32.mrb[0].mxu0
    %v3001 = vpop.f32.mrb[0].mxu0
    %v3002 = vadd.f32 0.0, %v3001
    %v3003 = vpop.f32.mrb[0].mxu0
    %3004 = vmatprep.mubr.bf16.mxu0 0
    %3005 = vmatmul.mubr.bf16.gmra.mrb[0].mxu0 %v2729
    %v3006 = vpop.f32.mrb[0].mxu0
    %v3007 = vadd.f32 0.0, %v3006
    %v3008 = vpop.f32.mrb[0].mxu0
    %v3009 = vpop.f32.mrb[0].mxu0
    %v3010 = vadd.f32 0.0, %v3009
    %v3011 = vpop.f32.mrb[0].mxu0
    %3012 = vmatprep.mubr.bf16.mxu0 0
    %3013 = vmatmul.mubr.bf16.gmra.mrb[0].mxu0 %v2732
    %v3014 = vpop.f32.mrb[0].mxu0
    %v3015 = vadd.f32 0.0, %v3014
    %v3016 = vpop.f32.mrb[0].mxu0
    %v3017 = vpop.f32.mrb[0].mxu0
    %v3018 = vadd.f32 0.0, %v3017
    %v3019 = vpop.f32.mrb[0].mxu0
    %3020 = vmatprep.mubr.bf16.mxu0 0
    %3021 = vmatmul.mubr.bf16.gmra.mrb[0].mxu0 %v2735
    %v3022 = vpop.f32.mrb[0].mxu0
    %v3023 = vadd.f32 0.0, %v3022
    %v3024 = vpop.f32.mrb[0].mxu0
    %v3025 = vpop.f32.mrb[0].mxu0
    %v3026 = vadd.f32 0.0, %v3025
    %v3027 = vpop.f32.mrb[0].mxu0
    %3028 = vdwg.mxu0
    %v3029 = vadd.f32 %v2934, %v2999
    %v3030 = vadd.f32 %v2937, %v3002
    %v3031 = vadd.f32 %v2942, %v3007
    %v3032 = vadd.f32 %v2945, %v3010
    %v3033 = vadd.f32 %v2950, %v3015
    %v3034 = vadd.f32 %v2953, %v3018
    %v3035 = vadd.f32 %v2958, %v3023
    %v3036 = vadd.f32 %v2961, %v3026
    %v3037 = vadd.f32 %v3029, %v2517
    %v3038 = vadd.f32 %v3030, %v2517
    %v3039 = vadd.f32 %v3031, %v2517
    %v3040 = vadd.f32 %v3032, %v2517
    %v3041 = vadd.f32 %v3033, %v2517
    %v3042 = vadd.f32 %v3034, %v2517
    %v3043 = vadd.f32 %v3035, %v2517
    %v3044 = vadd.f32 %v3036, %v2517
    %v3045 = vmax.f32 %v3037, 0.0
    %v3046 = vmax.f32 %v3038, 0.0
    %v3047 = vmax.f32 %v3039, 0.0
    %v3048 = vmax.f32 %v3040, 0.0
    %v3049 = vmax.f32 %v3041, 0.0
    %v3050 = vmax.f32 %v3042, 0.0
    %v3051 = vmax.f32 %v3043, 0.0
    %v3052 = vmax.f32 %v3044, 0.0
    %3061 = vrot.lane.b32.xlu0 %v2527, 32
    %v3062 = vpop.permute.xlu0 %3061
    %3063 = vrot.lane.b32.xlu0 %v2528, 32
    %v3064 = vpop.permute.xlu0 %3063
    %3065 = vrot.lane.b32.xlu0 %v2529, 32
    %v3066 = vpop.permute.xlu0 %3065
    %3067 = vrot.lane.b32.xlu0 %v2530, 32
    %v3068 = vpop.permute.xlu0 %3067
    %3069 = vrot.lane.b32.xlu0 %v2531, 32
    %v3070 = vpop.permute.xlu0 %3069
    %3071 = vrot.lane.b32.xlu0 %v2532, 32
    %v3072 = vpop.permute.xlu0 %3071
    %3073 = vrot.lane.b32.xlu0 %v2533, 32
    %v3074 = vpop.permute.xlu0 %3073
    %3075 = vrot.lane.b32.xlu0 %v2534, 32
    %v3076 = vpop.permute.xlu0 %3075
    %3093 = vrot.lane.b32.xlu0 %v3045, 64
    %v3094 = vpop.permute.xlu0 %3093
    %3095 = vrot.lane.b32.xlu0 %v3046, 64
    %v3096 = vpop.permute.xlu0 %3095
    %3097 = vrot.lane.b32.xlu0 %v3047, 64
    %v3098 = vpop.permute.xlu0 %3097
    %3099 = vrot.lane.b32.xlu0 %v3048, 64
    %v3100 = vpop.permute.xlu0 %3099
    %3101 = vrot.lane.b32.xlu0 %v3049, 64
    %v3102 = vpop.permute.xlu0 %3101
    %3103 = vrot.lane.b32.xlu0 %v3050, 64
    %v3104 = vpop.permute.xlu0 %3103
    %3105 = vrot.lane.b32.xlu0 %v3051, 64
    %v3106 = vpop.permute.xlu0 %3105
    %3107 = vrot.lane.b32.xlu0 %v3052, 64
    %v3108 = vpop.permute.xlu0 %3107
    %3117 = vrot.lane.b32.xlu0 %v3045, 96
    %v3118 = vpop.permute.xlu0 %3117
    %3119 = vrot.lane.b32.xlu0 %v3046, 96
    %v3120 = vpop.permute.xlu0 %3119
    %3121 = vrot.lane.b32.xlu0 %v3047, 96
    %v3122 = vpop.permute.xlu0 %3121
    %3123 = vrot.lane.b32.xlu0 %v3048, 96
    %v3124 = vpop.permute.xlu0 %3123
    %3125 = vrot.lane.b32.xlu0 %v3049, 96
    %v3126 = vpop.permute.xlu0 %3125
    %3127 = vrot.lane.b32.xlu0 %v3050, 96
    %v3128 = vpop.permute.xlu0 %3127
    %3129 = vrot.lane.b32.xlu0 %v3051, 96
    %v3130 = vpop.permute.xlu0 %3129
    %3131 = vrot.lane.b32.xlu0 %v3052, 96
    %v3132 = vpop.permute.xlu0 %3131
    %v3141 = vsel %vm364, %v2527, %v3062
    %v3142 = vsel %vm364, %v2528, %v3064
    %v3143 = vsel %vm364, %v2529, %v3066
    %v3144 = vsel %vm364, %v2530, %v3068
    %v3145 = vsel %vm364, %v2531, %v3070
    %v3146 = vsel %vm364, %v2532, %v3072
    %v3147 = vsel %vm364, %v2533, %v3074
    %v3148 = vsel %vm364, %v2534, %v3076
    %v3149 = vsel %vm775, %v3141, %v3094
    %v3150 = vsel %vm775, %v3142, %v3096
    %v3151 = vsel %vm775, %v3143, %v3098
    %v3152 = vsel %vm775, %v3144, %v3100
    %v3153 = vsel %vm775, %v3145, %v3102
    %v3154 = vsel %vm775, %v3146, %v3104
    %v3155 = vsel %vm775, %v3147, %v3106
    %v3156 = vsel %vm775, %v3148, %v3108
    %vm3157 = vcmask 785408
    %v3158 = vsel %vm3157, %v3149, %v3118
    %v3159 = vsel %vm3157, %v3150, %v3120
    %v3160 = vsel %vm3157, %v3151, %v3122
    %v3161 = vsel %vm3157, %v3152, %v3124
    %v3162 = vsel %vm3157, %v3153, %v3126
    %v3163 = vsel %vm3157, %v3154, %v3128
    %v3164 = vsel %vm3157, %v3155, %v3130
    %v3165 = vsel %vm3157, %v3156, %v3132
    %3166 = vst [vmem:[%s71] sm:$0xff] %v3158
    %3167 = vst [vmem:[%s71 + $0x8] sm:$0xff] %v3159
    %3168 = vst [vmem:[%s71 + $0x10] sm:$0xff] %v3160
    %3169 = vst [vmem:[%s71 + $0x18] sm:$0xff] %v3161
    %3170 = vst [vmem:[%s71 + $0x20] sm:$0xff] %v3162
    %3171 = vst [vmem:[%s71 + $0x28] sm:$0xff] %v3163
    %3172 = vst [vmem:[%s71 + $0x30] sm:$0xff] %v3164
    %3173 = vst [vmem:[%s71 + $0x38] sm:$0xff] %v3165
    // Predicated region
    $region130: #{_core_impl.1} parent=1 // pred_check
      _
    $region131: #{_core_impl.1} parent=1 // pred_check_branch
      %3175 = sbr.rel (0) target = $region133
    $region132: #{_core_impl.1} parent=1 // pred_region
      _
    $region133: #{_core_impl.1} parent=1 // pred_fallthru
      _
    // Predicated region
    $region134: #{_core_impl.1} parent=1 // pred_check
      _
    $region135: #{_core_impl.1} parent=1 // pred_check_branch
      %3177 = sbr.rel (0) target = $region137
    $region136: #{_core_impl.1} parent=1 // pred_region
      %s3179 = ssub.s32 512, 512
      %3180 = vsyncadd [#allocation3], %s3179
      %s3181 = sshll.u32 [#allocation2], 4
      %s3182 = int_to_ptr.vmem [resolvable:$true] %s3181
      %3187 = dma.vmem_to_hbm [thread:$0]  %s3182, 512, %s67, [#allocation3], 64, 64, 4
    $region137: #{_core_impl.1} parent=1 // pred_fallthru
      _
    // Predicated region
    $region138: #{_core_impl.1} parent=1 // pred_check
      _
    $region139: #{_core_impl.1} parent=1 // pred_check_branch
      %3189 = sbr.rel (0) target = $region141
    $region140: #{_core_impl.1} parent=1 // pred_region
      _
    $region141: #{_core_impl.1} parent=1 // pred_fallthru
      _
    // Predicated region
    $region142: #{_core_impl.1} parent=1 // pred_check
      _
    $region143: #{_core_impl.1} parent=1 // pred_check_branch
      %3191 = sbr.rel (0) target = $region145
    $region144: #{_core_impl.1} parent=1 // pred_region
      _
    $region145: #{_core_impl.1} parent=1 // pred_fallthru
      _
    // Predicated region
    $region146: #{_core_impl.1} parent=1 // pred_check
      _
    $region147: #{_core_impl.1} parent=1 // pred_check_branch
      %3193 = sbr.rel (0) target = $region149
    $region148: #{_core_impl.1} parent=1 // pred_region
      _
    $region149: #{_core_impl.1} parent=1 // pred_fallthru
      _
    // Predicated region
    $region150: #{_core_impl.1} parent=1 // pred_check
      _
    $region151: #{_core_impl.1} parent=1 // pred_check_branch
      %3195 = sbr.rel (0) target = $region153
    $region152: #{_core_impl.1} parent=1 // pred_region
      %3196 = dma.done [#allocation3], 512
    $region153: #{_core_impl.1} parent=1 // pred_fallthru
      _
    // Predicated region
    $region154: #{_core_impl.1} parent=1 // pred_check
      _
    $region155: #{_core_impl.1} parent=1 // pred_check_branch
      %3198 = sbr.rel (0) target = $region157
    $region156: #{_core_impl.1} parent=1 // pred_region
      _
    $region157: #{_core_impl.1} parent=1 // pred_fallthru
      _
    // Predicated region
    $region158: #{_core_impl.1} parent=1 // pred_check
      _
    $region159: #{_core_impl.1} parent=1 // pred_check_branch
      %3200 = sbr.rel (0) target = $region161
    $region160: #{_core_impl.1} parent=1 // pred_region
      _
    $region161: #{_core_impl.1} parent=1 // pred_fallthru
      _
    %3201 = vsyncpa [#allocation3], 1

</llo_original>
